<compile_context>
chip_gen: v5e
topology: v5e:2x2
jax: 0.10.0
libtpu: 0.0.40
codegen_flags: <defaults>
</compile_context>

<pallas_src>
import jax
import jax.numpy as jnp
from jax import lax
from jax.experimental import pallas as pl
from jax.experimental.pallas import tpu as pltpu

F32 = jnp.float32
BF16 = jnp.bfloat16
VMEM_LIMIT = 48 * 1024 * 1024  # < 64 MiB physical per-core VMEM on v7x


# ----------------------------- encoder kernel -----------------------------

def encoder_kernel(src_emb_ref, len_ref, wih_ref, whh_ref, bgi_ref, bhn_ref,
                   enc_out_ref, h_final_ref, gi_ref):
    # src_emb_ref: (S*B, H) bf16 (time-major flattened), enc_out_ref: (S, B, H) bf16
    S, B, H = enc_out_ref.shape
    whh = whh_ref[...]                               # (H, 3H) bf16
    lens = len_ref[...]                              # (B, 1)  int32
    bhn = jnp.broadcast_to(bhn_ref[...], (B, H))     # hoisted n-gate hidden bias (f32)

    # Hoisted input projection: one big MXU matmul for every timestep at once.
    # (r/z thirds of b_hh are already folded into bgi by the wrapper.)
    gi_ref[...] = (jnp.dot(src_emb_ref[...], wih_ref[...],
                           preferred_element_type=jnp.float32)
                   + bgi_ref[...])                   # (S*B, 3H) f32

    def body(t, h):
        start = pl.multiple_of(t * B, B)             # sublane-aligned (B = multiple of 8)
        gi = gi_ref[pl.ds(start, B), :]              # (B, 3H) f32
        gh = jnp.dot(h.astype(whh.dtype), whh,
                     preferred_element_type=jnp.float32)              # (B, 3H) f32
        r = jax.nn.sigmoid(gi[:, :H] + gh[:, :H])
        z = jax.nn.sigmoid(gi[:, H:2 * H] + gh[:, H:2 * H])
        n = jnp.tanh(gi[:, 2 * H:] + r * (gh[:, 2 * H:] + bhn))
        h_new = (1.0 - z) * n + z * h
        valid = t < lens                                              # (B, 1) bool
        h = jnp.where(valid, h_new, h)           # pack: hidden frozen past length
        enc_out_ref[t] = jnp.where(valid, h_new, 0.0).astype(enc_out_ref.dtype)
        return h

    h_final_ref[...] = lax.fori_loop(0, S, body,
                                     jnp.zeros((B, H), jnp.float32),
                                     unroll=True)


# ----------------------------- decoder kernel -----------------------------

def decoder_kernel(tgt_emb_ref, h0_ref, enc_ref, len_row_ref,
                   wih_ref, whh_ref, bgi_ref, bhn_ref,
                   wc_ctx_ref, wc_hid_ref, bc_ref,
                   dec_out_ref, h_final_ref, gi_ref):
    # tgt_emb_ref: (T*B, H) bf16, enc_ref: (S, B, H) bf16, dec_out_ref: (T*B, H) bf16
    S, B, H = enc_ref.shape
    T = tgt_emb_ref.shape[0] // B

    whh = whh_ref[...]                               # (H, 3H) bf16
    wc_ctx = wc_ctx_ref[...]                         # (H, H)  bf16
    wc_hid = wc_hid_ref[...]                         # (H, H)  bf16
    bhn = jnp.broadcast_to(bhn_ref[...], (B, H))     # hoisted biases (f32)
    bc = jnp.broadcast_to(bc_ref[...], (B, H))

    # Hoisted (one-time) cast of encoder outputs; NO relayout needed: attention is
    # computed directly in the (S, B, H) layout.
    enc_f = enc_ref[...].astype(jnp.float32)         # (S, B, H) f32

    pos = lax.broadcasted_iota(jnp.int32, (S, B), 0)
    src_mask = pos < len_row_ref[...]                # (S, B) bool
    neg_big = jnp.full((S, B), -1e9, jnp.float32)

    # Hoisted input projection for all decode steps (single MXU matmul).
    gi_ref[...] = (jnp.dot(tgt_emb_ref[...], wih_ref[...],
                           preferred_element_type=jnp.float32)
                   + bgi_ref[...])                   # (T*B, 3H) f32

    def body(t, h):
        start = pl.multiple_of(t * B, B)
        gi = gi_ref[pl.ds(start, B), :]              # (B, 3H) f32
        gh = jnp.dot(h.astype(whh.dtype), whh,
                     preferred_element_type=jnp.float32)
        r = jax.nn.sigmoid(gi[:, :H] + gh[:, :H])
        z = jax.nn.sigmoid(gi[:, H:2 * H] + gh[:, H:2 * H])
        n = jnp.tanh(gi[:, 2 * H:] + r * (gh[:, 2 * H:] + bhn))
        h = (1.0 - z) * n + z * h                    # (B, H) f32

        # masked Luong dot-product attention, directly on the (S, B, H) layout:
        # VPU broadcast-multiply + reduce; softmax denominator via EUP reciprocal.
        scores = jnp.sum(h[None, :, :] * enc_f, axis=-1)              # (S, B) f32
        scores = jnp.where(src_mask, scores, neg_big)
        m = jnp.max(scores, axis=0, keepdims=True)                    # (1, B)
        p = jnp.exp(scores - m)
        p = p * pl.reciprocal(jnp.sum(p, axis=0, keepdims=True), approx=True)
        ctx = jnp.sum(p[:, :, None] * enc_f, axis=0)                  # (B, H) f32

        # output_t = tanh(W_c [ctx ; h]) as two matmuls (no concat)
        h_b = h.astype(jnp.bfloat16)
        out_t = jnp.tanh(
            jnp.dot(ctx.astype(jnp.bfloat16), wc_ctx,
                    preferred_element_type=jnp.float32)
            + jnp.dot(h_b, wc_hid, preferred_element_type=jnp.float32)
            + bc)
        dec_out_ref[pl.ds(start, B), :] = out_t.astype(dec_out_ref.dtype)
        return h

    h_final_ref[...] = lax.fori_loop(0, T, body, h0_ref[...], unroll=True)


# ----------------------------- generator kernel -----------------------------

def generator_kernel(dec_out_ref, w_ref, b_ref, logits_ref):
    # dec_out: (M, H) bf16 [M = T*B], w: (TN, H) bf16 (tied embedding tile),
    # b: (1, TN) f32, logits: (M, TN) f32.  Contract on H -> no weight transpose.
    # (For realistic vocabs consider bf16 logits or fusing the log-softmax here.)
    logits_ref[...] = lax.dot_general(
        dec_out_ref[...], w_ref[...],
        dimension_numbers=(((1,), (1,)), ((), ())),
        preferred_element_type=jnp.float32) + b_ref[...]


# ----------------------------- wrapper / glue -----------------------------

def seq2seq_forward(params, src, src_lengths, tgt):
    """src: (S_src, B) int32, src_lengths: (B,) int32, tgt: (S_tgt, B) int32."""
    H = params["enc_embedding"].shape[1]
    V = params["dec_embedding"].shape[0]
    S_src, B = src.shape
    S_tgt = tgt.shape[0]

    # bf16 copies of the large MXU operands; biases / hidden state stay f32
    enc_emb = params["enc_embedding"].astype(BF16)
    dec_emb = params["dec_embedding"].astype(BF16)       # also the tied generator weight
    enc_wih = params["enc_wih"].astype(BF16)
    enc_whh = params["enc_whh"].astype(BF16)
    dec_wih = params["dec_wih"].astype(BF16)
    dec_whh = params["dec_whh"].astype(BF16)
    wc_ctx = params["attn_wc"][:H, :].astype(BF16)
    wc_hid = params["attn_wc"][H:, :].astype(BF16)

    # fold the r/z thirds of b_hh into the hoisted input-projection bias; only the
    # n-gate hidden bias has to stay inside the recurrence (because of r * (...)).
    zero_h = jnp.zeros((1, H), F32)
    enc_bgi = params["enc_bih"] + jnp.concatenate(
        [params["enc_bhh"][:, :2 * H], zero_h], axis=1)
    enc_bhn = params["enc_bhh"][:, 2 * H:]
    dec_bgi = params["dec_bih"] + jnp.concatenate(
        [params["dec_bhh"][:, :2 * H], zero_h], axis=1)
    dec_bhn = params["dec_bhh"][:, 2 * H:]

    # embedding lookups (glue), flattened time-major: row = t*B + b
    src_emb = jnp.take(enc_emb, src.reshape(-1), axis=0)  # (S_src*B, H) bf16
    tgt_emb = jnp.take(dec_emb, tgt.reshape(-1), axis=0)  # (S_tgt*B, H) bf16
    lens_col = src_lengths.astype(jnp.int32).reshape(B, 1)   # encoder (per-row compare)
    lens_row = src_lengths.astype(jnp.int32).reshape(1, B)   # decoder (per-lane mask)

    vmem = pl.BlockSpec(memory_space=pltpu.MemorySpace.VMEM)
    cparams = pltpu.CompilerParams(vmem_limit_bytes=VMEM_LIMIT)

    # ---- encoder ----
    enc_out, h_enc = pl.pallas_call(
        encoder_kernel,
        out_shape=(jax.ShapeDtypeStruct((S_src, B, H), BF16),
                   jax.ShapeDtypeStruct((B, H), F32)),
        in_specs=[vmem] * 6,
        out_specs=(vmem, vmem),
        scratch_shapes=[pltpu.VMEM((S_src * B, 3 * H), F32)],
        compiler_params=cparams,
    )(src_emb, lens_col, enc_wih, enc_whh, enc_bgi, enc_bhn)

    # ---- decoder (dec_hidden is None -> init from final encoder state) ----
    dec_out, h_dec = pl.pallas_call(
        decoder_kernel,
        out_shape=(jax.ShapeDtypeStruct((S_tgt * B, H), BF16),
                   jax.ShapeDtypeStruct((B, H), F32)),
        in_specs=[vmem] * 11,
        out_specs=(vmem, vmem),
        scratch_shapes=[pltpu.VMEM((S_tgt * B, 3 * H), F32)],
        compiler_params=cparams,
    )(tgt_emb, h_enc, enc_out, lens_row,
      dec_wih, dec_whh, dec_bgi, dec_bhn,
      wc_ctx, wc_hid, params["attn_bc"])

    # ---- generator (weight tied to decoder embedding) ----
    M = S_tgt * B
    TN = V                        # small vocab: one full-extent lane-dense tile
    if V > 2048:
        for cand in (2048, 1024, 512, 256, 128):
            if V % cand == 0:
                TN = cand
                break
        # TODO(synk): pad odd vocab sizes to a multiple of 512-2048 instead of
        #             falling back to one giant tile.
    grid = (V // TN,)

    logits_flat = pl.pallas_call(
        generator_kernel,
        out_shape=jax.ShapeDtypeStruct((M, V), F32),
        grid=grid,
        in_specs=[
            pl.BlockSpec((M, H), lambda j: (0, 0)),     # dec_out: resident
            pl.BlockSpec((TN, H), lambda j: (j, 0)),    # tied weight tile (streams)
            pl.BlockSpec((1, TN), lambda j: (0, j)),    # bias tile
        ],
        out_specs=pl.BlockSpec((M, TN), lambda j: (0, j)),
        compiler_params=pltpu.CompilerParams(
            dimension_semantics=("parallel",),
            vmem_limit_bytes=VMEM_LIMIT),
    )(dec_out, dec_emb, params["gen_b"])

    logits = logits_flat.reshape(S_tgt, B, V)
    # dec_hidden returned as (num_layers=1, B, H) to mirror PyTorch GRU state shape
    return logits, h_dec.reshape(1, B, H)


# ----------------------------- parameter init -----------------------------

def init_params(key, src_vocab, tgt_vocab, H):
    ks = jax.random.split(key, 12)
    s = 0.1
    n = lambda k, shape: (s * jax.random.normal(k, shape)).astype(F32)
    return {
        "enc_embedding": n(ks[0], (src_vocab, H)),
        "dec_embedding": n(ks[1], (tgt_vocab, H)),   # also the (tied) generator weight
        "enc_wih": n(ks[2], (H, 3 * H)),
        "enc_whh": n(ks[3], (H, 3 * H)),
        "enc_bih": n(ks[4], (1, 3 * H)),
        "enc_bhh": n(ks[5], (1, 3 * H)),
        "dec_wih": n(ks[6], (H, 3 * H)),
        "dec_whh": n(ks[7], (H, 3 * H)),
        "dec_bih": n(ks[8], (1, 3 * H)),
        "dec_bhh": n(ks[9], (1, 3 * H)),
        "attn_wc": n(ks[10], (2 * H, H)),
        "attn_bc": jnp.zeros((1, H), F32),
        "gen_b": n(ks[11], (1, tgt_vocab)),
    }


if __name__ == "__main__":
    # shapes chosen sublane/lane friendly: B multiple of 8, H and vocab multiples of 128
    B, S_SRC, S_TGT, H = 8, 8, 6, 128
    SRC_VOCAB, TGT_VOCAB = 384, 256

    key = jax.random.PRNGKey(0)
    k_src, k_tgt, k_params = jax.random.split(key, 3)

    src = jax.random.randint(k_src, (S_SRC, B), 0, SRC_VOCAB, dtype=jnp.int32)
    src_lengths = jnp.array([8, 5, 8, 3, 6, 8, 2, 7], dtype=jnp.int32)
    tgt = jax.random.randint(k_tgt, (S_TGT, B), 0, TGT_VOCAB, dtype=jnp.int32)

    params = init_params(k_params, SRC_VOCAB, TGT_VOCAB, H)

    fwd = jax.jit(seq2seq_forward)
    logits, dec_hidden = fwd(params, src, src_lengths, tgt)
    jax.block_until_ready((logits, dec_hidden))

    assert logits.shape == (S_TGT, B, TGT_VOCAB)
    assert dec_hidden.shape == (1, B, H)
    assert bool(jnp.all(jnp.isfinite(logits)))
    print("KERNEL_OK")
</pallas_src>

<mosaic_0001>
module attributes {stable_mosaic.version = 11 : i64} {
  func.func @encoder_kernel(%arg0: memref<64x128xbf16, #tpu.memory_space<vmem>>, %arg1: memref<8x1xi32, #tpu.memory_space<vmem>>, %arg2: memref<128x384xbf16, #tpu.memory_space<vmem>>, %arg3: memref<128x384xbf16, #tpu.memory_space<vmem>>, %arg4: memref<1x384xf32, #tpu.memory_space<vmem>>, %arg5: memref<1x128xf32, #tpu.memory_space<vmem>>, %arg6: memref<8x8x128xbf16, #tpu.memory_space<vmem>>, %arg7: memref<8x128xf32, #tpu.memory_space<vmem>>, %arg8: memref<64x384xf32, #tpu.memory_space<vmem>>) attributes {dimension_semantics = [], scalar_prefetch = 0 : i64, scratch_operands = 1 : i64, tpu.core_type = #tpu.core_type<tc>} {
    %c0 = arith.constant 0 : index
    %c0_0 = arith.constant 0 : index
    %0 = vector.load %arg3[%c0, %c0_0] : memref<128x384xbf16, #tpu.memory_space<vmem>>, vector<128x384xbf16>
    %c0_1 = arith.constant 0 : index
    %c0_2 = arith.constant 0 : index
    %1 = vector.load %arg1[%c0_1, %c0_2] : memref<8x1xi32, #tpu.memory_space<vmem>>, vector<8x1xi32>
    %c0_3 = arith.constant 0 : index
    %c0_4 = arith.constant 0 : index
    %2 = vector.load %arg5[%c0_3, %c0_4] : memref<1x128xf32, #tpu.memory_space<vmem>>, vector<1x128xf32>
    %3 = vector.shape_cast %2 : vector<1x128xf32> to vector<1x128xf32>
    %4 = vector.broadcast %3 : vector<1x128xf32> to vector<8x128xf32>
    %c0_5 = arith.constant 0 : index
    %c0_6 = arith.constant 0 : index
    %5 = vector.load %arg0[%c0_5, %c0_6] : memref<64x128xbf16, #tpu.memory_space<vmem>>, vector<64x128xbf16>
    %c0_7 = arith.constant 0 : index
    %c0_8 = arith.constant 0 : index
    %6 = vector.load %arg2[%c0_7, %c0_8] : memref<128x384xbf16, #tpu.memory_space<vmem>>, vector<128x384xbf16>
    %cst = arith.constant dense<0.000000e+00> : vector<64x384xf32>
    %7 = tpu.matmul %5, %6, %cst {dimension_numbers = #tpu.dot_dimension_numbers<[1], [0], [0], [1], [0, 0, 1, 1], [], []>} : vector<64x128xbf16>, vector<128x384xbf16>, vector<64x384xf32> -> vector<64x384xf32>
    %c0_9 = arith.constant 0 : index
    %c0_10 = arith.constant 0 : index
    %8 = vector.load %arg4[%c0_9, %c0_10] : memref<1x384xf32, #tpu.memory_space<vmem>>, vector<1x384xf32>
    %9 = vector.broadcast %8 : vector<1x384xf32> to vector<64x384xf32>
    %10 = arith.addf %7, %9 : vector<64x384xf32>
    %c0_11 = arith.constant 0 : index
    %c0_12 = arith.constant 0 : index
    %11 = vector.load %arg8[%c0_11, %c0_12] : memref<64x384xf32, #tpu.memory_space<vmem>>, vector<64x384xf32>
    tpu.vector_store %arg8[%c0_11, %c0_12], %10 {strides = array<i32>} : memref<64x384xf32, #tpu.memory_space<vmem>>, vector<64x384xf32>,
    %cst_13 = arith.constant 0.000000e+00 : f32
    %12 = vector.broadcast %cst_13 : f32 to vector<8x128xf32>
    %c0_i32 = arith.constant 0 : i32
    %c8_i32 = arith.constant 8 : i32
    %13 = arith.muli %c0_i32, %c8_i32 : i32
    %14 = tpu.assume_multiple %13, 8 : i32
    %15 = arith.index_cast %14 : i32 to index
    %c0_14 = arith.constant 0 : index
    %16 = vector.load %arg8[%15, %c0_14] : memref<64x384xf32, #tpu.memory_space<vmem>>, vector<8x384xf32>
    %17 = arith.truncf %12 : vector<8x128xf32> to vector<8x128xbf16>
    %cst_15 = arith.constant dense<0.000000e+00> : vector<8x384xf32>
    %18 = tpu.matmul %17, %0, %cst_15 {dimension_numbers = #tpu.dot_dimension_numbers<[1], [0], [0], [1], [0, 0, 1, 1], [], []>} : vector<8x128xbf16>, vector<128x384xbf16>, vector<8x384xf32> -> vector<8x384xf32>
    %19 = vector.extract_strided_slice %16 {offsets = [0, 0], sizes = [8, 128], strides = [1, 1]} : vector<8x384xf32> to vector<8x128xf32>
    %20 = vector.extract_strided_slice %18 {offsets = [0, 0], sizes = [8, 128], strides = [1, 1]} : vector<8x384xf32> to vector<8x128xf32>
    %21 = arith.addf %19, %20 : vector<8x128xf32>
    %22 = arith.negf %21 : vector<8x128xf32>
    %23 = math.exp %22 : vector<8x128xf32>
    %cst_16 = arith.constant 1.000000e+00 : f32
    %24 = vector.broadcast %cst_16 : f32 to vector<8x128xf32>
    %25 = arith.addf %24, %23 : vector<8x128xf32>
    %26 = arith.divf %24, %25 : vector<8x128xf32>
    %27 = vector.extract_strided_slice %16 {offsets = [0, 128], sizes = [8, 128], strides = [1, 1]} : vector<8x384xf32> to vector<8x128xf32>
    %28 = vector.extract_strided_slice %18 {offsets = [0, 128], sizes = [8, 128], strides = [1, 1]} : vector<8x384xf32> to vector<8x128xf32>
    %29 = arith.addf %27, %28 : vector<8x128xf32>
    %30 = arith.negf %29 : vector<8x128xf32>
    %31 = math.exp %30 : vector<8x128xf32>
    %cst_17 = arith.constant 1.000000e+00 : f32
    %32 = vector.broadcast %cst_17 : f32 to vector<8x128xf32>
    %33 = arith.addf %32, %31 : vector<8x128xf32>
    %34 = arith.divf %32, %33 : vector<8x128xf32>
    %35 = vector.extract_strided_slice %16 {offsets = [0, 256], sizes = [8, 128], strides = [1, 1]} : vector<8x384xf32> to vector<8x128xf32>
    %36 = vector.extract_strided_slice %18 {offsets = [0, 256], sizes = [8, 128], strides = [1, 1]} : vector<8x384xf32> to vector<8x128xf32>
    %37 = arith.addf %36, %4 : vector<8x128xf32>
    %38 = arith.mulf %26, %37 : vector<8x128xf32>
    %39 = arith.addf %35, %38 : vector<8x128xf32>
    %40 = math.tanh %39 : vector<8x128xf32>
    %cst_18 = arith.constant 1.000000e+00 : f32
    %41 = vector.broadcast %cst_18 : f32 to vector<8x128xf32>
    %42 = arith.subf %41, %34 : vector<8x128xf32>
    %43 = arith.mulf %42, %40 : vector<8x128xf32>
    %44 = arith.mulf %34, %12 : vector<8x128xf32>
    %45 = arith.addf %43, %44 : vector<8x128xf32>
    %46 = vector.broadcast %c0_i32 : i32 to vector<8x1xi32>
    %47 = arith.cmpi slt, %46, %1 : vector<8x1xi32>
    %48 = vector.shape_cast %47 : vector<8x1xi1> to vector<8x1xi1>
    %49 = vector.broadcast %48 : vector<8x1xi1> to vector<8x128xi1>
    %50 = arith.select %49, %45, %12 : vector<8x128xi1>, vector<8x128xf32>
    %cst_19 = arith.constant 0.000000e+00 : f32
    %51 = vector.shape_cast %47 : vector<8x1xi1> to vector<8x1xi1>
    %52 = vector.broadcast %51 : vector<8x1xi1> to vector<8x128xi1>
    %53 = vector.broadcast %cst_19 : f32 to vector<8x128xf32>
    %54 = arith.select %52, %45, %53 : vector<8x128xi1>, vector<8x128xf32>
    %55 = arith.truncf %54 : vector<8x128xf32> to vector<8x128xbf16>
    %56 = arith.index_cast %c0_i32 : i32 to index
    %c0_20 = arith.constant 0 : index
    %c0_21 = arith.constant 0 : index
    %57 = vector.load %arg6[%56, %c0_20, %c0_21] : memref<8x8x128xbf16, #tpu.memory_space<vmem>>, vector<1x8x128xbf16>
    %58 = vector.shape_cast %57 : vector<1x8x128xbf16> to vector<8x128xbf16>
    %59 = vector.shape_cast %55 : vector<8x128xbf16> to vector<1x8x128xbf16>
    tpu.vector_store %arg6[%56, %c0_20, %c0_21], %59 {strides = array<i32>} : memref<8x8x128xbf16, #tpu.memory_space<vmem>>, vector<1x8x128xbf16>,
    %c1_i32 = arith.constant 1 : i32
    %c8_i32_22 = arith.constant 8 : i32
    %60 = arith.muli %c1_i32, %c8_i32_22 : i32
    %61 = tpu.assume_multiple %60, 8 : i32
    %62 = arith.index_cast %61 : i32 to index
    %c0_23 = arith.constant 0 : index
    %63 = vector.load %arg8[%62, %c0_23] : memref<64x384xf32, #tpu.memory_space<vmem>>, vector<8x384xf32>
    %64 = arith.truncf %50 : vector<8x128xf32> to vector<8x128xbf16>
    %cst_24 = arith.constant dense<0.000000e+00> : vector<8x384xf32>
    %65 = tpu.matmul %64, %0, %cst_24 {dimension_numbers = #tpu.dot_dimension_numbers<[1], [0], [0], [1], [0, 0, 1, 1], [], []>} : vector<8x128xbf16>, vector<128x384xbf16>, vector<8x384xf32> -> vector<8x384xf32>
    %66 = vector.extract_strided_slice %63 {offsets = [0, 0], sizes = [8, 128], strides = [1, 1]} : vector<8x384xf32> to vector<8x128xf32>
    %67 = vector.extract_strided_slice %65 {offsets = [0, 0], sizes = [8, 128], strides = [1, 1]} : vector<8x384xf32> to vector<8x128xf32>
    %68 = arith.addf %66, %67 : vector<8x128xf32>
    %69 = arith.negf %68 : vector<8x128xf32>
    %70 = math.exp %69 : vector<8x128xf32>
    %cst_25 = arith.constant 1.000000e+00 : f32
    %71 = vector.broadcast %cst_25 : f32 to vector<8x128xf32>
    %72 = arith.addf %71, %70 : vector<8x128xf32>
    %73 = arith.divf %71, %72 : vector<8x128xf32>
    %74 = vector.extract_strided_slice %63 {offsets = [0, 128], sizes = [8, 128], strides = [1, 1]} : vector<8x384xf32> to vector<8x128xf32>
    %75 = vector.extract_strided_slice %65 {offsets = [0, 128], sizes = [8, 128], strides = [1, 1]} : vector<8x384xf32> to vector<8x128xf32>
    %76 = arith.addf %74, %75 : vector<8x128xf32>
    %77 = arith.negf %76 : vector<8x128xf32>
    %78 = math.exp %77 : vector<8x128xf32>
    %cst_26 = arith.constant 1.000000e+00 : f32
    %79 = vector.broadcast %cst_26 : f32 to vector<8x128xf32>
    %80 = arith.addf %79, %78 : vector<8x128xf32>
    %81 = arith.divf %79, %80 : vector<8x128xf32>
    %82 = vector.extract_strided_slice %63 {offsets = [0, 256], sizes = [8, 128], strides = [1, 1]} : vector<8x384xf32> to vector<8x128xf32>
    %83 = vector.extract_strided_slice %65 {offsets = [0, 256], sizes = [8, 128], strides = [1, 1]} : vector<8x384xf32> to vector<8x128xf32>
    %84 = arith.addf %83, %4 : vector<8x128xf32>
    %85 = arith.mulf %73, %84 : vector<8x128xf32>
    %86 = arith.addf %82, %85 : vector<8x128xf32>
    %87 = math.tanh %86 : vector<8x128xf32>
    %cst_27 = arith.constant 1.000000e+00 : f32
    %88 = vector.broadcast %cst_27 : f32 to vector<8x128xf32>
    %89 = arith.subf %88, %81 : vector<8x128xf32>
    %90 = arith.mulf %89, %87 : vector<8x128xf32>
    %91 = arith.mulf %81, %50 : vector<8x128xf32>
    %92 = arith.addf %90, %91 : vector<8x128xf32>
    %93 = vector.broadcast %c1_i32 : i32 to vector<8x1xi32>
    %94 = arith.cmpi slt, %93, %1 : vector<8x1xi32>
    %95 = vector.shape_cast %94 : vector<8x1xi1> to vector<8x1xi1>
    %96 = vector.broadcast %95 : vector<8x1xi1> to vector<8x128xi1>
    %97 = arith.select %96, %92, %50 : vector<8x128xi1>, vector<8x128xf32>
    %cst_28 = arith.constant 0.000000e+00 : f32
    %98 = vector.shape_cast %94 : vector<8x1xi1> to vector<8x1xi1>
    %99 = vector.broadcast %98 : vector<8x1xi1> to vector<8x128xi1>
    %100 = vector.broadcast %cst_28 : f32 to vector<8x128xf32>
    %101 = arith.select %99, %92, %100 : vector<8x128xi1>, vector<8x128xf32>
    %102 = arith.truncf %101 : vector<8x128xf32> to vector<8x128xbf16>
    %103 = arith.index_cast %c1_i32 : i32 to index
    %c0_29 = arith.constant 0 : index
    %c0_30 = arith.constant 0 : index
    %104 = vector.load %arg6[%103, %c0_29, %c0_30] : memref<8x8x128xbf16, #tpu.memory_space<vmem>>, vector<1x8x128xbf16>
    %105 = vector.shape_cast %104 : vector<1x8x128xbf16> to vector<8x128xbf16>
    %106 = vector.shape_cast %102 : vector<8x128xbf16> to vector<1x8x128xbf16>
    tpu.vector_store %arg6[%103, %c0_29, %c0_30], %106 {strides = array<i32>} : memref<8x8x128xbf16, #tpu.memory_space<vmem>>, vector<1x8x128xbf16>,
    %c2_i32 = arith.constant 2 : i32
    %c8_i32_31 = arith.constant 8 : i32
    %107 = arith.muli %c2_i32, %c8_i32_31 : i32
    %108 = tpu.assume_multiple %107, 8 : i32
    %109 = arith.index_cast %108 : i32 to index
    %c0_32 = arith.constant 0 : index
    %110 = vector.load %arg8[%109, %c0_32] : memref<64x384xf32, #tpu.memory_space<vmem>>, vector<8x384xf32>
    %111 = arith.truncf %97 : vector<8x128xf32> to vector<8x128xbf16>
    %cst_33 = arith.constant dense<0.000000e+00> : vector<8x384xf32>
    %112 = tpu.matmul %111, %0, %cst_33 {dimension_numbers = #tpu.dot_dimension_numbers<[1], [0], [0], [1], [0, 0, 1, 1], [], []>} : vector<8x128xbf16>, vector<128x384xbf16>, vector<8x384xf32> -> vector<8x384xf32>
    %113 = vector.extract_strided_slice %110 {offsets = [0, 0], sizes = [8, 128], strides = [1, 1]} : vector<8x384xf32> to vector<8x128xf32>
    %114 = vector.extract_strided_slice %112 {offsets = [0, 0], sizes = [8, 128], strides = [1, 1]} : vector<8x384xf32> to vector<8x128xf32>
    %115 = arith.addf %113, %114 : vector<8x128xf32>
    %116 = arith.negf %115 : vector<8x128xf32>
    %117 = math.exp %116 : vector<8x128xf32>
    %cst_34 = arith.constant 1.000000e+00 : f32
    %118 = vector.broadcast %cst_34 : f32 to vector<8x128xf32>
    %119 = arith.addf %118, %117 : vector<8x128xf32>
    %120 = arith.divf %118, %119 : vector<8x128xf32>
    %121 = vector.extract_strided_slice %110 {offsets = [0, 128], sizes = [8, 128], strides = [1, 1]} : vector<8x384xf32> to vector<8x128xf32>
    %122 = vector.extract_strided_slice %112 {offsets = [0, 128], sizes = [8, 128], strides = [1, 1]} : vector<8x384xf32> to vector<8x128xf32>
    %123 = arith.addf %121, %122 : vector<8x128xf32>
    %124 = arith.negf %123 : vector<8x128xf32>
    %125 = math.exp %124 : vector<8x128xf32>
    %cst_35 = arith.constant 1.000000e+00 : f32
    %126 = vector.broadcast %cst_35 : f32 to vector<8x128xf32>
    %127 = arith.addf %126, %125 : vector<8x128xf32>
    %128 = arith.divf %126, %127 : vector<8x128xf32>
    %129 = vector.extract_strided_slice %110 {offsets = [0, 256], sizes = [8, 128], strides = [1, 1]} : vector<8x384xf32> to vector<8x128xf32>
    %130 = vector.extract_strided_slice %112 {offsets = [0, 256], sizes = [8, 128], strides = [1, 1]} : vector<8x384xf32> to vector<8x128xf32>
    %131 = arith.addf %130, %4 : vector<8x128xf32>
    %132 = arith.mulf %120, %131 : vector<8x128xf32>
    %133 = arith.addf %129, %132 : vector<8x128xf32>
    %134 = math.tanh %133 : vector<8x128xf32>
    %cst_36 = arith.constant 1.000000e+00 : f32
    %135 = vector.broadcast %cst_36 : f32 to vector<8x128xf32>
    %136 = arith.subf %135, %128 : vector<8x128xf32>
    %137 = arith.mulf %136, %134 : vector<8x128xf32>
    %138 = arith.mulf %128, %97 : vector<8x128xf32>
    %139 = arith.addf %137, %138 : vector<8x128xf32>
    %140 = vector.broadcast %c2_i32 : i32 to vector<8x1xi32>
    %141 = arith.cmpi slt, %140, %1 : vector<8x1xi32>
    %142 = vector.shape_cast %141 : vector<8x1xi1> to vector<8x1xi1>
    %143 = vector.broadcast %142 : vector<8x1xi1> to vector<8x128xi1>
    %144 = arith.select %143, %139, %97 : vector<8x128xi1>, vector<8x128xf32>
    %cst_37 = arith.constant 0.000000e+00 : f32
    %145 = vector.shape_cast %141 : vector<8x1xi1> to vector<8x1xi1>
    %146 = vector.broadcast %145 : vector<8x1xi1> to vector<8x128xi1>
    %147 = vector.broadcast %cst_37 : f32 to vector<8x128xf32>
    %148 = arith.select %146, %139, %147 : vector<8x128xi1>, vector<8x128xf32>
    %149 = arith.truncf %148 : vector<8x128xf32> to vector<8x128xbf16>
    %150 = arith.index_cast %c2_i32 : i32 to index
    %c0_38 = arith.constant 0 : index
    %c0_39 = arith.constant 0 : index
    %151 = vector.load %arg6[%150, %c0_38, %c0_39] : memref<8x8x128xbf16, #tpu.memory_space<vmem>>, vector<1x8x128xbf16>
    %152 = vector.shape_cast %151 : vector<1x8x128xbf16> to vector<8x128xbf16>
    %153 = vector.shape_cast %149 : vector<8x128xbf16> to vector<1x8x128xbf16>
    tpu.vector_store %arg6[%150, %c0_38, %c0_39], %153 {strides = array<i32>} : memref<8x8x128xbf16, #tpu.memory_space<vmem>>, vector<1x8x128xbf16>,
    %c3_i32 = arith.constant 3 : i32
    %c8_i32_40 = arith.constant 8 : i32
    %154 = arith.muli %c3_i32, %c8_i32_40 : i32
    %155 = tpu.assume_multiple %154, 8 : i32
    %156 = arith.index_cast %155 : i32 to index
    %c0_41 = arith.constant 0 : index
    %157 = vector.load %arg8[%156, %c0_41] : memref<64x384xf32, #tpu.memory_space<vmem>>, vector<8x384xf32>
    %158 = arith.truncf %144 : vector<8x128xf32> to vector<8x128xbf16>
    %cst_42 = arith.constant dense<0.000000e+00> : vector<8x384xf32>
    %159 = tpu.matmul %158, %0, %cst_42 {dimension_numbers = #tpu.dot_dimension_numbers<[1], [0], [0], [1], [0, 0, 1, 1], [], []>} : vector<8x128xbf16>, vector<128x384xbf16>, vector<8x384xf32> -> vector<8x384xf32>
    %160 = vector.extract_strided_slice %157 {offsets = [0, 0], sizes = [8, 128], strides = [1, 1]} : vector<8x384xf32> to vector<8x128xf32>
    %161 = vector.extract_strided_slice %159 {offsets = [0, 0], sizes = [8, 128], strides = [1, 1]} : vector<8x384xf32> to vector<8x128xf32>
    %162 = arith.addf %160, %161 : vector<8x128xf32>
    %163 = arith.negf %162 : vector<8x128xf32>
    %164 = math.exp %163 : vector<8x128xf32>
    %cst_43 = arith.constant 1.000000e+00 : f32
    %165 = vector.broadcast %cst_43 : f32 to vector<8x128xf32>
    %166 = arith.addf %165, %164 : vector<8x128xf32>
    %167 = arith.divf %165, %166 : vector<8x128xf32>
    %168 = vector.extract_strided_slice %157 {offsets = [0, 128], sizes = [8, 128], strides = [1, 1]} : vector<8x384xf32> to vector<8x128xf32>
    %169 = vector.extract_strided_slice %159 {offsets = [0, 128], sizes = [8, 128], strides = [1, 1]} : vector<8x384xf32> to vector<8x128xf32>
    %170 = arith.addf %168, %169 : vector<8x128xf32>
    %171 = arith.negf %170 : vector<8x128xf32>
    %172 = math.exp %171 : vector<8x128xf32>
    %cst_44 = arith.constant 1.000000e+00 : f32
    %173 = vector.broadcast %cst_44 : f32 to vector<8x128xf32>
    %174 = arith.addf %173, %172 : vector<8x128xf32>
    %175 = arith.divf %173, %174 : vector<8x128xf32>
    %176 = vector.extract_strided_slice %157 {offsets = [0, 256], sizes = [8, 128], strides = [1, 1]} : vector<8x384xf32> to vector<8x128xf32>
    %177 = vector.extract_strided_slice %159 {offsets = [0, 256], sizes = [8, 128], strides = [1, 1]} : vector<8x384xf32> to vector<8x128xf32>
    %178 = arith.addf %177, %4 : vector<8x128xf32>
    %179 = arith.mulf %167, %178 : vector<8x128xf32>
    %180 = arith.addf %176, %179 : vector<8x128xf32>
    %181 = math.tanh %180 : vector<8x128xf32>
    %cst_45 = arith.constant 1.000000e+00 : f32
    %182 = vector.broadcast %cst_45 : f32 to vector<8x128xf32>
    %183 = arith.subf %182, %175 : vector<8x128xf32>
    %184 = arith.mulf %183, %181 : vector<8x128xf32>
    %185 = arith.mulf %175, %144 : vector<8x128xf32>
    %186 = arith.addf %184, %185 : vector<8x128xf32>
    %187 = vector.broadcast %c3_i32 : i32 to vector<8x1xi32>
    %188 = arith.cmpi slt, %187, %1 : vector<8x1xi32>
    %189 = vector.shape_cast %188 : vector<8x1xi1> to vector<8x1xi1>
    %190 = vector.broadcast %189 : vector<8x1xi1> to vector<8x128xi1>
    %191 = arith.select %190, %186, %144 : vector<8x128xi1>, vector<8x128xf32>
    %cst_46 = arith.constant 0.000000e+00 : f32
    %192 = vector.shape_cast %188 : vector<8x1xi1> to vector<8x1xi1>
    %193 = vector.broadcast %192 : vector<8x1xi1> to vector<8x128xi1>
    %194 = vector.broadcast %cst_46 : f32 to vector<8x128xf32>
    %195 = arith.select %193, %186, %194 : vector<8x128xi1>, vector<8x128xf32>
    %196 = arith.truncf %195 : vector<8x128xf32> to vector<8x128xbf16>
    %197 = arith.index_cast %c3_i32 : i32 to index
    %c0_47 = arith.constant 0 : index
    %c0_48 = arith.constant 0 : index
    %198 = vector.load %arg6[%197, %c0_47, %c0_48] : memref<8x8x128xbf16, #tpu.memory_space<vmem>>, vector<1x8x128xbf16>
    %199 = vector.shape_cast %198 : vector<1x8x128xbf16> to vector<8x128xbf16>
    %200 = vector.shape_cast %196 : vector<8x128xbf16> to vector<1x8x128xbf16>
    tpu.vector_store %arg6[%197, %c0_47, %c0_48], %200 {strides = array<i32>} : memref<8x8x128xbf16, #tpu.memory_space<vmem>>, vector<1x8x128xbf16>,
    %c4_i32 = arith.constant 4 : i32
    %c8_i32_49 = arith.constant 8 : i32
    %201 = arith.muli %c4_i32, %c8_i32_49 : i32
    %202 = tpu.assume_multiple %201, 8 : i32
    %203 = arith.index_cast %202 : i32 to index
    %c0_50 = arith.constant 0 : index
    %204 = vector.load %arg8[%203, %c0_50] : memref<64x384xf32, #tpu.memory_space<vmem>>, vector<8x384xf32>
    %205 = arith.truncf %191 : vector<8x128xf32> to vector<8x128xbf16>
    %cst_51 = arith.constant dense<0.000000e+00> : vector<8x384xf32>
    %206 = tpu.matmul %205, %0, %cst_51 {dimension_numbers = #tpu.dot_dimension_numbers<[1], [0], [0], [1], [0, 0, 1, 1], [], []>} : vector<8x128xbf16>, vector<128x384xbf16>, vector<8x384xf32> -> vector<8x384xf32>
    %207 = vector.extract_strided_slice %204 {offsets = [0, 0], sizes = [8, 128], strides = [1, 1]} : vector<8x384xf32> to vector<8x128xf32>
    %208 = vector.extract_strided_slice %206 {offsets = [0, 0], sizes = [8, 128], strides = [1, 1]} : vector<8x384xf32> to vector<8x128xf32>
    %209 = arith.addf %207, %208 : vector<8x128xf32>
    %210 = arith.negf %209 : vector<8x128xf32>
    %211 = math.exp %210 : vector<8x128xf32>
    %cst_52 = arith.constant 1.000000e+00 : f32
    %212 = vector.broadcast %cst_52 : f32 to vector<8x128xf32>
    %213 = arith.addf %212, %211 : vector<8x128xf32>
    %214 = arith.divf %212, %213 : vector<8x128xf32>
    %215 = vector.extract_strided_slice %204 {offsets = [0, 128], sizes = [8, 128], strides = [1, 1]} : vector<8x384xf32> to vector<8x128xf32>
    %216 = vector.extract_strided_slice %206 {offsets = [0, 128], sizes = [8, 128], strides = [1, 1]} : vector<8x384xf32> to vector<8x128xf32>
    %217 = arith.addf %215, %216 : vector<8x128xf32>
    %218 = arith.negf %217 : vector<8x128xf32>
    %219 = math.exp %218 : vector<8x128xf32>
    %cst_53 = arith.constant 1.000000e+00 : f32
    %220 = vector.broadcast %cst_53 : f32 to vector<8x128xf32>
    %221 = arith.addf %220, %219 : vector<8x128xf32>
    %222 = arith.divf %220, %221 : vector<8x128xf32>
    %223 = vector.extract_strided_slice %204 {offsets = [0, 256], sizes = [8, 128], strides = [1, 1]} : vector<8x384xf32> to vector<8x128xf32>
    %224 = vector.extract_strided_slice %206 {offsets = [0, 256], sizes = [8, 128], strides = [1, 1]} : vector<8x384xf32> to vector<8x128xf32>
    %225 = arith.addf %224, %4 : vector<8x128xf32>
    %226 = arith.mulf %214, %225 : vector<8x128xf32>
    %227 = arith.addf %223, %226 : vector<8x128xf32>
    %228 = math.tanh %227 : vector<8x128xf32>
    %cst_54 = arith.constant 1.000000e+00 : f32
    %229 = vector.broadcast %cst_54 : f32 to vector<8x128xf32>
    %230 = arith.subf %229, %222 : vector<8x128xf32>
    %231 = arith.mulf %230, %228 : vector<8x128xf32>
    %232 = arith.mulf %222, %191 : vector<8x128xf32>
    %233 = arith.addf %231, %232 : vector<8x128xf32>
    %234 = vector.broadcast %c4_i32 : i32 to vector<8x1xi32>
    %235 = arith.cmpi slt, %234, %1 : vector<8x1xi32>
    %236 = vector.shape_cast %235 : vector<8x1xi1> to vector<8x1xi1>
    %237 = vector.broadcast %236 : vector<8x1xi1> to vector<8x128xi1>
    %238 = arith.select %237, %233, %191 : vector<8x128xi1>, vector<8x128xf32>
    %cst_55 = arith.constant 0.000000e+00 : f32
    %239 = vector.shape_cast %235 : vector<8x1xi1> to vector<8x1xi1>
    %240 = vector.broadcast %239 : vector<8x1xi1> to vector<8x128xi1>
    %241 = vector.broadcast %cst_55 : f32 to vector<8x128xf32>
    %242 = arith.select %240, %233, %241 : vector<8x128xi1>, vector<8x128xf32>
    %243 = arith.truncf %242 : vector<8x128xf32> to vector<8x128xbf16>
    %244 = arith.index_cast %c4_i32 : i32 to index
    %c0_56 = arith.constant 0 : index
    %c0_57 = arith.constant 0 : index
    %245 = vector.load %arg6[%244, %c0_56, %c0_57] : memref<8x8x128xbf16, #tpu.memory_space<vmem>>, vector<1x8x128xbf16>
    %246 = vector.shape_cast %245 : vector<1x8x128xbf16> to vector<8x128xbf16>
    %247 = vector.shape_cast %243 : vector<8x128xbf16> to vector<1x8x128xbf16>
    tpu.vector_store %arg6[%244, %c0_56, %c0_57], %247 {strides = array<i32>} : memref<8x8x128xbf16, #tpu.memory_space<vmem>>, vector<1x8x128xbf16>,
    %c5_i32 = arith.constant 5 : i32
    %c8_i32_58 = arith.constant 8 : i32
    %248 = arith.muli %c5_i32, %c8_i32_58 : i32
    %249 = tpu.assume_multiple %248, 8 : i32
    %250 = arith.index_cast %249 : i32 to index
    %c0_59 = arith.constant 0 : index
    %251 = vector.load %arg8[%250, %c0_59] : memref<64x384xf32, #tpu.memory_space<vmem>>, vector<8x384xf32>
    %252 = arith.truncf %238 : vector<8x128xf32> to vector<8x128xbf16>
    %cst_60 = arith.constant dense<0.000000e+00> : vector<8x384xf32>
    %253 = tpu.matmul %252, %0, %cst_60 {dimension_numbers = #tpu.dot_dimension_numbers<[1], [0], [0], [1], [0, 0, 1, 1], [], []>} : vector<8x128xbf16>, vector<128x384xbf16>, vector<8x384xf32> -> vector<8x384xf32>
    %254 = vector.extract_strided_slice %251 {offsets = [0, 0], sizes = [8, 128], strides = [1, 1]} : vector<8x384xf32> to vector<8x128xf32>
    %255 = vector.extract_strided_slice %253 {offsets = [0, 0], sizes = [8, 128], strides = [1, 1]} : vector<8x384xf32> to vector<8x128xf32>
    %256 = arith.addf %254, %255 : vector<8x128xf32>
    %257 = arith.negf %256 : vector<8x128xf32>
    %258 = math.exp %257 : vector<8x128xf32>
    %cst_61 = arith.constant 1.000000e+00 : f32
    %259 = vector.broadcast %cst_61 : f32 to vector<8x128xf32>
    %260 = arith.addf %259, %258 : vector<8x128xf32>
    %261 = arith.divf %259, %260 : vector<8x128xf32>
    %262 = vector.extract_strided_slice %251 {offsets = [0, 128], sizes = [8, 128], strides = [1, 1]} : vector<8x384xf32> to vector<8x128xf32>
    %263 = vector.extract_strided_slice %253 {offsets = [0, 128], sizes = [8, 128], strides = [1, 1]} : vector<8x384xf32> to vector<8x128xf32>
    %264 = arith.addf %262, %263 : vector<8x128xf32>
    %265 = arith.negf %264 : vector<8x128xf32>
    %266 = math.exp %265 : vector<8x128xf32>
    %cst_62 = arith.constant 1.000000e+00 : f32
    %267 = vector.broadcast %cst_62 : f32 to vector<8x128xf32>
    %268 = arith.addf %267, %266 : vector<8x128xf32>
    %269 = arith.divf %267, %268 : vector<8x128xf32>
    %270 = vector.extract_strided_slice %251 {offsets = [0, 256], sizes = [8, 128], strides = [1, 1]} : vector<8x384xf32> to vector<8x128xf32>
    %271 = vector.extract_strided_slice %253 {offsets = [0, 256], sizes = [8, 128], strides = [1, 1]} : vector<8x384xf32> to vector<8x128xf32>
    %272 = arith.addf %271, %4 : vector<8x128xf32>
    %273 = arith.mulf %261, %272 : vector<8x128xf32>
    %274 = arith.addf %270, %273 : vector<8x128xf32>
    %275 = math.tanh %274 : vector<8x128xf32>
    %cst_63 = arith.constant 1.000000e+00 : f32
    %276 = vector.broadcast %cst_63 : f32 to vector<8x128xf32>
    %277 = arith.subf %276, %269 : vector<8x128xf32>
    %278 = arith.mulf %277, %275 : vector<8x128xf32>
    %279 = arith.mulf %269, %238 : vector<8x128xf32>
    %280 = arith.addf %278, %279 : vector<8x128xf32>
    %281 = vector.broadcast %c5_i32 : i32 to vector<8x1xi32>
    %282 = arith.cmpi slt, %281, %1 : vector<8x1xi32>
    %283 = vector.shape_cast %282 : vector<8x1xi1> to vector<8x1xi1>
    %284 = vector.broadcast %283 : vector<8x1xi1> to vector<8x128xi1>
    %285 = arith.select %284, %280, %238 : vector<8x128xi1>, vector<8x128xf32>
    %cst_64 = arith.constant 0.000000e+00 : f32
    %286 = vector.shape_cast %282 : vector<8x1xi1> to vector<8x1xi1>
    %287 = vector.broadcast %286 : vector<8x1xi1> to vector<8x128xi1>
    %288 = vector.broadcast %cst_64 : f32 to vector<8x128xf32>
    %289 = arith.select %287, %280, %288 : vector<8x128xi1>, vector<8x128xf32>
    %290 = arith.truncf %289 : vector<8x128xf32> to vector<8x128xbf16>
    %291 = arith.index_cast %c5_i32 : i32 to index
    %c0_65 = arith.constant 0 : index
    %c0_66 = arith.constant 0 : index
    %292 = vector.load %arg6[%291, %c0_65, %c0_66] : memref<8x8x128xbf16, #tpu.memory_space<vmem>>, vector<1x8x128xbf16>
    %293 = vector.shape_cast %292 : vector<1x8x128xbf16> to vector<8x128xbf16>
    %294 = vector.shape_cast %290 : vector<8x128xbf16> to vector<1x8x128xbf16>
    tpu.vector_store %arg6[%291, %c0_65, %c0_66], %294 {strides = array<i32>} : memref<8x8x128xbf16, #tpu.memory_space<vmem>>, vector<1x8x128xbf16>,
    %c6_i32 = arith.constant 6 : i32
    %c8_i32_67 = arith.constant 8 : i32
    %295 = arith.muli %c6_i32, %c8_i32_67 : i32
    %296 = tpu.assume_multiple %295, 8 : i32
    %297 = arith.index_cast %296 : i32 to index
    %c0_68 = arith.constant 0 : index
    %298 = vector.load %arg8[%297, %c0_68] : memref<64x384xf32, #tpu.memory_space<vmem>>, vector<8x384xf32>
    %299 = arith.truncf %285 : vector<8x128xf32> to vector<8x128xbf16>
    %cst_69 = arith.constant dense<0.000000e+00> : vector<8x384xf32>
    %300 = tpu.matmul %299, %0, %cst_69 {dimension_numbers = #tpu.dot_dimension_numbers<[1], [0], [0], [1], [0, 0, 1, 1], [], []>} : vector<8x128xbf16>, vector<128x384xbf16>, vector<8x384xf32> -> vector<8x384xf32>
    %301 = vector.extract_strided_slice %298 {offsets = [0, 0], sizes = [8, 128], strides = [1, 1]} : vector<8x384xf32> to vector<8x128xf32>
    %302 = vector.extract_strided_slice %300 {offsets = [0, 0], sizes = [8, 128], strides = [1, 1]} : vector<8x384xf32> to vector<8x128xf32>
    %303 = arith.addf %301, %302 : vector<8x128xf32>
    %304 = arith.negf %303 : vector<8x128xf32>
    %305 = math.exp %304 : vector<8x128xf32>
    %cst_70 = arith.constant 1.000000e+00 : f32
    %306 = vector.broadcast %cst_70 : f32 to vector<8x128xf32>
    %307 = arith.addf %306, %305 : vector<8x128xf32>
    %308 = arith.divf %306, %307 : vector<8x128xf32>
    %309 = vector.extract_strided_slice %298 {offsets = [0, 128], sizes = [8, 128], strides = [1, 1]} : vector<8x384xf32> to vector<8x128xf32>
    %310 = vector.extract_strided_slice %300 {offsets = [0, 128], sizes = [8, 128], strides = [1, 1]} : vector<8x384xf32> to vector<8x128xf32>
    %311 = arith.addf %309, %310 : vector<8x128xf32>
    %312 = arith.negf %311 : vector<8x128xf32>
    %313 = math.exp %312 : vector<8x128xf32>
    %cst_71 = arith.constant 1.000000e+00 : f32
    %314 = vector.broadcast %cst_71 : f32 to vector<8x128xf32>
    %315 = arith.addf %314, %313 : vector<8x128xf32>
    %316 = arith.divf %314, %315 : vector<8x128xf32>
    %317 = vector.extract_strided_slice %298 {offsets = [0, 256], sizes = [8, 128], strides = [1, 1]} : vector<8x384xf32> to vector<8x128xf32>
    %318 = vector.extract_strided_slice %300 {offsets = [0, 256], sizes = [8, 128], strides = [1, 1]} : vector<8x384xf32> to vector<8x128xf32>
    %319 = arith.addf %318, %4 : vector<8x128xf32>
    %320 = arith.mulf %308, %319 : vector<8x128xf32>
    %321 = arith.addf %317, %320 : vector<8x128xf32>
    %322 = math.tanh %321 : vector<8x128xf32>
    %cst_72 = arith.constant 1.000000e+00 : f32
    %323 = vector.broadcast %cst_72 : f32 to vector<8x128xf32>
    %324 = arith.subf %323, %316 : vector<8x128xf32>
    %325 = arith.mulf %324, %322 : vector<8x128xf32>
    %326 = arith.mulf %316, %285 : vector<8x128xf32>
    %327 = arith.addf %325, %326 : vector<8x128xf32>
    %328 = vector.broadcast %c6_i32 : i32 to vector<8x1xi32>
    %329 = arith.cmpi slt, %328, %1 : vector<8x1xi32>
    %330 = vector.shape_cast %329 : vector<8x1xi1> to vector<8x1xi1>
    %331 = vector.broadcast %330 : vector<8x1xi1> to vector<8x128xi1>
    %332 = arith.select %331, %327, %285 : vector<8x128xi1>, vector<8x128xf32>
    %cst_73 = arith.constant 0.000000e+00 : f32
    %333 = vector.shape_cast %329 : vector<8x1xi1> to vector<8x1xi1>
    %334 = vector.broadcast %333 : vector<8x1xi1> to vector<8x128xi1>
    %335 = vector.broadcast %cst_73 : f32 to vector<8x128xf32>
    %336 = arith.select %334, %327, %335 : vector<8x128xi1>, vector<8x128xf32>
    %337 = arith.truncf %336 : vector<8x128xf32> to vector<8x128xbf16>
    %338 = arith.index_cast %c6_i32 : i32 to index
    %c0_74 = arith.constant 0 : index
    %c0_75 = arith.constant 0 : index
    %339 = vector.load %arg6[%338, %c0_74, %c0_75] : memref<8x8x128xbf16, #tpu.memory_space<vmem>>, vector<1x8x128xbf16>
    %340 = vector.shape_cast %339 : vector<1x8x128xbf16> to vector<8x128xbf16>
    %341 = vector.shape_cast %337 : vector<8x128xbf16> to vector<1x8x128xbf16>
    tpu.vector_store %arg6[%338, %c0_74, %c0_75], %341 {strides = array<i32>} : memref<8x8x128xbf16, #tpu.memory_space<vmem>>, vector<1x8x128xbf16>,
    %c7_i32 = arith.constant 7 : i32
    %c8_i32_76 = arith.constant 8 : i32
    %342 = arith.muli %c7_i32, %c8_i32_76 : i32
    %343 = tpu.assume_multiple %342, 8 : i32
    %344 = arith.index_cast %343 : i32 to index
    %c0_77 = arith.constant 0 : index
    %345 = vector.load %arg8[%344, %c0_77] : memref<64x384xf32, #tpu.memory_space<vmem>>, vector<8x384xf32>
    %346 = arith.truncf %332 : vector<8x128xf32> to vector<8x128xbf16>
    %cst_78 = arith.constant dense<0.000000e+00> : vector<8x384xf32>
    %347 = tpu.matmul %346, %0, %cst_78 {dimension_numbers = #tpu.dot_dimension_numbers<[1], [0], [0], [1], [0, 0, 1, 1], [], []>} : vector<8x128xbf16>, vector<128x384xbf16>, vector<8x384xf32> -> vector<8x384xf32>
    %348 = vector.extract_strided_slice %345 {offsets = [0, 0], sizes = [8, 128], strides = [1, 1]} : vector<8x384xf32> to vector<8x128xf32>
    %349 = vector.extract_strided_slice %347 {offsets = [0, 0], sizes = [8, 128], strides = [1, 1]} : vector<8x384xf32> to vector<8x128xf32>
    %350 = arith.addf %348, %349 : vector<8x128xf32>
    %351 = arith.negf %350 : vector<8x128xf32>
    %352 = math.exp %351 : vector<8x128xf32>
    %cst_79 = arith.constant 1.000000e+00 : f32
    %353 = vector.broadcast %cst_79 : f32 to vector<8x128xf32>
    %354 = arith.addf %353, %352 : vector<8x128xf32>
    %355 = arith.divf %353, %354 : vector<8x128xf32>
    %356 = vector.extract_strided_slice %345 {offsets = [0, 128], sizes = [8, 128], strides = [1, 1]} : vector<8x384xf32> to vector<8x128xf32>
    %357 = vector.extract_strided_slice %347 {offsets = [0, 128], sizes = [8, 128], strides = [1, 1]} : vector<8x384xf32> to vector<8x128xf32>
    %358 = arith.addf %356, %357 : vector<8x128xf32>
    %359 = arith.negf %358 : vector<8x128xf32>
    %360 = math.exp %359 : vector<8x128xf32>
    %cst_80 = arith.constant 1.000000e+00 : f32
    %361 = vector.broadcast %cst_80 : f32 to vector<8x128xf32>
    %362 = arith.addf %361, %360 : vector<8x128xf32>
    %363 = arith.divf %361, %362 : vector<8x128xf32>
    %364 = vector.extract_strided_slice %345 {offsets = [0, 256], sizes = [8, 128], strides = [1, 1]} : vector<8x384xf32> to vector<8x128xf32>
    %365 = vector.extract_strided_slice %347 {offsets = [0, 256], sizes = [8, 128], strides = [1, 1]} : vector<8x384xf32> to vector<8x128xf32>
    %366 = arith.addf %365, %4 : vector<8x128xf32>
    %367 = arith.mulf %355, %366 : vector<8x128xf32>
    %368 = arith.addf %364, %367 : vector<8x128xf32>
    %369 = math.tanh %368 : vector<8x128xf32>
    %cst_81 = arith.constant 1.000000e+00 : f32
    %370 = vector.broadcast %cst_81 : f32 to vector<8x128xf32>
    %371 = arith.subf %370, %363 : vector<8x128xf32>
    %372 = arith.mulf %371, %369 : vector<8x128xf32>
    %373 = arith.mulf %363, %332 : vector<8x128xf32>
    %374 = arith.addf %372, %373 : vector<8x128xf32>
    %375 = vector.broadcast %c7_i32 : i32 to vector<8x1xi32>
    %376 = arith.cmpi slt, %375, %1 : vector<8x1xi32>
    %377 = vector.shape_cast %376 : vector<8x1xi1> to vector<8x1xi1>
    %378 = vector.broadcast %377 : vector<8x1xi1> to vector<8x128xi1>
    %379 = arith.select %378, %374, %332 : vector<8x128xi1>, vector<8x128xf32>
    %cst_82 = arith.constant 0.000000e+00 : f32
    %380 = vector.shape_cast %376 : vector<8x1xi1> to vector<8x1xi1>
    %381 = vector.broadcast %380 : vector<8x1xi1> to vector<8x128xi1>
    %382 = vector.broadcast %cst_82 : f32 to vector<8x128xf32>
    %383 = arith.select %381, %374, %382 : vector<8x128xi1>, vector<8x128xf32>
    %384 = arith.truncf %383 : vector<8x128xf32> to vector<8x128xbf16>
    %385 = arith.index_cast %c7_i32 : i32 to index
    %c0_83 = arith.constant 0 : index
    %c0_84 = arith.constant 0 : index
    %386 = vector.load %arg6[%385, %c0_83, %c0_84] : memref<8x8x128xbf16, #tpu.memory_space<vmem>>, vector<1x8x128xbf16>
    %387 = vector.shape_cast %386 : vector<1x8x128xbf16> to vector<8x128xbf16>
    %388 = vector.shape_cast %384 : vector<8x128xbf16> to vector<1x8x128xbf16>
    tpu.vector_store %arg6[%385, %c0_83, %c0_84], %388 {strides = array<i32>} : memref<8x8x128xbf16, #tpu.memory_space<vmem>>, vector<1x8x128xbf16>,
    %c8_i32_85 = arith.constant 8 : i32
    %c0_86 = arith.constant 0 : index
    %c0_87 = arith.constant 0 : index
    %389 = vector.load %arg7[%c0_86, %c0_87] : memref<8x128xf32, #tpu.memory_space<vmem>>, vector<8x128xf32>
    tpu.vector_store %arg7[%c0_86, %c0_87], %379 {strides = array<i32>} : memref<8x128xf32, #tpu.memory_space<vmem>>, vector<8x128xf32>,
    return
  }
}

module attributes {stable_mosaic.version = 11 : i64} {
  func.func @generator_kernel(%arg0: i32, %arg1: memref<48x128xbf16, #tpu.memory_space<vmem>>, %arg2: memref<256x128xbf16, #tpu.memory_space<vmem>>, %arg3: memref<1x256xf32, #tpu.memory_space<vmem>>, %arg4: memref<48x256xf32, #tpu.memory_space<vmem>>) attributes {dimension_semantics = [#tpu.dimension_semantics<parallel>], iteration_bounds = array<i64: 1>, scalar_prefetch = 0 : i64, scratch_operands = 0 : i64, tpu.core_type = #tpu.core_type<tc>, window_params = [{pipeline_mode = #tpu.pipeline_mode<synchronous>, transform_indices = @transform_0, window_bounds = array<i64: 48, 128>}, {transform_indices = @transform_1, window_bounds = array<i64: 256, 128>}, {transform_indices = @transform_2, window_bounds = array<i64: 1, 256>}, {transform_indices = @transform_3, window_bounds = array<i64: 48, 256>}]} {
    %c0 = arith.constant 0 : index
    %c0_0 = arith.constant 0 : index
    %0 = vector.load %arg1[%c0, %c0_0] : memref<48x128xbf16, #tpu.memory_space<vmem>>, vector<48x128xbf16>
    %c0_1 = arith.constant 0 : index
    %c0_2 = arith.constant 0 : index
    %1 = vector.load %arg2[%c0_1, %c0_2] : memref<256x128xbf16, #tpu.memory_space<vmem>>, vector<256x128xbf16>
    %cst = arith.constant dense<0.000000e+00> : vector<48x256xf32>
    %2 = tpu.matmul %0, %1, %cst {dimension_numbers = #tpu.dot_dimension_numbers<[1], [1], [0], [0], [0, 0, 1, 0], [], []>} : vector<48x128xbf16>, vector<256x128xbf16>, vector<48x256xf32> -> vector<48x256xf32>
    %c0_3 = arith.constant 0 : index
    %c0_4 = arith.constant 0 : index
    %3 = vector.load %arg3[%c0_3, %c0_4] : memref<1x256xf32, #tpu.memory_space<vmem>>, vector<1x256xf32>
    %4 = vector.broadcast %3 : vector<1x256xf32> to vector<48x256xf32>
    %5 = arith.addf %2, %4 : vector<48x256xf32>
    %c0_5 = arith.constant 0 : index
    %c0_6 = arith.constant 0 : index
    %6 = vector.load %arg4[%c0_5, %c0_6] : memref<48x256xf32, #tpu.memory_space<vmem>>, vector<48x256xf32>
    tpu.vector_store %arg4[%c0_5, %c0_6], %5 {strides = array<i32>} : memref<48x256xf32, #tpu.memory_space<vmem>>, vector<48x256xf32>,
    return
  }
  func.func @transform_0(%arg0: i32) -> (i32, i32) {
    %c0_i32 = arith.constant 0 : i32
    %c0_i32_0 = arith.constant 0 : i32
    %c0_i32_1 = arith.constant 0 : i32
    return %c0_i32, %c0_i32_0 : i32, i32
  }
  func.func @transform_1(%arg0: i32) -> (i32, i32) {
    %c0_i32 = arith.constant 0 : i32
    %c0_i32_0 = arith.constant 0 : i32
    return %arg0, %c0_i32 : i32, i32
  }
  func.func @transform_2(%arg0: i32) -> (i32, i32) {
    %c0_i32 = arith.constant 0 : i32
    %c0_i32_0 = arith.constant 0 : i32
    return %c0_i32, %arg0 : i32, i32
  }
  func.func @transform_3(%arg0: i32) -> (i32, i32) {
    %c0_i32 = arith.constant 0 : i32
    %c0_i32_0 = arith.constant 0 : i32
    return %c0_i32, %arg0 : i32, i32
  }
}

module attributes {stable_mosaic.version = 11 : i64} {
  func.func @decoder_kernel(%arg0: memref<48x128xbf16, #tpu.memory_space<vmem>>, %arg1: memref<8x128xf32, #tpu.memory_space<vmem>>, %arg2: memref<8x8x128xbf16, #tpu.memory_space<vmem>>, %arg3: memref<1x8xi32, #tpu.memory_space<vmem>>, %arg4: memref<128x384xbf16, #tpu.memory_space<vmem>>, %arg5: memref<128x384xbf16, #tpu.memory_space<vmem>>, %arg6: memref<1x384xf32, #tpu.memory_space<vmem>>, %arg7: memref<1x128xf32, #tpu.memory_space<vmem>>, %arg8: memref<128x128xbf16, #tpu.memory_space<vmem>>, %arg9: memref<128x128xbf16, #tpu.memory_space<vmem>>, %arg10: memref<1x128xf32, #tpu.memory_space<vmem>>, %arg11: memref<48x128xbf16, #tpu.memory_space<vmem>>, %arg12: memref<8x128xf32, #tpu.memory_space<vmem>>, %arg13: memref<48x384xf32, #tpu.memory_space<vmem>>) attributes {dimension_semantics = [], scalar_prefetch = 0 : i64, scratch_operands = 1 : i64, tpu.core_type = #tpu.core_type<tc>} {
    %c0 = arith.constant 0 : index
    %c0_0 = arith.constant 0 : index
    %0 = vector.load %arg5[%c0, %c0_0] : memref<128x384xbf16, #tpu.memory_space<vmem>>, vector<128x384xbf16>
    %c0_1 = arith.constant 0 : index
    %c0_2 = arith.constant 0 : index
    %1 = vector.load %arg8[%c0_1, %c0_2] : memref<128x128xbf16, #tpu.memory_space<vmem>>, vector<128x128xbf16>
    %c0_3 = arith.constant 0 : index
    %c0_4 = arith.constant 0 : index
    %2 = vector.load %arg9[%c0_3, %c0_4] : memref<128x128xbf16, #tpu.memory_space<vmem>>, vector<128x128xbf16>
    %c0_5 = arith.constant 0 : index
    %c0_6 = arith.constant 0 : index
    %3 = vector.load %arg7[%c0_5, %c0_6] : memref<1x128xf32, #tpu.memory_space<vmem>>, vector<1x128xf32>
    %4 = vector.shape_cast %3 : vector<1x128xf32> to vector<1x128xf32>
    %5 = vector.broadcast %4 : vector<1x128xf32> to vector<8x128xf32>
    %c0_7 = arith.constant 0 : index
    %c0_8 = arith.constant 0 : index
    %6 = vector.load %arg10[%c0_7, %c0_8] : memref<1x128xf32, #tpu.memory_space<vmem>>, vector<1x128xf32>
    %7 = vector.shape_cast %6 : vector<1x128xf32> to vector<1x128xf32>
    %8 = vector.broadcast %7 : vector<1x128xf32> to vector<8x128xf32>
    %c0_9 = arith.constant 0 : index
    %c0_10 = arith.constant 0 : index
    %c0_11 = arith.constant 0 : index
    %9 = vector.load %arg2[%c0_9, %c0_10, %c0_11] : memref<8x8x128xbf16, #tpu.memory_space<vmem>>, vector<8x8x128xbf16>
    %10 = arith.extf %9 : vector<8x8x128xbf16> to vector<8x8x128xf32>
    %11 = tpu.iota {dimensions = array<i32: 0>} : vector<8x8xi32>
    %c0_12 = arith.constant 0 : index
    %c0_13 = arith.constant 0 : index
    %12 = vector.load %arg3[%c0_12, %c0_13] : memref<1x8xi32, #tpu.memory_space<vmem>>, vector<1x8xi32>
    %13 = vector.broadcast %12 : vector<1x8xi32> to vector<8x8xi32>
    %14 = arith.cmpi slt, %11, %13 : vector<8x8xi32>
    %cst = arith.constant -1.000000e+09 : f32
    %15 = vector.broadcast %cst : f32 to vector<8x8xf32>
    %c0_14 = arith.constant 0 : index
    %c0_15 = arith.constant 0 : index
    %16 = vector.load %arg0[%c0_14, %c0_15] : memref<48x128xbf16, #tpu.memory_space<vmem>>, vector<48x128xbf16>
    %c0_16 = arith.constant 0 : index
    %c0_17 = arith.constant 0 : index
    %17 = vector.load %arg4[%c0_16, %c0_17] : memref<128x384xbf16, #tpu.memory_space<vmem>>, vector<128x384xbf16>
    %cst_18 = arith.constant dense<0.000000e+00> : vector<48x384xf32>
    %18 = tpu.matmul %16, %17, %cst_18 {dimension_numbers = #tpu.dot_dimension_numbers<[1], [0], [0], [1], [0, 0, 1, 1], [], []>} : vector<48x128xbf16>, vector<128x384xbf16>, vector<48x384xf32> -> vector<48x384xf32>
    %c0_19 = arith.constant 0 : index
    %c0_20 = arith.constant 0 : index
    %19 = vector.load %arg6[%c0_19, %c0_20] : memref<1x384xf32, #tpu.memory_space<vmem>>, vector<1x384xf32>
    %20 = vector.broadcast %19 : vector<1x384xf32> to vector<48x384xf32>
    %21 = arith.addf %18, %20 : vector<48x384xf32>
    %c0_21 = arith.constant 0 : index
    %c0_22 = arith.constant 0 : index
    %22 = vector.load %arg13[%c0_21, %c0_22] : memref<48x384xf32, #tpu.memory_space<vmem>>, vector<48x384xf32>
    tpu.vector_store %arg13[%c0_21, %c0_22], %21 {strides = array<i32>} : memref<48x384xf32, #tpu.memory_space<vmem>>, vector<48x384xf32>,
    %c0_23 = arith.constant 0 : index
    %c0_24 = arith.constant 0 : index
    %23 = vector.load %arg1[%c0_23, %c0_24] : memref<8x128xf32, #tpu.memory_space<vmem>>, vector<8x128xf32>
    %c0_i32 = arith.constant 0 : i32
    %c8_i32 = arith.constant 8 : i32
    %24 = arith.muli %c0_i32, %c8_i32 : i32
    %25 = tpu.assume_multiple %24, 8 : i32
    %26 = arith.index_cast %25 : i32 to index
    %c0_25 = arith.constant 0 : index
    %27 = vector.load %arg13[%26, %c0_25] : memref<48x384xf32, #tpu.memory_space<vmem>>, vector<8x384xf32>
    %28 = arith.truncf %23 : vector<8x128xf32> to vector<8x128xbf16>
    %cst_26 = arith.constant dense<0.000000e+00> : vector<8x384xf32>
    %29 = tpu.matmul %28, %0, %cst_26 {dimension_numbers = #tpu.dot_dimension_numbers<[1], [0], [0], [1], [0, 0, 1, 1], [], []>} : vector<8x128xbf16>, vector<128x384xbf16>, vector<8x384xf32> -> vector<8x384xf32>
    %30 = vector.extract_strided_slice %27 {offsets = [0, 0], sizes = [8, 128], strides = [1, 1]} : vector<8x384xf32> to vector<8x128xf32>
    %31 = vector.extract_strided_slice %29 {offsets = [0, 0], sizes = [8, 128], strides = [1, 1]} : vector<8x384xf32> to vector<8x128xf32>
    %32 = arith.addf %30, %31 : vector<8x128xf32>
    %33 = arith.negf %32 : vector<8x128xf32>
    %34 = math.exp %33 : vector<8x128xf32>
    %cst_27 = arith.constant 1.000000e+00 : f32
    %35 = vector.broadcast %cst_27 : f32 to vector<8x128xf32>
    %36 = arith.addf %35, %34 : vector<8x128xf32>
    %37 = arith.divf %35, %36 : vector<8x128xf32>
    %38 = vector.extract_strided_slice %27 {offsets = [0, 128], sizes = [8, 128], strides = [1, 1]} : vector<8x384xf32> to vector<8x128xf32>
    %39 = vector.extract_strided_slice %29 {offsets = [0, 128], sizes = [8, 128], strides = [1, 1]} : vector<8x384xf32> to vector<8x128xf32>
    %40 = arith.addf %38, %39 : vector<8x128xf32>
    %41 = arith.negf %40 : vector<8x128xf32>
    %42 = math.exp %41 : vector<8x128xf32>
    %cst_28 = arith.constant 1.000000e+00 : f32
    %43 = vector.broadcast %cst_28 : f32 to vector<8x128xf32>
    %44 = arith.addf %43, %42 : vector<8x128xf32>
    %45 = arith.divf %43, %44 : vector<8x128xf32>
    %46 = vector.extract_strided_slice %27 {offsets = [0, 256], sizes = [8, 128], strides = [1, 1]} : vector<8x384xf32> to vector<8x128xf32>
    %47 = vector.extract_strided_slice %29 {offsets = [0, 256], sizes = [8, 128], strides = [1, 1]} : vector<8x384xf32> to vector<8x128xf32>
    %48 = arith.addf %47, %5 : vector<8x128xf32>
    %49 = arith.mulf %37, %48 : vector<8x128xf32>
    %50 = arith.addf %46, %49 : vector<8x128xf32>
    %51 = math.tanh %50 : vector<8x128xf32>
    %cst_29 = arith.constant 1.000000e+00 : f32
    %52 = vector.broadcast %cst_29 : f32 to vector<8x128xf32>
    %53 = arith.subf %52, %45 : vector<8x128xf32>
    %54 = arith.mulf %53, %51 : vector<8x128xf32>
    %55 = arith.mulf %45, %23 : vector<8x128xf32>
    %56 = arith.addf %54, %55 : vector<8x128xf32>
    %57 = vector.shape_cast %56 : vector<8x128xf32> to vector<1x8x128xf32>
    %58 = vector.broadcast %57 : vector<1x8x128xf32> to vector<8x8x128xf32>
    %59 = arith.mulf %58, %10 : vector<8x8x128xf32>
    %cst_30 = arith.constant dense<0.000000e+00> : vector<8x8xf32>
    %60 = vector.multi_reduction <add>, %59, %cst_30 [2] : vector<8x8x128xf32> to vector<8x8xf32>
    %61 = arith.select %14, %60, %15 : vector<8x8xi1>, vector<8x8xf32>
    %cst_31 = arith.constant dense<0xFF800000> : vector<8xf32>
    %62 = vector.multi_reduction <maximumf>, %61, %cst_31 [0] : vector<8x8xf32> to vector<8xf32>
    %63 = vector.shape_cast %62 : vector<8xf32> to vector<1x8xf32>
    %64 = vector.broadcast %63 : vector<1x8xf32> to vector<8x8xf32>
    %65 = arith.subf %61, %64 : vector<8x8xf32>
    %66 = math.exp %65 : vector<8x8xf32>
    %cst_32 = arith.constant dense<0.000000e+00> : vector<8xf32>
    %67 = vector.multi_reduction <add>, %66, %cst_32 [0] : vector<8x8xf32> to vector<8xf32>
    %68 = vector.shape_cast %67 : vector<8xf32> to vector<1x8xf32>
    %69 = tpu.reciprocal %68 {approx = true} : vector<1x8xf32> -> vector<1x8xf32>
    %70 = vector.broadcast %69 : vector<1x8xf32> to vector<8x8xf32>
    %71 = arith.mulf %66, %70 : vector<8x8xf32>
    %72 = vector.shape_cast %71 : vector<8x8xf32> to vector<8x8x1xf32>
    %73 = vector.broadcast %72 : vector<8x8x1xf32> to vector<8x8x128xf32>
    %74 = arith.mulf %73, %10 : vector<8x8x128xf32>
    %cst_33 = arith.constant dense<0.000000e+00> : vector<8x128xf32>
    %75 = vector.multi_reduction <add>, %74, %cst_33 [0] : vector<8x8x128xf32> to vector<8x128xf32>
    %76 = arith.truncf %56 : vector<8x128xf32> to vector<8x128xbf16>
    %77 = arith.truncf %75 : vector<8x128xf32> to vector<8x128xbf16>
    %cst_34 = arith.constant dense<0.000000e+00> : vector<8x128xf32>
    %78 = tpu.matmul %77, %1, %cst_34 {dimension_numbers = #tpu.dot_dimension_numbers<[1], [0], [0], [1], [0, 0, 1, 1], [], []>} : vector<8x128xbf16>, vector<128x128xbf16>, vector<8x128xf32> -> vector<8x128xf32>
    %cst_35 = arith.constant dense<0.000000e+00> : vector<8x128xf32>
    %79 = tpu.matmul %76, %2, %cst_35 {dimension_numbers = #tpu.dot_dimension_numbers<[1], [0], [0], [1], [0, 0, 1, 1], [], []>} : vector<8x128xbf16>, vector<128x128xbf16>, vector<8x128xf32> -> vector<8x128xf32>
    %80 = arith.addf %78, %79 : vector<8x128xf32>
    %81 = arith.addf %80, %8 : vector<8x128xf32>
    %82 = math.tanh %81 : vector<8x128xf32>
    %83 = arith.truncf %82 : vector<8x128xf32> to vector<8x128xbf16>
    %84 = arith.index_cast %25 : i32 to index
    %c0_36 = arith.constant 0 : index
    %85 = vector.load %arg11[%84, %c0_36] : memref<48x128xbf16, #tpu.memory_space<vmem>>, vector<8x128xbf16>
    tpu.vector_store %arg11[%84, %c0_36], %83 {strides = array<i32>} : memref<48x128xbf16, #tpu.memory_space<vmem>>, vector<8x128xbf16>,
    %c1_i32 = arith.constant 1 : i32
    %c8_i32_37 = arith.constant 8 : i32
    %86 = arith.muli %c1_i32, %c8_i32_37 : i32
    %87 = tpu.assume_multiple %86, 8 : i32
    %88 = arith.index_cast %87 : i32 to index
    %c0_38 = arith.constant 0 : index
    %89 = vector.load %arg13[%88, %c0_38] : memref<48x384xf32, #tpu.memory_space<vmem>>, vector<8x384xf32>
    %90 = arith.truncf %56 : vector<8x128xf32> to vector<8x128xbf16>
    %cst_39 = arith.constant dense<0.000000e+00> : vector<8x384xf32>
    %91 = tpu.matmul %90, %0, %cst_39 {dimension_numbers = #tpu.dot_dimension_numbers<[1], [0], [0], [1], [0, 0, 1, 1], [], []>} : vector<8x128xbf16>, vector<128x384xbf16>, vector<8x384xf32> -> vector<8x384xf32>
    %92 = vector.extract_strided_slice %89 {offsets = [0, 0], sizes = [8, 128], strides = [1, 1]} : vector<8x384xf32> to vector<8x128xf32>
    %93 = vector.extract_strided_slice %91 {offsets = [0, 0], sizes = [8, 128], strides = [1, 1]} : vector<8x384xf32> to vector<8x128xf32>
    %94 = arith.addf %92, %93 : vector<8x128xf32>
    %95 = arith.negf %94 : vector<8x128xf32>
    %96 = math.exp %95 : vector<8x128xf32>
    %cst_40 = arith.constant 1.000000e+00 : f32
    %97 = vector.broadcast %cst_40 : f32 to vector<8x128xf32>
    %98 = arith.addf %97, %96 : vector<8x128xf32>
    %99 = arith.divf %97, %98 : vector<8x128xf32>
    %100 = vector.extract_strided_slice %89 {offsets = [0, 128], sizes = [8, 128], strides = [1, 1]} : vector<8x384xf32> to vector<8x128xf32>
    %101 = vector.extract_strided_slice %91 {offsets = [0, 128], sizes = [8, 128], strides = [1, 1]} : vector<8x384xf32> to vector<8x128xf32>
    %102 = arith.addf %100, %101 : vector<8x128xf32>
    %103 = arith.negf %102 : vector<8x128xf32>
    %104 = math.exp %103 : vector<8x128xf32>
    %cst_41 = arith.constant 1.000000e+00 : f32
    %105 = vector.broadcast %cst_41 : f32 to vector<8x128xf32>
    %106 = arith.addf %105, %104 : vector<8x128xf32>
    %107 = arith.divf %105, %106 : vector<8x128xf32>
    %108 = vector.extract_strided_slice %89 {offsets = [0, 256], sizes = [8, 128], strides = [1, 1]} : vector<8x384xf32> to vector<8x128xf32>
    %109 = vector.extract_strided_slice %91 {offsets = [0, 256], sizes = [8, 128], strides = [1, 1]} : vector<8x384xf32> to vector<8x128xf32>
    %110 = arith.addf %109, %5 : vector<8x128xf32>
    %111 = arith.mulf %99, %110 : vector<8x128xf32>
    %112 = arith.addf %108, %111 : vector<8x128xf32>
    %113 = math.tanh %112 : vector<8x128xf32>
    %cst_42 = arith.constant 1.000000e+00 : f32
    %114 = vector.broadcast %cst_42 : f32 to vector<8x128xf32>
    %115 = arith.subf %114, %107 : vector<8x128xf32>
    %116 = arith.mulf %115, %113 : vector<8x128xf32>
    %117 = arith.mulf %107, %56 : vector<8x128xf32>
    %118 = arith.addf %116, %117 : vector<8x128xf32>
    %119 = vector.shape_cast %118 : vector<8x128xf32> to vector<1x8x128xf32>
    %120 = vector.broadcast %119 : vector<1x8x128xf32> to vector<8x8x128xf32>
    %121 = arith.mulf %120, %10 : vector<8x8x128xf32>
    %cst_43 = arith.constant dense<0.000000e+00> : vector<8x8xf32>
    %122 = vector.multi_reduction <add>, %121, %cst_43 [2] : vector<8x8x128xf32> to vector<8x8xf32>
    %123 = arith.select %14, %122, %15 : vector<8x8xi1>, vector<8x8xf32>
    %cst_44 = arith.constant dense<0xFF800000> : vector<8xf32>
    %124 = vector.multi_reduction <maximumf>, %123, %cst_44 [0] : vector<8x8xf32> to vector<8xf32>
    %125 = vector.shape_cast %124 : vector<8xf32> to vector<1x8xf32>
    %126 = vector.broadcast %125 : vector<1x8xf32> to vector<8x8xf32>
    %127 = arith.subf %123, %126 : vector<8x8xf32>
    %128 = math.exp %127 : vector<8x8xf32>
    %cst_45 = arith.constant dense<0.000000e+00> : vector<8xf32>
    %129 = vector.multi_reduction <add>, %128, %cst_45 [0] : vector<8x8xf32> to vector<8xf32>
    %130 = vector.shape_cast %129 : vector<8xf32> to vector<1x8xf32>
    %131 = tpu.reciprocal %130 {approx = true} : vector<1x8xf32> -> vector<1x8xf32>
    %132 = vector.broadcast %131 : vector<1x8xf32> to vector<8x8xf32>
    %133 = arith.mulf %128, %132 : vector<8x8xf32>
    %134 = vector.shape_cast %133 : vector<8x8xf32> to vector<8x8x1xf32>
    %135 = vector.broadcast %134 : vector<8x8x1xf32> to vector<8x8x128xf32>
    %136 = arith.mulf %135, %10 : vector<8x8x128xf32>
    %cst_46 = arith.constant dense<0.000000e+00> : vector<8x128xf32>
    %137 = vector.multi_reduction <add>, %136, %cst_46 [0] : vector<8x8x128xf32> to vector<8x128xf32>
    %138 = arith.truncf %118 : vector<8x128xf32> to vector<8x128xbf16>
    %139 = arith.truncf %137 : vector<8x128xf32> to vector<8x128xbf16>
    %cst_47 = arith.constant dense<0.000000e+00> : vector<8x128xf32>
    %140 = tpu.matmul %139, %1, %cst_47 {dimension_numbers = #tpu.dot_dimension_numbers<[1], [0], [0], [1], [0, 0, 1, 1], [], []>} : vector<8x128xbf16>, vector<128x128xbf16>, vector<8x128xf32> -> vector<8x128xf32>
    %cst_48 = arith.constant dense<0.000000e+00> : vector<8x128xf32>
    %141 = tpu.matmul %138, %2, %cst_48 {dimension_numbers = #tpu.dot_dimension_numbers<[1], [0], [0], [1], [0, 0, 1, 1], [], []>} : vector<8x128xbf16>, vector<128x128xbf16>, vector<8x128xf32> -> vector<8x128xf32>
    %142 = arith.addf %140, %141 : vector<8x128xf32>
    %143 = arith.addf %142, %8 : vector<8x128xf32>
    %144 = math.tanh %143 : vector<8x128xf32>
    %145 = arith.truncf %144 : vector<8x128xf32> to vector<8x128xbf16>
    %146 = arith.index_cast %87 : i32 to index
    %c0_49 = arith.constant 0 : index
    %147 = vector.load %arg11[%146, %c0_49] : memref<48x128xbf16, #tpu.memory_space<vmem>>, vector<8x128xbf16>
    tpu.vector_store %arg11[%146, %c0_49], %145 {strides = array<i32>} : memref<48x128xbf16, #tpu.memory_space<vmem>>, vector<8x128xbf16>,
    %c2_i32 = arith.constant 2 : i32
    %c8_i32_50 = arith.constant 8 : i32
    %148 = arith.muli %c2_i32, %c8_i32_50 : i32
    %149 = tpu.assume_multiple %148, 8 : i32
    %150 = arith.index_cast %149 : i32 to index
    %c0_51 = arith.constant 0 : index
    %151 = vector.load %arg13[%150, %c0_51] : memref<48x384xf32, #tpu.memory_space<vmem>>, vector<8x384xf32>
    %152 = arith.truncf %118 : vector<8x128xf32> to vector<8x128xbf16>
    %cst_52 = arith.constant dense<0.000000e+00> : vector<8x384xf32>
    %153 = tpu.matmul %152, %0, %cst_52 {dimension_numbers = #tpu.dot_dimension_numbers<[1], [0], [0], [1], [0, 0, 1, 1], [], []>} : vector<8x128xbf16>, vector<128x384xbf16>, vector<8x384xf32> -> vector<8x384xf32>
    %154 = vector.extract_strided_slice %151 {offsets = [0, 0], sizes = [8, 128], strides = [1, 1]} : vector<8x384xf32> to vector<8x128xf32>
    %155 = vector.extract_strided_slice %153 {offsets = [0, 0], sizes = [8, 128], strides = [1, 1]} : vector<8x384xf32> to vector<8x128xf32>
    %156 = arith.addf %154, %155 : vector<8x128xf32>
    %157 = arith.negf %156 : vector<8x128xf32>
    %158 = math.exp %157 : vector<8x128xf32>
    %cst_53 = arith.constant 1.000000e+00 : f32
    %159 = vector.broadcast %cst_53 : f32 to vector<8x128xf32>
    %160 = arith.addf %159, %158 : vector<8x128xf32>
    %161 = arith.divf %159, %160 : vector<8x128xf32>
    %162 = vector.extract_strided_slice %151 {offsets = [0, 128], sizes = [8, 128], strides = [1, 1]} : vector<8x384xf32> to vector<8x128xf32>
    %163 = vector.extract_strided_slice %153 {offsets = [0, 128], sizes = [8, 128], strides = [1, 1]} : vector<8x384xf32> to vector<8x128xf32>
    %164 = arith.addf %162, %163 : vector<8x128xf32>
    %165 = arith.negf %164 : vector<8x128xf32>
    %166 = math.exp %165 : vector<8x128xf32>
    %cst_54 = arith.constant 1.000000e+00 : f32
    %167 = vector.broadcast %cst_54 : f32 to vector<8x128xf32>
    %168 = arith.addf %167, %166 : vector<8x128xf32>
    %169 = arith.divf %167, %168 : vector<8x128xf32>
    %170 = vector.extract_strided_slice %151 {offsets = [0, 256], sizes = [8, 128], strides = [1, 1]} : vector<8x384xf32> to vector<8x128xf32>
    %171 = vector.extract_strided_slice %153 {offsets = [0, 256], sizes = [8, 128], strides = [1, 1]} : vector<8x384xf32> to vector<8x128xf32>
    %172 = arith.addf %171, %5 : vector<8x128xf32>
    %173 = arith.mulf %161, %172 : vector<8x128xf32>
    %174 = arith.addf %170, %173 : vector<8x128xf32>
    %175 = math.tanh %174 : vector<8x128xf32>
    %cst_55 = arith.constant 1.000000e+00 : f32
    %176 = vector.broadcast %cst_55 : f32 to vector<8x128xf32>
    %177 = arith.subf %176, %169 : vector<8x128xf32>
    %178 = arith.mulf %177, %175 : vector<8x128xf32>
    %179 = arith.mulf %169, %118 : vector<8x128xf32>
    %180 = arith.addf %178, %179 : vector<8x128xf32>
    %181 = vector.shape_cast %180 : vector<8x128xf32> to vector<1x8x128xf32>
    %182 = vector.broadcast %181 : vector<1x8x128xf32> to vector<8x8x128xf32>
    %183 = arith.mulf %182, %10 : vector<8x8x128xf32>
    %cst_56 = arith.constant dense<0.000000e+00> : vector<8x8xf32>
    %184 = vector.multi_reduction <add>, %183, %cst_56 [2] : vector<8x8x128xf32> to vector<8x8xf32>
    %185 = arith.select %14, %184, %15 : vector<8x8xi1>, vector<8x8xf32>
    %cst_57 = arith.constant dense<0xFF800000> : vector<8xf32>
    %186 = vector.multi_reduction <maximumf>, %185, %cst_57 [0] : vector<8x8xf32> to vector<8xf32>
    %187 = vector.shape_cast %186 : vector<8xf32> to vector<1x8xf32>
    %188 = vector.broadcast %187 : vector<1x8xf32> to vector<8x8xf32>
    %189 = arith.subf %185, %188 : vector<8x8xf32>
    %190 = math.exp %189 : vector<8x8xf32>
    %cst_58 = arith.constant dense<0.000000e+00> : vector<8xf32>
    %191 = vector.multi_reduction <add>, %190, %cst_58 [0] : vector<8x8xf32> to vector<8xf32>
    %192 = vector.shape_cast %191 : vector<8xf32> to vector<1x8xf32>
    %193 = tpu.reciprocal %192 {approx = true} : vector<1x8xf32> -> vector<1x8xf32>
    %194 = vector.broadcast %193 : vector<1x8xf32> to vector<8x8xf32>
    %195 = arith.mulf %190, %194 : vector<8x8xf32>
    %196 = vector.shape_cast %195 : vector<8x8xf32> to vector<8x8x1xf32>
    %197 = vector.broadcast %196 : vector<8x8x1xf32> to vector<8x8x128xf32>
    %198 = arith.mulf %197, %10 : vector<8x8x128xf32>
    %cst_59 = arith.constant dense<0.000000e+00> : vector<8x128xf32>
    %199 = vector.multi_reduction <add>, %198, %cst_59 [0] : vector<8x8x128xf32> to vector<8x128xf32>
    %200 = arith.truncf %180 : vector<8x128xf32> to vector<8x128xbf16>
    %201 = arith.truncf %199 : vector<8x128xf32> to vector<8x128xbf16>
    %cst_60 = arith.constant dense<0.000000e+00> : vector<8x128xf32>
    %202 = tpu.matmul %201, %1, %cst_60 {dimension_numbers = #tpu.dot_dimension_numbers<[1], [0], [0], [1], [0, 0, 1, 1], [], []>} : vector<8x128xbf16>, vector<128x128xbf16>, vector<8x128xf32> -> vector<8x128xf32>
    %cst_61 = arith.constant dense<0.000000e+00> : vector<8x128xf32>
    %203 = tpu.matmul %200, %2, %cst_61 {dimension_numbers = #tpu.dot_dimension_numbers<[1], [0], [0], [1], [0, 0, 1, 1], [], []>} : vector<8x128xbf16>, vector<128x128xbf16>, vector<8x128xf32> -> vector<8x128xf32>
    %204 = arith.addf %202, %203 : vector<8x128xf32>
    %205 = arith.addf %204, %8 : vector<8x128xf32>
    %206 = math.tanh %205 : vector<8x128xf32>
    %207 = arith.truncf %206 : vector<8x128xf32> to vector<8x128xbf16>
    %208 = arith.index_cast %149 : i32 to index
    %c0_62 = arith.constant 0 : index
    %209 = vector.load %arg11[%208, %c0_62] : memref<48x128xbf16, #tpu.memory_space<vmem>>, vector<8x128xbf16>
    tpu.vector_store %arg11[%208, %c0_62], %207 {strides = array<i32>} : memref<48x128xbf16, #tpu.memory_space<vmem>>, vector<8x128xbf16>,
    %c3_i32 = arith.constant 3 : i32
    %c8_i32_63 = arith.constant 8 : i32
    %210 = arith.muli %c3_i32, %c8_i32_63 : i32
    %211 = tpu.assume_multiple %210, 8 : i32
    %212 = arith.index_cast %211 : i32 to index
    %c0_64 = arith.constant 0 : index
    %213 = vector.load %arg13[%212, %c0_64] : memref<48x384xf32, #tpu.memory_space<vmem>>, vector<8x384xf32>
    %214 = arith.truncf %180 : vector<8x128xf32> to vector<8x128xbf16>
    %cst_65 = arith.constant dense<0.000000e+00> : vector<8x384xf32>
    %215 = tpu.matmul %214, %0, %cst_65 {dimension_numbers = #tpu.dot_dimension_numbers<[1], [0], [0], [1], [0, 0, 1, 1], [], []>} : vector<8x128xbf16>, vector<128x384xbf16>, vector<8x384xf32> -> vector<8x384xf32>
    %216 = vector.extract_strided_slice %213 {offsets = [0, 0], sizes = [8, 128], strides = [1, 1]} : vector<8x384xf32> to vector<8x128xf32>
    %217 = vector.extract_strided_slice %215 {offsets = [0, 0], sizes = [8, 128], strides = [1, 1]} : vector<8x384xf32> to vector<8x128xf32>
    %218 = arith.addf %216, %217 : vector<8x128xf32>
    %219 = arith.negf %218 : vector<8x128xf32>
    %220 = math.exp %219 : vector<8x128xf32>
    %cst_66 = arith.constant 1.000000e+00 : f32
    %221 = vector.broadcast %cst_66 : f32 to vector<8x128xf32>
    %222 = arith.addf %221, %220 : vector<8x128xf32>
    %223 = arith.divf %221, %222 : vector<8x128xf32>
    %224 = vector.extract_strided_slice %213 {offsets = [0, 128], sizes = [8, 128], strides = [1, 1]} : vector<8x384xf32> to vector<8x128xf32>
    %225 = vector.extract_strided_slice %215 {offsets = [0, 128], sizes = [8, 128], strides = [1, 1]} : vector<8x384xf32> to vector<8x128xf32>
    %226 = arith.addf %224, %225 : vector<8x128xf32>
    %227 = arith.negf %226 : vector<8x128xf32>
    %228 = math.exp %227 : vector<8x128xf32>
    %cst_67 = arith.constant 1.000000e+00 : f32
    %229 = vector.broadcast %cst_67 : f32 to vector<8x128xf32>
    %230 = arith.addf %229, %228 : vector<8x128xf32>
    %231 = arith.divf %229, %230 : vector<8x128xf32>
    %232 = vector.extract_strided_slice %213 {offsets = [0, 256], sizes = [8, 128], strides = [1, 1]} : vector<8x384xf32> to vector<8x128xf32>
    %233 = vector.extract_strided_slice %215 {offsets = [0, 256], sizes = [8, 128], strides = [1, 1]} : vector<8x384xf32> to vector<8x128xf32>
    %234 = arith.addf %233, %5 : vector<8x128xf32>
    %235 = arith.mulf %223, %234 : vector<8x128xf32>
    %236 = arith.addf %232, %235 : vector<8x128xf32>
    %237 = math.tanh %236 : vector<8x128xf32>
    %cst_68 = arith.constant 1.000000e+00 : f32
    %238 = vector.broadcast %cst_68 : f32 to vector<8x128xf32>
    %239 = arith.subf %238, %231 : vector<8x128xf32>
    %240 = arith.mulf %239, %237 : vector<8x128xf32>
    %241 = arith.mulf %231, %180 : vector<8x128xf32>
    %242 = arith.addf %240, %241 : vector<8x128xf32>
    %243 = vector.shape_cast %242 : vector<8x128xf32> to vector<1x8x128xf32>
    %244 = vector.broadcast %243 : vector<1x8x128xf32> to vector<8x8x128xf32>
    %245 = arith.mulf %244, %10 : vector<8x8x128xf32>
    %cst_69 = arith.constant dense<0.000000e+00> : vector<8x8xf32>
    %246 = vector.multi_reduction <add>, %245, %cst_69 [2] : vector<8x8x128xf32> to vector<8x8xf32>
    %247 = arith.select %14, %246, %15 : vector<8x8xi1>, vector<8x8xf32>
    %cst_70 = arith.constant dense<0xFF800000> : vector<8xf32>
    %248 = vector.multi_reduction <maximumf>, %247, %cst_70 [0] : vector<8x8xf32> to vector<8xf32>
    %249 = vector.shape_cast %248 : vector<8xf32> to vector<1x8xf32>
    %250 = vector.broadcast %249 : vector<1x8xf32> to vector<8x8xf32>
    %251 = arith.subf %247, %250 : vector<8x8xf32>
    %252 = math.exp %251 : vector<8x8xf32>
    %cst_71 = arith.constant dense<0.000000e+00> : vector<8xf32>
    %253 = vector.multi_reduction <add>, %252, %cst_71 [0] : vector<8x8xf32> to vector<8xf32>
    %254 = vector.shape_cast %253 : vector<8xf32> to vector<1x8xf32>
    %255 = tpu.reciprocal %254 {approx = true} : vector<1x8xf32> -> vector<1x8xf32>
    %256 = vector.broadcast %255 : vector<1x8xf32> to vector<8x8xf32>
    %257 = arith.mulf %252, %256 : vector<8x8xf32>
    %258 = vector.shape_cast %257 : vector<8x8xf32> to vector<8x8x1xf32>
    %259 = vector.broadcast %258 : vector<8x8x1xf32> to vector<8x8x128xf32>
    %260 = arith.mulf %259, %10 : vector<8x8x128xf32>
    %cst_72 = arith.constant dense<0.000000e+00> : vector<8x128xf32>
    %261 = vector.multi_reduction <add>, %260, %cst_72 [0] : vector<8x8x128xf32> to vector<8x128xf32>
    %262 = arith.truncf %242 : vector<8x128xf32> to vector<8x128xbf16>
    %263 = arith.truncf %261 : vector<8x128xf32> to vector<8x128xbf16>
    %cst_73 = arith.constant dense<0.000000e+00> : vector<8x128xf32>
    %264 = tpu.matmul %263, %1, %cst_73 {dimension_numbers = #tpu.dot_dimension_numbers<[1], [0], [0], [1], [0, 0, 1, 1], [], []>} : vector<8x128xbf16>, vector<128x128xbf16>, vector<8x128xf32> -> vector<8x128xf32>
    %cst_74 = arith.constant dense<0.000000e+00> : vector<8x128xf32>
    %265 = tpu.matmul %262, %2, %cst_74 {dimension_numbers = #tpu.dot_dimension_numbers<[1], [0], [0], [1], [0, 0, 1, 1], [], []>} : vector<8x128xbf16>, vector<128x128xbf16>, vector<8x128xf32> -> vector<8x128xf32>
    %266 = arith.addf %264, %265 : vector<8x128xf32>
    %267 = arith.addf %266, %8 : vector<8x128xf32>
    %268 = math.tanh %267 : vector<8x128xf32>
    %269 = arith.truncf %268 : vector<8x128xf32> to vector<8x128xbf16>
    %270 = arith.index_cast %211 : i32 to index
    %c0_75 = arith.constant 0 : index
    %271 = vector.load %arg11[%270, %c0_75] : memref<48x128xbf16, #tpu.memory_space<vmem>>, vector<8x128xbf16>
    tpu.vector_store %arg11[%270, %c0_75], %269 {strides = array<i32>} : memref<48x128xbf16, #tpu.memory_space<vmem>>, vector<8x128xbf16>,
    %c4_i32 = arith.constant 4 : i32
    %c8_i32_76 = arith.constant 8 : i32
    %272 = arith.muli %c4_i32, %c8_i32_76 : i32
    %273 = tpu.assume_multiple %272, 8 : i32
    %274 = arith.index_cast %273 : i32 to index
    %c0_77 = arith.constant 0 : index
    %275 = vector.load %arg13[%274, %c0_77] : memref<48x384xf32, #tpu.memory_space<vmem>>, vector<8x384xf32>
    %276 = arith.truncf %242 : vector<8x128xf32> to vector<8x128xbf16>
    %cst_78 = arith.constant dense<0.000000e+00> : vector<8x384xf32>
    %277 = tpu.matmul %276, %0, %cst_78 {dimension_numbers = #tpu.dot_dimension_numbers<[1], [0], [0], [1], [0, 0, 1, 1], [], []>} : vector<8x128xbf16>, vector<128x384xbf16>, vector<8x384xf32> -> vector<8x384xf32>
    %278 = vector.extract_strided_slice %275 {offsets = [0, 0], sizes = [8, 128], strides = [1, 1]} : vector<8x384xf32> to vector<8x128xf32>
    %279 = vector.extract_strided_slice %277 {offsets = [0, 0], sizes = [8, 128], strides = [1, 1]} : vector<8x384xf32> to vector<8x128xf32>
    %280 = arith.addf %278, %279 : vector<8x128xf32>
    %281 = arith.negf %280 : vector<8x128xf32>
    %282 = math.exp %281 : vector<8x128xf32>
    %cst_79 = arith.constant 1.000000e+00 : f32
    %283 = vector.broadcast %cst_79 : f32 to vector<8x128xf32>
    %284 = arith.addf %283, %282 : vector<8x128xf32>
    %285 = arith.divf %283, %284 : vector<8x128xf32>
    %286 = vector.extract_strided_slice %275 {offsets = [0, 128], sizes = [8, 128], strides = [1, 1]} : vector<8x384xf32> to vector<8x128xf32>
    %287 = vector.extract_strided_slice %277 {offsets = [0, 128], sizes = [8, 128], strides = [1, 1]} : vector<8x384xf32> to vector<8x128xf32>
    %288 = arith.addf %286, %287 : vector<8x128xf32>
    %289 = arith.negf %288 : vector<8x128xf32>
    %290 = math.exp %289 : vector<8x128xf32>
    %cst_80 = arith.constant 1.000000e+00 : f32
    %291 = vector.broadcast %cst_80 : f32 to vector<8x128xf32>
    %292 = arith.addf %291, %290 : vector<8x128xf32>
    %293 = arith.divf %291, %292 : vector<8x128xf32>
    %294 = vector.extract_strided_slice %275 {offsets = [0, 256], sizes = [8, 128], strides = [1, 1]} : vector<8x384xf32> to vector<8x128xf32>
    %295 = vector.extract_strided_slice %277 {offsets = [0, 256], sizes = [8, 128], strides = [1, 1]} : vector<8x384xf32> to vector<8x128xf32>
    %296 = arith.addf %295, %5 : vector<8x128xf32>
    %297 = arith.mulf %285, %296 : vector<8x128xf32>
    %298 = arith.addf %294, %297 : vector<8x128xf32>
    %299 = math.tanh %298 : vector<8x128xf32>
    %cst_81 = arith.constant 1.000000e+00 : f32
    %300 = vector.broadcast %cst_81 : f32 to vector<8x128xf32>
    %301 = arith.subf %300, %293 : vector<8x128xf32>
    %302 = arith.mulf %301, %299 : vector<8x128xf32>
    %303 = arith.mulf %293, %242 : vector<8x128xf32>
    %304 = arith.addf %302, %303 : vector<8x128xf32>
    %305 = vector.shape_cast %304 : vector<8x128xf32> to vector<1x8x128xf32>
    %306 = vector.broadcast %305 : vector<1x8x128xf32> to vector<8x8x128xf32>
    %307 = arith.mulf %306, %10 : vector<8x8x128xf32>
    %cst_82 = arith.constant dense<0.000000e+00> : vector<8x8xf32>
    %308 = vector.multi_reduction <add>, %307, %cst_82 [2] : vector<8x8x128xf32> to vector<8x8xf32>
    %309 = arith.select %14, %308, %15 : vector<8x8xi1>, vector<8x8xf32>
    %cst_83 = arith.constant dense<0xFF800000> : vector<8xf32>
    %310 = vector.multi_reduction <maximumf>, %309, %cst_83 [0] : vector<8x8xf32> to vector<8xf32>
    %311 = vector.shape_cast %310 : vector<8xf32> to vector<1x8xf32>
    %312 = vector.broadcast %311 : vector<1x8xf32> to vector<8x8xf32>
    %313 = arith.subf %309, %312 : vector<8x8xf32>
    %314 = math.exp %313 : vector<8x8xf32>
    %cst_84 = arith.constant dense<0.000000e+00> : vector<8xf32>
    %315 = vector.multi_reduction <add>, %314, %cst_84 [0] : vector<8x8xf32> to vector<8xf32>
    %316 = vector.shape_cast %315 : vector<8xf32> to vector<1x8xf32>
    %317 = tpu.reciprocal %316 {approx = true} : vector<1x8xf32> -> vector<1x8xf32>
    %318 = vector.broadcast %317 : vector<1x8xf32> to vector<8x8xf32>
    %319 = arith.mulf %314, %318 : vector<8x8xf32>
    %320 = vector.shape_cast %319 : vector<8x8xf32> to vector<8x8x1xf32>
    %321 = vector.broadcast %320 : vector<8x8x1xf32> to vector<8x8x128xf32>
    %322 = arith.mulf %321, %10 : vector<8x8x128xf32>
    %cst_85 = arith.constant dense<0.000000e+00> : vector<8x128xf32>
    %323 = vector.multi_reduction <add>, %322, %cst_85 [0] : vector<8x8x128xf32> to vector<8x128xf32>
    %324 = arith.truncf %304 : vector<8x128xf32> to vector<8x128xbf16>
    %325 = arith.truncf %323 : vector<8x128xf32> to vector<8x128xbf16>
    %cst_86 = arith.constant dense<0.000000e+00> : vector<8x128xf32>
    %326 = tpu.matmul %325, %1, %cst_86 {dimension_numbers = #tpu.dot_dimension_numbers<[1], [0], [0], [1], [0, 0, 1, 1], [], []>} : vector<8x128xbf16>, vector<128x128xbf16>, vector<8x128xf32> -> vector<8x128xf32>
    %cst_87 = arith.constant dense<0.000000e+00> : vector<8x128xf32>
    %327 = tpu.matmul %324, %2, %cst_87 {dimension_numbers = #tpu.dot_dimension_numbers<[1], [0], [0], [1], [0, 0, 1, 1], [], []>} : vector<8x128xbf16>, vector<128x128xbf16>, vector<8x128xf32> -> vector<8x128xf32>
    %328 = arith.addf %326, %327 : vector<8x128xf32>
    %329 = arith.addf %328, %8 : vector<8x128xf32>
    %330 = math.tanh %329 : vector<8x128xf32>
    %331 = arith.truncf %330 : vector<8x128xf32> to vector<8x128xbf16>
    %332 = arith.index_cast %273 : i32 to index
    %c0_88 = arith.constant 0 : index
    %333 = vector.load %arg11[%332, %c0_88] : memref<48x128xbf16, #tpu.memory_space<vmem>>, vector<8x128xbf16>
    tpu.vector_store %arg11[%332, %c0_88], %331 {strides = array<i32>} : memref<48x128xbf16, #tpu.memory_space<vmem>>, vector<8x128xbf16>,
    %c5_i32 = arith.constant 5 : i32
    %c8_i32_89 = arith.constant 8 : i32
    %334 = arith.muli %c5_i32, %c8_i32_89 : i32
    %335 = tpu.assume_multiple %334, 8 : i32
    %336 = arith.index_cast %335 : i32 to index
    %c0_90 = arith.constant 0 : index
    %337 = vector.load %arg13[%336, %c0_90] : memref<48x384xf32, #tpu.memory_space<vmem>>, vector<8x384xf32>
    %338 = arith.truncf %304 : vector<8x128xf32> to vector<8x128xbf16>
    %cst_91 = arith.constant dense<0.000000e+00> : vector<8x384xf32>
    %339 = tpu.matmul %338, %0, %cst_91 {dimension_numbers = #tpu.dot_dimension_numbers<[1], [0], [0], [1], [0, 0, 1, 1], [], []>} : vector<8x128xbf16>, vector<128x384xbf16>, vector<8x384xf32> -> vector<8x384xf32>
    %340 = vector.extract_strided_slice %337 {offsets = [0, 0], sizes = [8, 128], strides = [1, 1]} : vector<8x384xf32> to vector<8x128xf32>
    %341 = vector.extract_strided_slice %339 {offsets = [0, 0], sizes = [8, 128], strides = [1, 1]} : vector<8x384xf32> to vector<8x128xf32>
    %342 = arith.addf %340, %341 : vector<8x128xf32>
    %343 = arith.negf %342 : vector<8x128xf32>
    %344 = math.exp %343 : vector<8x128xf32>
    %cst_92 = arith.constant 1.000000e+00 : f32
    %345 = vector.broadcast %cst_92 : f32 to vector<8x128xf32>
    %346 = arith.addf %345, %344 : vector<8x128xf32>
    %347 = arith.divf %345, %346 : vector<8x128xf32>
    %348 = vector.extract_strided_slice %337 {offsets = [0, 128], sizes = [8, 128], strides = [1, 1]} : vector<8x384xf32> to vector<8x128xf32>
    %349 = vector.extract_strided_slice %339 {offsets = [0, 128], sizes = [8, 128], strides = [1, 1]} : vector<8x384xf32> to vector<8x128xf32>
    %350 = arith.addf %348, %349 : vector<8x128xf32>
    %351 = arith.negf %350 : vector<8x128xf32>
    %352 = math.exp %351 : vector<8x128xf32>
    %cst_93 = arith.constant 1.000000e+00 : f32
    %353 = vector.broadcast %cst_93 : f32 to vector<8x128xf32>
    %354 = arith.addf %353, %352 : vector<8x128xf32>
    %355 = arith.divf %353, %354 : vector<8x128xf32>
    %356 = vector.extract_strided_slice %337 {offsets = [0, 256], sizes = [8, 128], strides = [1, 1]} : vector<8x384xf32> to vector<8x128xf32>
    %357 = vector.extract_strided_slice %339 {offsets = [0, 256], sizes = [8, 128], strides = [1, 1]} : vector<8x384xf32> to vector<8x128xf32>
    %358 = arith.addf %357, %5 : vector<8x128xf32>
    %359 = arith.mulf %347, %358 : vector<8x128xf32>
    %360 = arith.addf %356, %359 : vector<8x128xf32>
    %361 = math.tanh %360 : vector<8x128xf32>
    %cst_94 = arith.constant 1.000000e+00 : f32
    %362 = vector.broadcast %cst_94 : f32 to vector<8x128xf32>
    %363 = arith.subf %362, %355 : vector<8x128xf32>
    %364 = arith.mulf %363, %361 : vector<8x128xf32>
    %365 = arith.mulf %355, %304 : vector<8x128xf32>
    %366 = arith.addf %364, %365 : vector<8x128xf32>
    %367 = vector.shape_cast %366 : vector<8x128xf32> to vector<1x8x128xf32>
    %368 = vector.broadcast %367 : vector<1x8x128xf32> to vector<8x8x128xf32>
    %369 = arith.mulf %368, %10 : vector<8x8x128xf32>
    %cst_95 = arith.constant dense<0.000000e+00> : vector<8x8xf32>
    %370 = vector.multi_reduction <add>, %369, %cst_95 [2] : vector<8x8x128xf32> to vector<8x8xf32>
    %371 = arith.select %14, %370, %15 : vector<8x8xi1>, vector<8x8xf32>
    %cst_96 = arith.constant dense<0xFF800000> : vector<8xf32>
    %372 = vector.multi_reduction <maximumf>, %371, %cst_96 [0] : vector<8x8xf32> to vector<8xf32>
    %373 = vector.shape_cast %372 : vector<8xf32> to vector<1x8xf32>
    %374 = vector.broadcast %373 : vector<1x8xf32> to vector<8x8xf32>
    %375 = arith.subf %371, %374 : vector<8x8xf32>
    %376 = math.exp %375 : vector<8x8xf32>
    %cst_97 = arith.constant dense<0.000000e+00> : vector<8xf32>
    %377 = vector.multi_reduction <add>, %376, %cst_97 [0] : vector<8x8xf32> to vector<8xf32>
    %378 = vector.shape_cast %377 : vector<8xf32> to vector<1x8xf32>
    %379 = tpu.reciprocal %378 {approx = true} : vector<1x8xf32> -> vector<1x8xf32>
    %380 = vector.broadcast %379 : vector<1x8xf32> to vector<8x8xf32>
    %381 = arith.mulf %376, %380 : vector<8x8xf32>
    %382 = vector.shape_cast %381 : vector<8x8xf32> to vector<8x8x1xf32>
    %383 = vector.broadcast %382 : vector<8x8x1xf32> to vector<8x8x128xf32>
    %384 = arith.mulf %383, %10 : vector<8x8x128xf32>
    %cst_98 = arith.constant dense<0.000000e+00> : vector<8x128xf32>
    %385 = vector.multi_reduction <add>, %384, %cst_98 [0] : vector<8x8x128xf32> to vector<8x128xf32>
    %386 = arith.truncf %366 : vector<8x128xf32> to vector<8x128xbf16>
    %387 = arith.truncf %385 : vector<8x128xf32> to vector<8x128xbf16>
    %cst_99 = arith.constant dense<0.000000e+00> : vector<8x128xf32>
    %388 = tpu.matmul %387, %1, %cst_99 {dimension_numbers = #tpu.dot_dimension_numbers<[1], [0], [0], [1], [0, 0, 1, 1], [], []>} : vector<8x128xbf16>, vector<128x128xbf16>, vector<8x128xf32> -> vector<8x128xf32>
    %cst_100 = arith.constant dense<0.000000e+00> : vector<8x128xf32>
    %389 = tpu.matmul %386, %2, %cst_100 {dimension_numbers = #tpu.dot_dimension_numbers<[1], [0], [0], [1], [0, 0, 1, 1], [], []>} : vector<8x128xbf16>, vector<128x128xbf16>, vector<8x128xf32> -> vector<8x128xf32>
    %390 = arith.addf %388, %389 : vector<8x128xf32>
    %391 = arith.addf %390, %8 : vector<8x128xf32>
    %392 = math.tanh %391 : vector<8x128xf32>
    %393 = arith.truncf %392 : vector<8x128xf32> to vector<8x128xbf16>
    %394 = arith.index_cast %335 : i32 to index
    %c0_101 = arith.constant 0 : index
    %395 = vector.load %arg11[%394, %c0_101] : memref<48x128xbf16, #tpu.memory_space<vmem>>, vector<8x128xbf16>
    tpu.vector_store %arg11[%394, %c0_101], %393 {strides = array<i32>} : memref<48x128xbf16, #tpu.memory_space<vmem>>, vector<8x128xbf16>,
    %c6_i32 = arith.constant 6 : i32
    %c0_102 = arith.constant 0 : index
    %c0_103 = arith.constant 0 : index
    %396 = vector.load %arg12[%c0_102, %c0_103] : memref<8x128xf32, #tpu.memory_space<vmem>>, vector<8x128xf32>
    tpu.vector_store %arg12[%c0_102, %c0_103], %366 {strides = array<i32>} : memref<8x128xf32, #tpu.memory_space<vmem>>, vector<8x128xf32>,
    return
  }
}

</mosaic_0001>

<llo_original>
// kernel: seq2seq_forward.5
$region0: #{seq2seq_forward.5}
  #allocation0 [shape = 'u32[]', space=smem, size = 0x4, offset = 0x4, fixed_abs, tag = 'smem constant byte address 0x4 - core index']
  #allocation1 [shape = 'u32[72,128]{1,0:T(1,128)}', space=vmem, size = 0x9000, scoped, tag = 'internal scratch']
  %s0 = inlined_call_operand.vmem [shape: bf16[48,128], index: 0, kind: input, shape index: {}]
  %s1 = inlined_call_operand.vmem [shape: bf16[256,128], index: 1, kind: input, shape index: {}]
  %s2 = inlined_call_operand.vmem [shape: f32[1,256], index: 2, kind: input, shape index: {}]
  %s3 = inlined_call_operand.hbm [shape: f32[48,256], index: 3, kind: output, shape index: {}]
  %s4 = sld [smem:[#allocation0]]
  $region22: #{seq2seq_forward.5} parent=0
    _
  %s6 = ssub.s32 1, %s4
  %s7 = scalar_select 0, %s6, %s4
  $region1: #{seq2seq_forward.5} parent=0
    #allocation2 [shape = 'u8[49152]{0}', space=vmem, size = 0xc000, scoped, tag = 'output window, operand 0, single buffered']
    #allocation3 [shape = 's32[1]{0}', space=sflag, size = 0x4, scoped, tag = 'scoped memory for seq2seq_forward.5']
    %8 = vsyncpa [#allocation3], 0
    // Predicated region
    $region2: #{seq2seq_forward.5} parent=1 // pred_check
      _
    $region3: #{seq2seq_forward.5} parent=1 // pred_check_branch
      %10 = sbr.rel (0) target = $region5
    $region4: #{seq2seq_forward.5} parent=1 // pred_region
      _
    $region5: #{seq2seq_forward.5} parent=1 // pred_fallthru
      _
    // Predicated region
    $region6: #{seq2seq_forward.5} parent=1 // pred_check
      _
    $region7: #{seq2seq_forward.5} parent=1 // pred_check_branch
      %12 = sbr.rel (0) target = $region9
    $region8: #{seq2seq_forward.5} parent=1 // pred_region
      _
    $region9: #{seq2seq_forward.5} parent=1 // pred_fallthru
      _
    // Predicated region
    $region10: #{seq2seq_forward.5} parent=1 // pred_check
      _
    $region11: #{seq2seq_forward.5} parent=1 // pred_check_branch
      %14 = sbr.rel (0) target = $region13
    $region12: #{seq2seq_forward.5} parent=1 // pred_region
      _
    $region13: #{seq2seq_forward.5} parent=1 // pred_fallthru
      _
    %v15 = vld [vmem:[%s0] sm:$0xf]
    %v16 = vld [vmem:[%s0 + $0x4] sm:$0xf]
    %v17 = vld [vmem:[%s0 + $0x8] sm:$0xf]
    %v18 = vld [vmem:[%s0 + $0xc] sm:$0xf]
    %v19 = vld [vmem:[%s0 + $0x10] sm:$0xf]
    %v20 = vld [vmem:[%s0 + $0x14] sm:$0xf]
    %v21 = vld [vmem:[%s1] sm:$0xf]
    %v22 = vld [vmem:[%s1 + $0x4] sm:$0xf]
    %v23 = vld [vmem:[%s1 + $0x8] sm:$0xf]
    %v24 = vld [vmem:[%s1 + $0xc] sm:$0xf]
    %v25 = vld [vmem:[%s1 + $0x10] sm:$0xf]
    %v26 = vld [vmem:[%s1 + $0x14] sm:$0xf]
    %v27 = vld [vmem:[%s1 + $0x18] sm:$0xf]
    %v28 = vld [vmem:[%s1 + $0x1c] sm:$0xf]
    %v29 = vld [vmem:[%s1 + $0x20] sm:$0xf]
    %v30 = vld [vmem:[%s1 + $0x24] sm:$0xf]
    %v31 = vld [vmem:[%s1 + $0x28] sm:$0xf]
    %v32 = vld [vmem:[%s1 + $0x2c] sm:$0xf]
    %v33 = vld [vmem:[%s1 + $0x30] sm:$0xf]
    %v34 = vld [vmem:[%s1 + $0x34] sm:$0xf]
    %v35 = vld [vmem:[%s1 + $0x38] sm:$0xf]
    %v36 = vld [vmem:[%s1 + $0x3c] sm:$0xf]
    %v37 = vld [vmem:[%s1 + $0x40] sm:$0xf]
    %v38 = vld [vmem:[%s1 + $0x44] sm:$0xf]
    %v39 = vld [vmem:[%s1 + $0x48] sm:$0xf]
    %v40 = vld [vmem:[%s1 + $0x4c] sm:$0xf]
    %v41 = vld [vmem:[%s1 + $0x50] sm:$0xf]
    %v42 = vld [vmem:[%s1 + $0x54] sm:$0xf]
    %v43 = vld [vmem:[%s1 + $0x58] sm:$0xf]
    %v44 = vld [vmem:[%s1 + $0x5c] sm:$0xf]
    %v45 = vld [vmem:[%s1 + $0x60] sm:$0xf]
    %v46 = vld [vmem:[%s1 + $0x64] sm:$0xf]
    %v47 = vld [vmem:[%s1 + $0x68] sm:$0xf]
    %v48 = vld [vmem:[%s1 + $0x6c] sm:$0xf]
    %v49 = vld [vmem:[%s1 + $0x70] sm:$0xf]
    %v50 = vld [vmem:[%s1 + $0x74] sm:$0xf]
    %v51 = vld [vmem:[%s1 + $0x78] sm:$0xf]
    %v52 = vld [vmem:[%s1 + $0x7c] sm:$0xf]
    %v53 = vld [vmem:[%s2] sm:$0x3]
    %v55 = vperm.slane %v53, 0
    %v56 = vperm.slane %v53, 1
    %v65 = vunpack.c.l.b16 %v15
    %v66 = vunpack.c.l.b16 %v16
    %v67 = vunpack.c.l.b16 %v17
    %v68 = vunpack.c.l.b16 %v18
    %v69 = vunpack.c.l.b16 %v19
    %v70 = vunpack.c.l.b16 %v20
    %v71 = vpack.c.b16 %v66, %v65
    %v72 = vpack.c.b16 %v68, %v67
    %v73 = vpack.c.b16 %v70, %v69
    %v109 = vunpack.c.l.b16 %v21
    %v110 = vunpack.c.l.b16 %v22
    %v111 = vunpack.c.l.b16 %v23
    %v112 = vunpack.c.l.b16 %v24
    %v113 = vunpack.c.l.b16 %v25
    %v114 = vunpack.c.l.b16 %v26
    %v115 = vunpack.c.l.b16 %v27
    %v116 = vunpack.c.l.b16 %v28
    %v117 = vunpack.c.l.b16 %v29
    %v118 = vunpack.c.l.b16 %v30
    %v119 = vunpack.c.l.b16 %v31
    %v120 = vunpack.c.l.b16 %v32
    %v121 = vunpack.c.l.b16 %v33
    %v122 = vunpack.c.l.b16 %v34
    %v123 = vunpack.c.l.b16 %v35
    %v124 = vunpack.c.l.b16 %v36
    %v125 = vunpack.c.l.b16 %v37
    %v126 = vunpack.c.l.b16 %v38
    %v127 = vunpack.c.l.b16 %v39
    %v128 = vunpack.c.l.b16 %v40
    %v129 = vunpack.c.l.b16 %v41
    %v130 = vunpack.c.l.b16 %v42
    %v131 = vunpack.c.l.b16 %v43
    %v132 = vunpack.c.l.b16 %v44
    %v133 = vunpack.c.l.b16 %v45
    %v134 = vunpack.c.l.b16 %v46
    %v135 = vunpack.c.l.b16 %v47
    %v136 = vunpack.c.l.b16 %v48
    %v137 = vunpack.c.l.b16 %v49
    %v138 = vunpack.c.l.b16 %v50
    %v139 = vunpack.c.l.b16 %v51
    %v140 = vunpack.c.l.b16 %v52
    %v141 = vpack.c.b16 %v110, %v109
    %v142 = vpack.c.b16 %v112, %v111
    %v143 = vpack.c.b16 %v114, %v113
    %v144 = vpack.c.b16 %v116, %v115
    %v145 = vpack.c.b16 %v118, %v117
    %v146 = vpack.c.b16 %v120, %v119
    %v147 = vpack.c.b16 %v122, %v121
    %v148 = vpack.c.b16 %v124, %v123
    %v149 = vpack.c.b16 %v126, %v125
    %v150 = vpack.c.b16 %v128, %v127
    %v151 = vpack.c.b16 %v130, %v129
    %v152 = vpack.c.b16 %v132, %v131
    %v153 = vpack.c.b16 %v134, %v133
    %v154 = vpack.c.b16 %v136, %v135
    %v155 = vpack.c.b16 %v138, %v137
    %v156 = vpack.c.b16 %v140, %v139
    %173 = vmatpush.bf16.xpose.msra.mxu0 %v148
    %174 = vmatpush.bf16.xpose.msra.mxu0 %v147
    %175 = vmatpush.bf16.xpose.msra.mxu0 %v146
    %176 = vmatpush.bf16.xpose.msra.mxu0 %v145
    %177 = vmatpush.bf16.xpose.msra.mxu0 %v144
    %178 = vmatpush.bf16.xpose.msra.mxu0 %v143
    %179 = vmatpush.bf16.xpose.msra.mxu0 %v142
    %180 = vmatpush.bf16.xpose.msra.mxu0 %v141
    %181 = vmatmul.bf16.gmra.mxu0 %v71
    %v182 = vpop.f32.mrf.mxu0
    %v183 = vadd.f32 %v55, %v182
    %v184 = vpop.f32.mrf.mxu0
    %v185 = vadd.f32 %v55, %v184
    %186 = vmatmul.bf16.gmra.mxu0 %v72
    %v187 = vpop.f32.mrf.mxu0
    %v188 = vadd.f32 %v55, %v187
    %v189 = vpop.f32.mrf.mxu0
    %v190 = vadd.f32 %v55, %v189
    %191 = vmatmul.bf16.gmra.mxu0 %v73
    %v192 = vpop.f32.mrf.mxu0
    %v193 = vadd.f32 %v55, %v192
    %v194 = vpop.f32.mrf.mxu0
    %v195 = vadd.f32 %v55, %v194
    %196 = vdwg.mxu0
    %197 = vmatpush.bf16.xpose.msra.mxu0 %v156
    %198 = vmatpush.bf16.xpose.msra.mxu0 %v155
    %199 = vmatpush.bf16.xpose.msra.mxu0 %v154
    %200 = vmatpush.bf16.xpose.msra.mxu0 %v153
    %201 = vmatpush.bf16.xpose.msra.mxu0 %v152
    %202 = vmatpush.bf16.xpose.msra.mxu0 %v151
    %203 = vmatpush.bf16.xpose.msra.mxu0 %v150
    %204 = vmatpush.bf16.xpose.msra.mxu0 %v149
    %205 = vmatmul.bf16.gmra.mxu0 %v71
    %v206 = vpop.f32.mrf.mxu0
    %v207 = vadd.f32 %v56, %v206
    %v208 = vpop.f32.mrf.mxu0
    %v209 = vadd.f32 %v56, %v208
    %210 = vmatmul.bf16.gmra.mxu0 %v72
    %v211 = vpop.f32.mrf.mxu0
    %v212 = vadd.f32 %v56, %v211
    %v213 = vpop.f32.mrf.mxu0
    %v214 = vadd.f32 %v56, %v213
    %215 = vmatmul.bf16.gmra.mxu0 %v73
    %v216 = vpop.f32.mrf.mxu0
    %v217 = vadd.f32 %v56, %v216
    %v218 = vpop.f32.mrf.mxu0
    %v219 = vadd.f32 %v56, %v218
    %220 = vdwg.mxu0
    %221 = vst [vmem:[#allocation2] sm:$0xff] %v183
    %222 = vst [vmem:[#allocation2 + $0x8] sm:$0xff] %v207
    %223 = vst [vmem:[#allocation2 + $0x10] sm:$0xff] %v185
    %224 = vst [vmem:[#allocation2 + $0x18] sm:$0xff] %v209
    %225 = vst [vmem:[#allocation2 + $0x20] sm:$0xff] %v188
    %226 = vst [vmem:[#allocation2 + $0x28] sm:$0xff] %v212
    %227 = vst [vmem:[#allocation2 + $0x30] sm:$0xff] %v190
    %228 = vst [vmem:[#allocation2 + $0x38] sm:$0xff] %v214
    %229 = vst [vmem:[#allocation2 + $0x40] sm:$0xff] %v193
    %230 = vst [vmem:[#allocation2 + $0x48] sm:$0xff] %v217
    %231 = vst [vmem:[#allocation2 + $0x50] sm:$0xff] %v195
    %232 = vst [vmem:[#allocation2 + $0x58] sm:$0xff] %v219
    // Predicated region
    $region14: #{seq2seq_forward.5} parent=1 // pred_check
      _
    $region15: #{seq2seq_forward.5} parent=1 // pred_check_branch
      %234 = sbr.rel (0) target = $region17
    $region16: #{seq2seq_forward.5} parent=1 // pred_region
      %236 = vsyncadd [#allocation3], 0
      %s237 = sshll.u32 [#allocation2], 4
      %s238 = int_to_ptr.vmem [resolvable:$true] %s237
      %s239 = sshll.u32 %s3, 4
      %s240 = int_to_ptr.hbm [resolvable:$true] %s239
      %245 = dma.vmem_to_hbm [thread:$0]  %s238, 1536, %s240, [#allocation3], 256, 256, 16
    $region17: #{seq2seq_forward.5} parent=1 // pred_fallthru
      _
    // Predicated region
    $region18: #{seq2seq_forward.5} parent=1 // pred_check
      _
    $region19: #{seq2seq_forward.5} parent=1 // pred_check_branch
      %247 = sbr.rel (0) target = $region21
    $region20: #{seq2seq_forward.5} parent=1 // pred_region
      %249 = dma.done [#allocation3], 1536
    $region21: #{seq2seq_forward.5} parent=1 // pred_fallthru
      _
    %250 = vsyncpa [#allocation3], 1

// kernel: seq2seq_forward.3
$region0: #{seq2seq_forward.3}
  #allocation0 [shape = 'u32[]', space=smem, size = 0x4, offset = 0x4, fixed_abs, tag = 'smem constant byte address 0x4 - core index']
  #allocation1 [shape = 'u32[72,128]{1,0:T(1,128)}', space=vmem, size = 0x9000, scoped, tag = 'internal scratch']
  #allocation2 [shape = 'f32[64,384]{1,0:T(8,128)}', space=vmem, size = 0x18000, scoped, tag = 'scratch operand']
  %s0 = inlined_call_operand.vmem [shape: bf16[64,128], index: 0, kind: input, shape index: {}]
  %s1 = inlined_call_operand.vmem [shape: s32[8,1], index: 1, kind: input, shape index: {}]
  %s2 = inlined_call_operand.vmem [shape: bf16[128,384], index: 2, kind: input, shape index: {}]
  %s3 = inlined_call_operand.vmem [shape: bf16[128,384], index: 3, kind: input, shape index: {}]
  %s4 = inlined_call_operand.vmem [shape: f32[1,384], index: 4, kind: input, shape index: {}]
  %s5 = inlined_call_operand.vmem [shape: f32[1,128], index: 5, kind: input, shape index: {}]
  %s6 = inlined_call_operand.vmem [shape: bf16[8,8,128], index: 6, kind: output, shape index: {0}]
  %s7 = inlined_call_operand.vmem [shape: f32[8,128], index: 7, kind: output, shape index: {1}]
  %8 = xla_tuple %s6, %s7
  %s9 = sld [smem:[#allocation0]]
  $region42: #{seq2seq_forward.3} parent=0
    _
  %s11 = ssub.s32 1, %s9
  %s12 = scalar_select 0, %s11, %s9
  // Predicated region
  $region2: #{seq2seq_forward.3} parent=0 // pred_check
    _
  $region3: #{seq2seq_forward.3} parent=0 // pred_check_branch
    %14 = sbr.rel (0) target = $region5
  $region4: #{seq2seq_forward.3} parent=0 // pred_region
    _
  $region5: #{seq2seq_forward.3} parent=0 // pred_fallthru
    _
  // Predicated region
  $region6: #{seq2seq_forward.3} parent=0 // pred_check
    _
  $region7: #{seq2seq_forward.3} parent=0 // pred_check_branch
    %16 = sbr.rel (0) target = $region9
  $region8: #{seq2seq_forward.3} parent=0 // pred_region
    _
  $region9: #{seq2seq_forward.3} parent=0 // pred_fallthru
    _
  // Predicated region
  $region10: #{seq2seq_forward.3} parent=0 // pred_check
    _
  $region11: #{seq2seq_forward.3} parent=0 // pred_check_branch
    %18 = sbr.rel (0) target = $region13
  $region12: #{seq2seq_forward.3} parent=0 // pred_region
    _
  $region13: #{seq2seq_forward.3} parent=0 // pred_fallthru
    _
  // Predicated region
  $region14: #{seq2seq_forward.3} parent=0 // pred_check
    _
  $region15: #{seq2seq_forward.3} parent=0 // pred_check_branch
    %20 = sbr.rel (0) target = $region17
  $region16: #{seq2seq_forward.3} parent=0 // pred_region
    _
  $region17: #{seq2seq_forward.3} parent=0 // pred_fallthru
    _
  // Predicated region
  $region18: #{seq2seq_forward.3} parent=0 // pred_check
    _
  $region19: #{seq2seq_forward.3} parent=0 // pred_check_branch
    %22 = sbr.rel (0) target = $region21
  $region20: #{seq2seq_forward.3} parent=0 // pred_region
    _
  $region21: #{seq2seq_forward.3} parent=0 // pred_fallthru
    _
  // Predicated region
  $region22: #{seq2seq_forward.3} parent=0 // pred_check
    _
  $region23: #{seq2seq_forward.3} parent=0 // pred_check_branch
    %24 = sbr.rel (0) target = $region25
  $region24: #{seq2seq_forward.3} parent=0 // pred_region
    _
  $region25: #{seq2seq_forward.3} parent=0 // pred_fallthru
    _
  %v26 = vld [vmem:[%s3] sm:$0xff]
  %v27 = vld [vmem:[%s3 + $0x8] sm:$0xf]
  %v28 = vld [vmem:[%s3 + $0xc] sm:$0xff]
  %v29 = vld [vmem:[%s3 + $0x14] sm:$0xf]
  %v30 = vld [vmem:[%s3 + $0x18] sm:$0xff]
  %v31 = vld [vmem:[%s3 + $0x20] sm:$0xf]
  %v32 = vld [vmem:[%s3 + $0x24] sm:$0xff]
  %v33 = vld [vmem:[%s3 + $0x2c] sm:$0xf]
  %v34 = vld [vmem:[%s3 + $0x30] sm:$0xff]
  %v35 = vld [vmem:[%s3 + $0x38] sm:$0xf]
  %v36 = vld [vmem:[%s3 + $0x3c] sm:$0xff]
  %v37 = vld [vmem:[%s3 + $0x44] sm:$0xf]
  %v38 = vld [vmem:[%s3 + $0x48] sm:$0xff]
  %v39 = vld [vmem:[%s3 + $0x50] sm:$0xf]
  %v40 = vld [vmem:[%s3 + $0x54] sm:$0xff]
  %v41 = vld [vmem:[%s3 + $0x5c] sm:$0xf]
  %v42 = vld [vmem:[%s3 + $0x60] sm:$0xff]
  %v43 = vld [vmem:[%s3 + $0x68] sm:$0xf]
  %v44 = vld [vmem:[%s3 + $0x6c] sm:$0xff]
  %v45 = vld [vmem:[%s3 + $0x74] sm:$0xf]
  %v46 = vld [vmem:[%s3 + $0x78] sm:$0xff]
  %v47 = vld [vmem:[%s3 + $0x80] sm:$0xf]
  %v48 = vld [vmem:[%s3 + $0x84] sm:$0xff]
  %v49 = vld [vmem:[%s3 + $0x8c] sm:$0xf]
  %v50 = vld [vmem:[%s3 + $0x90] sm:$0xff]
  %v51 = vld [vmem:[%s3 + $0x98] sm:$0xf]
  %v52 = vld [vmem:[%s3 + $0x9c] sm:$0xff]
  %v53 = vld [vmem:[%s3 + $0xa4] sm:$0xf]
  %v54 = vld [vmem:[%s3 + $0xa8] sm:$0xff]
  %v55 = vld [vmem:[%s3 + $0xb0] sm:$0xf]
  %v56 = vld [vmem:[%s3 + $0xb4] sm:$0xff]
  %v57 = vld [vmem:[%s3 + $0xbc] sm:$0xf]
  %v58 = vld [vmem:[%s1] sm:$0xff]
  %v59 = vld [vmem:[%s5] sm:$0x1]
  %v61 = vperm.slane %v59, 0
  %v63 = vld [vmem:[%s0] sm:$0xf]
  %v64 = vld [vmem:[%s0 + $0x4] sm:$0xf]
  %v65 = vld [vmem:[%s0 + $0x8] sm:$0xf]
  %v66 = vld [vmem:[%s0 + $0xc] sm:$0xf]
  %v67 = vld [vmem:[%s0 + $0x10] sm:$0xf]
  %v68 = vld [vmem:[%s0 + $0x14] sm:$0xf]
  %v69 = vld [vmem:[%s0 + $0x18] sm:$0xf]
  %v70 = vld [vmem:[%s0 + $0x1c] sm:$0xf]
  %v71 = vld [vmem:[%s2] sm:$0xff]
  %v72 = vld [vmem:[%s2 + $0x8] sm:$0xf]
  %v73 = vld [vmem:[%s2 + $0xc] sm:$0xff]
  %v74 = vld [vmem:[%s2 + $0x14] sm:$0xf]
  %v75 = vld [vmem:[%s2 + $0x18] sm:$0xff]
  %v76 = vld [vmem:[%s2 + $0x20] sm:$0xf]
  %v77 = vld [vmem:[%s2 + $0x24] sm:$0xff]
  %v78 = vld [vmem:[%s2 + $0x2c] sm:$0xf]
  %v79 = vld [vmem:[%s2 + $0x30] sm:$0xff]
  %v80 = vld [vmem:[%s2 + $0x38] sm:$0xf]
  %v81 = vld [vmem:[%s2 + $0x3c] sm:$0xff]
  %v82 = vld [vmem:[%s2 + $0x44] sm:$0xf]
  %v83 = vld [vmem:[%s2 + $0x48] sm:$0xff]
  %v84 = vld [vmem:[%s2 + $0x50] sm:$0xf]
  %v85 = vld [vmem:[%s2 + $0x54] sm:$0xff]
  %v86 = vld [vmem:[%s2 + $0x5c] sm:$0xf]
  %v87 = vld [vmem:[%s2 + $0x60] sm:$0xff]
  %v88 = vld [vmem:[%s2 + $0x68] sm:$0xf]
  %v89 = vld [vmem:[%s2 + $0x6c] sm:$0xff]
  %v90 = vld [vmem:[%s2 + $0x74] sm:$0xf]
  %v91 = vld [vmem:[%s2 + $0x78] sm:$0xff]
  %v92 = vld [vmem:[%s2 + $0x80] sm:$0xf]
  %v93 = vld [vmem:[%s2 + $0x84] sm:$0xff]
  %v94 = vld [vmem:[%s2 + $0x8c] sm:$0xf]
  %v95 = vld [vmem:[%s2 + $0x90] sm:$0xff]
  %v96 = vld [vmem:[%s2 + $0x98] sm:$0xf]
  %v97 = vld [vmem:[%s2 + $0x9c] sm:$0xff]
  %v98 = vld [vmem:[%s2 + $0xa4] sm:$0xf]
  %v99 = vld [vmem:[%s2 + $0xa8] sm:$0xff]
  %v100 = vld [vmem:[%s2 + $0xb0] sm:$0xf]
  %v101 = vld [vmem:[%s2 + $0xb4] sm:$0xff]
  %v102 = vld [vmem:[%s2 + $0xbc] sm:$0xf]
  %v103 = vld [vmem:[%s4] sm:$0x7]
  %v105 = vperm.slane %v103, 0
  %v106 = vperm.slane %v103, 1
  %v107 = vperm.slane %v103, 2
  %v119 = vunpack.c.l.b16 %v63
  %v120 = vunpack.c.l.b16 %v64
  %v121 = vunpack.c.l.b16 %v65
  %v122 = vunpack.c.l.b16 %v66
  %v123 = vunpack.c.l.b16 %v67
  %v124 = vunpack.c.l.b16 %v68
  %v125 = vunpack.c.l.b16 %v69
  %v126 = vunpack.c.l.b16 %v70
  %v127 = vpack.c.b16 %v120, %v119
  %v128 = vpack.c.b16 %v122, %v121
  %v129 = vpack.c.b16 %v124, %v123
  %v130 = vpack.c.b16 %v126, %v125
  %v167 = vunpack.c.l.b16 %v71
  %v168 = vunpack.c.h.b16 %v71
  %v169 = vunpack.c.l.b16 %v72
  %v170 = vunpack.c.l.b16 %v73
  %v171 = vunpack.c.h.b16 %v73
  %v172 = vunpack.c.l.b16 %v74
  %v173 = vunpack.c.l.b16 %v75
  %v174 = vunpack.c.h.b16 %v75
  %v175 = vunpack.c.l.b16 %v76
  %v176 = vunpack.c.l.b16 %v77
  %v177 = vunpack.c.h.b16 %v77
  %v178 = vunpack.c.l.b16 %v78
  %v179 = vunpack.c.l.b16 %v79
  %v180 = vunpack.c.h.b16 %v79
  %v181 = vunpack.c.l.b16 %v80
  %v182 = vunpack.c.l.b16 %v81
  %v183 = vunpack.c.h.b16 %v81
  %v184 = vunpack.c.l.b16 %v82
  %v185 = vunpack.c.l.b16 %v83
  %v186 = vunpack.c.h.b16 %v83
  %v187 = vunpack.c.l.b16 %v84
  %v188 = vunpack.c.l.b16 %v85
  %v189 = vunpack.c.h.b16 %v85
  %v190 = vunpack.c.l.b16 %v86
  %v191 = vunpack.c.l.b16 %v87
  %v192 = vunpack.c.h.b16 %v87
  %v193 = vunpack.c.l.b16 %v88
  %v194 = vunpack.c.l.b16 %v89
  %v195 = vunpack.c.h.b16 %v89
  %v196 = vunpack.c.l.b16 %v90
  %v197 = vunpack.c.l.b16 %v91
  %v198 = vunpack.c.h.b16 %v91
  %v199 = vunpack.c.l.b16 %v92
  %v200 = vunpack.c.l.b16 %v93
  %v201 = vunpack.c.h.b16 %v93
  %v202 = vunpack.c.l.b16 %v94
  %v203 = vunpack.c.l.b16 %v95
  %v204 = vunpack.c.h.b16 %v95
  %v205 = vunpack.c.l.b16 %v96
  %v206 = vunpack.c.l.b16 %v97
  %v207 = vunpack.c.h.b16 %v97
  %v208 = vunpack.c.l.b16 %v98
  %v209 = vunpack.c.l.b16 %v99
  %v210 = vunpack.c.h.b16 %v99
  %v211 = vunpack.c.l.b16 %v100
  %v212 = vunpack.c.l.b16 %v101
  %v213 = vunpack.c.h.b16 %v101
  %v214 = vunpack.c.l.b16 %v102
  %v215 = vpack.c.b16 %v170, %v167
  %v216 = vpack.c.b16 %v171, %v168
  %v217 = vpack.c.b16 %v172, %v169
  %v218 = vpack.c.b16 %v176, %v173
  %v219 = vpack.c.b16 %v177, %v174
  %v220 = vpack.c.b16 %v178, %v175
  %v221 = vpack.c.b16 %v182, %v179
  %v222 = vpack.c.b16 %v183, %v180
  %v223 = vpack.c.b16 %v184, %v181
  %v224 = vpack.c.b16 %v188, %v185
  %v225 = vpack.c.b16 %v189, %v186
  %v226 = vpack.c.b16 %v190, %v187
  %v227 = vpack.c.b16 %v194, %v191
  %v228 = vpack.c.b16 %v195, %v192
  %v229 = vpack.c.b16 %v196, %v193
  %v230 = vpack.c.b16 %v200, %v197
  %v231 = vpack.c.b16 %v201, %v198
  %v232 = vpack.c.b16 %v202, %v199
  %v233 = vpack.c.b16 %v206, %v203
  %v234 = vpack.c.b16 %v207, %v204
  %v235 = vpack.c.b16 %v208, %v205
  %v236 = vpack.c.b16 %v212, %v209
  %v237 = vpack.c.b16 %v213, %v210
  %v238 = vpack.c.b16 %v214, %v211
  %263 = vmatpush.bf16.msra.mxu0 %v236
  %264 = vmatpush.bf16.msra.mxu0 %v233
  %265 = vmatpush.bf16.msra.mxu0 %v230
  %266 = vmatpush.bf16.msra.mxu0 %v227
  %267 = vmatpush.bf16.msra.mxu0 %v224
  %268 = vmatpush.bf16.msra.mxu0 %v221
  %269 = vmatpush.bf16.msra.mxu0 %v218
  %270 = vmatpush.bf16.msra.mxu0 %v215
  %271 = vmatmul.bf16.gmra.mxu0 %v127
  %v272 = vpop.f32.mrf.mxu0
  %v273 = vadd.f32 %v105, %v272
  %v274 = vpop.f32.mrf.mxu0
  %v275 = vadd.f32 %v105, %v274
  %276 = vmatmul.bf16.gmra.mxu0 %v128
  %v277 = vpop.f32.mrf.mxu0
  %v278 = vadd.f32 %v105, %v277
  %v279 = vpop.f32.mrf.mxu0
  %v280 = vadd.f32 %v105, %v279
  %281 = vmatmul.bf16.gmra.mxu0 %v129
  %v282 = vpop.f32.mrf.mxu0
  %v283 = vadd.f32 %v105, %v282
  %v284 = vpop.f32.mrf.mxu0
  %v285 = vadd.f32 %v105, %v284
  %286 = vmatmul.bf16.gmra.mxu0 %v130
  %v287 = vpop.f32.mrf.mxu0
  %v288 = vadd.f32 %v105, %v287
  %v289 = vpop.f32.mrf.mxu0
  %v290 = vadd.f32 %v105, %v289
  %291 = vdwg.mxu0
  %292 = vmatpush.bf16.msra.mxu0 %v237
  %293 = vmatpush.bf16.msra.mxu0 %v234
  %294 = vmatpush.bf16.msra.mxu0 %v231
  %295 = vmatpush.bf16.msra.mxu0 %v228
  %296 = vmatpush.bf16.msra.mxu0 %v225
  %297 = vmatpush.bf16.msra.mxu0 %v222
  %298 = vmatpush.bf16.msra.mxu0 %v219
  %299 = vmatpush.bf16.msra.mxu0 %v216
  %300 = vmatmul.bf16.gmra.mxu0 %v127
  %v301 = vpop.f32.mrf.mxu0
  %v302 = vadd.f32 %v106, %v301
  %v303 = vpop.f32.mrf.mxu0
  %v304 = vadd.f32 %v106, %v303
  %305 = vmatmul.bf16.gmra.mxu0 %v128
  %v306 = vpop.f32.mrf.mxu0
  %v307 = vadd.f32 %v106, %v306
  %v308 = vpop.f32.mrf.mxu0
  %v309 = vadd.f32 %v106, %v308
  %310 = vmatmul.bf16.gmra.mxu0 %v129
  %v311 = vpop.f32.mrf.mxu0
  %v312 = vadd.f32 %v106, %v311
  %v313 = vpop.f32.mrf.mxu0
  %v314 = vadd.f32 %v106, %v313
  %315 = vmatmul.bf16.gmra.mxu0 %v130
  %v316 = vpop.f32.mrf.mxu0
  %v317 = vadd.f32 %v106, %v316
  %v318 = vpop.f32.mrf.mxu0
  %v319 = vadd.f32 %v106, %v318
  %320 = vdwg.mxu0
  %321 = vmatpush.bf16.msra.mxu0 %v238
  %322 = vmatpush.bf16.msra.mxu0 %v235
  %323 = vmatpush.bf16.msra.mxu0 %v232
  %324 = vmatpush.bf16.msra.mxu0 %v229
  %325 = vmatpush.bf16.msra.mxu0 %v226
  %326 = vmatpush.bf16.msra.mxu0 %v223
  %327 = vmatpush.bf16.msra.mxu0 %v220
  %328 = vmatpush.bf16.msra.mxu0 %v217
  %329 = vmatmul.bf16.gmra.mxu0 %v127
  %v330 = vpop.f32.mrf.mxu0
  %v331 = vadd.f32 %v107, %v330
  %v332 = vpop.f32.mrf.mxu0
  %v333 = vadd.f32 %v107, %v332
  %334 = vmatmul.bf16.gmra.mxu0 %v128
  %v335 = vpop.f32.mrf.mxu0
  %v336 = vadd.f32 %v107, %v335
  %v337 = vpop.f32.mrf.mxu0
  %v338 = vadd.f32 %v107, %v337
  %339 = vmatmul.bf16.gmra.mxu0 %v129
  %v340 = vpop.f32.mrf.mxu0
  %v341 = vadd.f32 %v107, %v340
  %v342 = vpop.f32.mrf.mxu0
  %v343 = vadd.f32 %v107, %v342
  %344 = vmatmul.bf16.gmra.mxu0 %v130
  %v345 = vpop.f32.mrf.mxu0
  %v346 = vadd.f32 %v107, %v345
  %v347 = vpop.f32.mrf.mxu0
  %v348 = vadd.f32 %v107, %v347
  %349 = vdwg.mxu0
  %350 = vst [vmem:[#allocation2] sm:$0xff] %v273
  %351 = vst [vmem:[#allocation2 + $0x8] sm:$0xff] %v302
  %352 = vst [vmem:[#allocation2 + $0x10] sm:$0xff] %v331
  %353 = vst [vmem:[#allocation2 + $0x18] sm:$0xff] %v275
  %354 = vst [vmem:[#allocation2 + $0x20] sm:$0xff] %v304
  %355 = vst [vmem:[#allocation2 + $0x28] sm:$0xff] %v333
  %356 = vst [vmem:[#allocation2 + $0x30] sm:$0xff] %v278
  %357 = vst [vmem:[#allocation2 + $0x38] sm:$0xff] %v307
  %358 = vst [vmem:[#allocation2 + $0x40] sm:$0xff] %v336
  %359 = vst [vmem:[#allocation2 + $0x48] sm:$0xff] %v280
  %360 = vst [vmem:[#allocation2 + $0x50] sm:$0xff] %v309
  %361 = vst [vmem:[#allocation2 + $0x58] sm:$0xff] %v338
  %362 = vst [vmem:[#allocation2 + $0x60] sm:$0xff] %v283
  %363 = vst [vmem:[#allocation2 + $0x68] sm:$0xff] %v312
  %364 = vst [vmem:[#allocation2 + $0x70] sm:$0xff] %v341
  %365 = vst [vmem:[#allocation2 + $0x78] sm:$0xff] %v285
  %366 = vst [vmem:[#allocation2 + $0x80] sm:$0xff] %v314
  %367 = vst [vmem:[#allocation2 + $0x88] sm:$0xff] %v343
  %368 = vst [vmem:[#allocation2 + $0x90] sm:$0xff] %v288
  %369 = vst [vmem:[#allocation2 + $0x98] sm:$0xff] %v317
  %370 = vst [vmem:[#allocation2 + $0xa0] sm:$0xff] %v346
  %371 = vst [vmem:[#allocation2 + $0xa8] sm:$0xff] %v290
  %372 = vst [vmem:[#allocation2 + $0xb0] sm:$0xff] %v319
  %373 = vst [vmem:[#allocation2 + $0xb8] sm:$0xff] %v348
  %s374 = smul.u32 0, 3
  %s375 = smul.addr %s374, 8
  %s376 = scalar_lea.vmem [#allocation2], %s375
  %v377 = vld [vmem:[%s376] sm:$0xff]
  %v378 = vld [vmem:[%s376 + $0x8] sm:$0xff]
  %v379 = vld [vmem:[%s376 + $0x10] sm:$0xff]
  %v412 = vunpack.c.l.b16 %v26
  %v413 = vunpack.c.h.b16 %v26
  %v414 = vunpack.c.l.b16 %v27
  %v415 = vunpack.c.l.b16 %v28
  %v416 = vunpack.c.h.b16 %v28
  %v417 = vunpack.c.l.b16 %v29
  %v418 = vunpack.c.l.b16 %v30
  %v419 = vunpack.c.h.b16 %v30
  %v420 = vunpack.c.l.b16 %v31
  %v421 = vunpack.c.l.b16 %v32
  %v422 = vunpack.c.h.b16 %v32
  %v423 = vunpack.c.l.b16 %v33
  %v424 = vunpack.c.l.b16 %v34
  %v425 = vunpack.c.h.b16 %v34
  %v426 = vunpack.c.l.b16 %v35
  %v427 = vunpack.c.l.b16 %v36
  %v428 = vunpack.c.h.b16 %v36
  %v429 = vunpack.c.l.b16 %v37
  %v430 = vunpack.c.l.b16 %v38
  %v431 = vunpack.c.h.b16 %v38
  %v432 = vunpack.c.l.b16 %v39
  %v433 = vunpack.c.l.b16 %v40
  %v434 = vunpack.c.h.b16 %v40
  %v435 = vunpack.c.l.b16 %v41
  %v436 = vunpack.c.l.b16 %v42
  %v437 = vunpack.c.h.b16 %v42
  %v438 = vunpack.c.l.b16 %v43
  %v439 = vunpack.c.l.b16 %v44
  %v440 = vunpack.c.h.b16 %v44
  %v441 = vunpack.c.l.b16 %v45
  %v442 = vunpack.c.l.b16 %v46
  %v443 = vunpack.c.h.b16 %v46
  %v444 = vunpack.c.l.b16 %v47
  %v445 = vunpack.c.l.b16 %v48
  %v446 = vunpack.c.h.b16 %v48
  %v447 = vunpack.c.l.b16 %v49
  %v448 = vunpack.c.l.b16 %v50
  %v449 = vunpack.c.h.b16 %v50
  %v450 = vunpack.c.l.b16 %v51
  %v451 = vunpack.c.l.b16 %v52
  %v452 = vunpack.c.h.b16 %v52
  %v453 = vunpack.c.l.b16 %v53
  %v454 = vunpack.c.l.b16 %v54
  %v455 = vunpack.c.h.b16 %v54
  %v456 = vunpack.c.l.b16 %v55
  %v457 = vunpack.c.l.b16 %v56
  %v458 = vunpack.c.h.b16 %v56
  %v459 = vunpack.c.l.b16 %v57
  %v460 = vpack.c.b16 %v415, %v412
  %v461 = vpack.c.b16 %v416, %v413
  %v462 = vpack.c.b16 %v417, %v414
  %v463 = vpack.c.b16 %v421, %v418
  %v464 = vpack.c.b16 %v422, %v419
  %v465 = vpack.c.b16 %v423, %v420
  %v466 = vpack.c.b16 %v427, %v424
  %v467 = vpack.c.b16 %v428, %v425
  %v468 = vpack.c.b16 %v429, %v426
  %v469 = vpack.c.b16 %v433, %v430
  %v470 = vpack.c.b16 %v434, %v431
  %v471 = vpack.c.b16 %v435, %v432
  %v472 = vpack.c.b16 %v439, %v436
  %v473 = vpack.c.b16 %v440, %v437
  %v474 = vpack.c.b16 %v441, %v438
  %v475 = vpack.c.b16 %v445, %v442
  %v476 = vpack.c.b16 %v446, %v443
  %v477 = vpack.c.b16 %v447, %v444
  %v478 = vpack.c.b16 %v451, %v448
  %v479 = vpack.c.b16 %v452, %v449
  %v480 = vpack.c.b16 %v453, %v450
  %v481 = vpack.c.b16 %v457, %v454
  %v482 = vpack.c.b16 %v458, %v455
  %v483 = vpack.c.b16 %v459, %v456
  %508 = vmatpush.bf16.msra.mxu0 %v481
  %509 = vmatpush.bf16.msra.mxu0 %v478
  %510 = vmatpush.bf16.msra.mxu0 %v475
  %511 = vmatpush.bf16.msra.mxu0 %v472
  %512 = vmatpush.bf16.msra.mxu0 %v469
  %513 = vmatpush.bf16.msra.mxu0 %v466
  %514 = vmatpush.bf16.msra.mxu0 %v463
  %515 = vmatpush.bf16.msra.mxu0 %v460
  %516 = vmatmul.bf16.gmra.mxu0 0
  %v517 = vpop.f32.mrf.mxu0
  %v518 = vadd.f32 0.0, %v517
  %v519 = vpop.f32.mrf.mxu0
  %520 = vdwg.mxu0
  %521 = vmatpush.bf16.msra.mxu0 %v482
  %522 = vmatpush.bf16.msra.mxu0 %v479
  %523 = vmatpush.bf16.msra.mxu0 %v476
  %524 = vmatpush.bf16.msra.mxu0 %v473
  %525 = vmatpush.bf16.msra.mxu0 %v470
  %526 = vmatpush.bf16.msra.mxu0 %v467
  %527 = vmatpush.bf16.msra.mxu0 %v464
  %528 = vmatpush.bf16.msra.mxu0 %v461
  %529 = vmatmul.bf16.gmra.mxu0 0
  %v530 = vpop.f32.mrf.mxu0
  %v531 = vadd.f32 0.0, %v530
  %v532 = vpop.f32.mrf.mxu0
  %533 = vdwg.mxu0
  %534 = vmatpush.bf16.msra.mxu0 %v483
  %535 = vmatpush.bf16.msra.mxu0 %v480
  %536 = vmatpush.bf16.msra.mxu0 %v477
  %537 = vmatpush.bf16.msra.mxu0 %v474
  %538 = vmatpush.bf16.msra.mxu0 %v471
  %539 = vmatpush.bf16.msra.mxu0 %v468
  %540 = vmatpush.bf16.msra.mxu0 %v465
  %541 = vmatpush.bf16.msra.mxu0 %v462
  %542 = vmatmul.bf16.gmra.mxu0 0
  %v543 = vpop.f32.mrf.mxu0
  %v544 = vadd.f32 0.0, %v543
  %v545 = vpop.f32.mrf.mxu0
  %546 = vdwg.mxu0
  %v547 = vadd.f32 %v377, %v518
  %v548 = vxor.u32 %v547, 2147483648
  %v549 = vmul.f32 %v548, 1.442695
  %v550 = vpow.pop %v549
  %v551 = vadd.f32 %v550, 1.0
  %v552 = vrcp.pop %v551
  %v553 = vmul.f32 %v551, %v552
  %v554 = vsub.f32 1.0, %v553
  %v555 = vmul.f32 %v552, %v554
  %v556 = vadd.f32 %v552, %v555
  %vm557 = vweird.f32 %v551
  %vm558 = vweird.f32 %v552
  %vm559 = vmor %vm557, %vm558
  %v560 = vsel %vm559, %v552, %v556
  %v561 = vand.u32 2147483647, %v551
  %vm562 = vcmp.eq.f32.partialorder %v561, 8.507059e+37
  %v563 = vand.u32 %v551, 2147483648
  %v564 = vor.u32 1.1754944e-38, %v563
  %v565 = vsel %vm562, %v564, %v560
  %v566 = vmul.f32 1.0, %v565
  %v567 = vadd.f32 %v378, %v531
  %v568 = vxor.u32 %v567, 2147483648
  %v569 = vmul.f32 %v568, 1.442695
  %v570 = vpow.pop %v569
  %v571 = vadd.f32 %v570, 1.0
  %v572 = vrcp.pop %v571
  %v573 = vmul.f32 %v571, %v572
  %v574 = vsub.f32 1.0, %v573
  %v575 = vmul.f32 %v572, %v574
  %v576 = vadd.f32 %v572, %v575
  %vm577 = vweird.f32 %v571
  %vm578 = vweird.f32 %v572
  %vm579 = vmor %vm577, %vm578
  %v580 = vsel %vm579, %v572, %v576
  %v581 = vand.u32 2147483647, %v571
  %vm582 = vcmp.eq.f32.partialorder %v581, 8.507059e+37
  %v583 = vand.u32 %v571, 2147483648
  %v584 = vor.u32 1.1754944e-38, %v583
  %v585 = vsel %vm582, %v584, %v580
  %v586 = vmul.f32 1.0, %v585
  %v587 = vadd.f32 %v544, %v61
  %v588 = vmul.f32 %v566, %v587
  %v589 = vadd.f32 %v379, %v588
  %v590 = vtanh.pop %v589
  %v591 = vsub.f32 1.0, %v586
  %v592 = vmul.f32 %v591, %v590
  %v593 = vmul.f32 %v586, 0.0
  %v594 = vadd.f32 %v592, %v593
  %vm595 = vcmp.gt.s32.totalorder %v58, 0
  %v596 = vsel %vm595, 1, 0
  %597 = vset.pattern.permute.xlu0 0
  %598 = vperm.xlu0 %597, %v596
  %v599 = vpop.permute.xlu0 %598
  %vm600 = vcmp.eq.s32.totalorder %v599, 1
  %v601 = vsel %vm600, %v594, 0.0
  %v602 = vpack.c.bf16 %v601, %v601
  %603 = vst [vmem:[%s6] sm:$0xf] %v602
  %s604 = smul.u32 1, 3
  %s605 = smul.addr %s604, 8
  %s606 = scalar_lea.vmem [#allocation2], %s605
  %v607 = vld [vmem:[%s606] sm:$0xff]
  %v608 = vld [vmem:[%s606 + $0x8] sm:$0xff]
  %v609 = vld [vmem:[%s606 + $0x10] sm:$0xff]
  %610 = vmatpush.bf16.msra.mxu0 %v481
  %611 = vmatpush.bf16.msra.mxu0 %v478
  %612 = vmatpush.bf16.msra.mxu0 %v475
  %613 = vmatpush.bf16.msra.mxu0 %v472
  %614 = vmatpush.bf16.msra.mxu0 %v469
  %615 = vmatpush.bf16.msra.mxu0 %v466
  %616 = vmatpush.bf16.msra.mxu0 %v463
  %617 = vmatpush.bf16.msra.mxu0 %v460
  %618 = vmatmul.bf16.gmra.mxu0 %v602
  %v619 = vpop.f32.mrf.mxu0
  %v620 = vadd.f32 0.0, %v619
  %v621 = vpop.f32.mrf.mxu0
  %622 = vdwg.mxu0
  %623 = vmatpush.bf16.msra.mxu0 %v482
  %624 = vmatpush.bf16.msra.mxu0 %v479
  %625 = vmatpush.bf16.msra.mxu0 %v476
  %626 = vmatpush.bf16.msra.mxu0 %v473
  %627 = vmatpush.bf16.msra.mxu0 %v470
  %628 = vmatpush.bf16.msra.mxu0 %v467
  %629 = vmatpush.bf16.msra.mxu0 %v464
  %630 = vmatpush.bf16.msra.mxu0 %v461
  %631 = vmatmul.bf16.gmra.mxu0 %v602
  %v632 = vpop.f32.mrf.mxu0
  %v633 = vadd.f32 0.0, %v632
  %v634 = vpop.f32.mrf.mxu0
  %635 = vdwg.mxu0
  %636 = vmatpush.bf16.msra.mxu0 %v483
  %637 = vmatpush.bf16.msra.mxu0 %v480
  %638 = vmatpush.bf16.msra.mxu0 %v477
  %639 = vmatpush.bf16.msra.mxu0 %v474
  %640 = vmatpush.bf16.msra.mxu0 %v471
  %641 = vmatpush.bf16.msra.mxu0 %v468
  %642 = vmatpush.bf16.msra.mxu0 %v465
  %643 = vmatpush.bf16.msra.mxu0 %v462
  %644 = vmatmul.bf16.gmra.mxu0 %v602
  %v645 = vpop.f32.mrf.mxu0
  %v646 = vadd.f32 0.0, %v645
  %v647 = vpop.f32.mrf.mxu0
  %648 = vdwg.mxu0
  %v649 = vadd.f32 %v607, %v620
  %v650 = vxor.u32 %v649, 2147483648
  %v651 = vmul.f32 %v650, 1.442695
  %v652 = vpow.pop %v651
  %v653 = vadd.f32 %v652, 1.0
  %v654 = vrcp.pop %v653
  %v655 = vmul.f32 %v653, %v654
  %v656 = vsub.f32 1.0, %v655
  %v657 = vmul.f32 %v654, %v656
  %v658 = vadd.f32 %v654, %v657
  %vm659 = vweird.f32 %v653
  %vm660 = vweird.f32 %v654
  %vm661 = vmor %vm659, %vm660
  %v662 = vsel %vm661, %v654, %v658
  %v663 = vand.u32 2147483647, %v653
  %vm664 = vcmp.eq.f32.partialorder %v663, 8.507059e+37
  %v665 = vand.u32 %v653, 2147483648
  %v666 = vor.u32 1.1754944e-38, %v665
  %v667 = vsel %vm664, %v666, %v662
  %v668 = vmul.f32 1.0, %v667
  %v669 = vadd.f32 %v608, %v633
  %v670 = vxor.u32 %v669, 2147483648
  %v671 = vmul.f32 %v670, 1.442695
  %v672 = vpow.pop %v671
  %v673 = vadd.f32 %v672, 1.0
  %v674 = vrcp.pop %v673
  %v675 = vmul.f32 %v673, %v674
  %v676 = vsub.f32 1.0, %v675
  %v677 = vmul.f32 %v674, %v676
  %v678 = vadd.f32 %v674, %v677
  %vm679 = vweird.f32 %v673
  %vm680 = vweird.f32 %v674
  %vm681 = vmor %vm679, %vm680
  %v682 = vsel %vm681, %v674, %v678
  %v683 = vand.u32 2147483647, %v673
  %vm684 = vcmp.eq.f32.partialorder %v683, 8.507059e+37
  %v685 = vand.u32 %v673, 2147483648
  %v686 = vor.u32 1.1754944e-38, %v685
  %v687 = vsel %vm684, %v686, %v682
  %v688 = vmul.f32 1.0, %v687
  %v689 = vadd.f32 %v646, %v61
  %v690 = vmul.f32 %v668, %v689
  %v691 = vadd.f32 %v609, %v690
  %v692 = vtanh.pop %v691
  %v693 = vsub.f32 1.0, %v688
  %v694 = vmul.f32 %v693, %v692
  %v695 = vmul.f32 %v688, %v601
  %v696 = vadd.f32 %v694, %v695
  %vm697 = vcmp.gt.s32.totalorder %v58, 1
  %v698 = vsel %vm697, 1, 0
  %699 = vset.pattern.permute.xlu0 0
  %700 = vperm.xlu0 %699, %v698
  %v701 = vpop.permute.xlu0 %700
  %vm702 = vcmp.eq.s32.totalorder %v701, 1
  %v703 = vsel %vm702, %v696, %v601
  %v704 = vsel %vm702, %v696, 0.0
  %v705 = vpack.c.bf16 %v704, %v704
  %s706 = scalar_lea.vmem %s6, 4
  %707 = vst [vmem:[%s706] sm:$0xf] %v705
  %s708 = smul.u32 2, 3
  %s709 = smul.addr %s708, 8
  %s710 = scalar_lea.vmem [#allocation2], %s709
  %v711 = vld [vmem:[%s710] sm:$0xff]
  %v712 = vld [vmem:[%s710 + $0x8] sm:$0xff]
  %v713 = vld [vmem:[%s710 + $0x10] sm:$0xff]
  %v714 = vpack.c.bf16 %v703, %v703
  %715 = vmatpush.bf16.msra.mxu0 %v481
  %716 = vmatpush.bf16.msra.mxu0 %v478
  %717 = vmatpush.bf16.msra.mxu0 %v475
  %718 = vmatpush.bf16.msra.mxu0 %v472
  %719 = vmatpush.bf16.msra.mxu0 %v469
  %720 = vmatpush.bf16.msra.mxu0 %v466
  %721 = vmatpush.bf16.msra.mxu0 %v463
  %722 = vmatpush.bf16.msra.mxu0 %v460
  %723 = vmatmul.bf16.gmra.mxu0 %v714
  %v724 = vpop.f32.mrf.mxu0
  %v725 = vadd.f32 0.0, %v724
  %v726 = vpop.f32.mrf.mxu0
  %727 = vdwg.mxu0
  %728 = vmatpush.bf16.msra.mxu0 %v482
  %729 = vmatpush.bf16.msra.mxu0 %v479
  %730 = vmatpush.bf16.msra.mxu0 %v476
  %731 = vmatpush.bf16.msra.mxu0 %v473
  %732 = vmatpush.bf16.msra.mxu0 %v470
  %733 = vmatpush.bf16.msra.mxu0 %v467
  %734 = vmatpush.bf16.msra.mxu0 %v464
  %735 = vmatpush.bf16.msra.mxu0 %v461
  %736 = vmatmul.bf16.gmra.mxu0 %v714
  %v737 = vpop.f32.mrf.mxu0
  %v738 = vadd.f32 0.0, %v737
  %v739 = vpop.f32.mrf.mxu0
  %740 = vdwg.mxu0
  %741 = vmatpush.bf16.msra.mxu0 %v483
  %742 = vmatpush.bf16.msra.mxu0 %v480
  %743 = vmatpush.bf16.msra.mxu0 %v477
  %744 = vmatpush.bf16.msra.mxu0 %v474
  %745 = vmatpush.bf16.msra.mxu0 %v471
  %746 = vmatpush.bf16.msra.mxu0 %v468
  %747 = vmatpush.bf16.msra.mxu0 %v465
  %748 = vmatpush.bf16.msra.mxu0 %v462
  %749 = vmatmul.bf16.gmra.mxu0 %v714
  %v750 = vpop.f32.mrf.mxu0
  %v751 = vadd.f32 0.0, %v750
  %v752 = vpop.f32.mrf.mxu0
  %753 = vdwg.mxu0
  %v754 = vadd.f32 %v711, %v725
  %v755 = vxor.u32 %v754, 2147483648
  %v756 = vmul.f32 %v755, 1.442695
  %v757 = vpow.pop %v756
  %v758 = vadd.f32 %v757, 1.0
  %v759 = vrcp.pop %v758
  %v760 = vmul.f32 %v758, %v759
  %v761 = vsub.f32 1.0, %v760
  %v762 = vmul.f32 %v759, %v761
  %v763 = vadd.f32 %v759, %v762
  %vm764 = vweird.f32 %v758
  %vm765 = vweird.f32 %v759
  %vm766 = vmor %vm764, %vm765
  %v767 = vsel %vm766, %v759, %v763
  %v768 = vand.u32 2147483647, %v758
  %vm769 = vcmp.eq.f32.partialorder %v768, 8.507059e+37
  %v770 = vand.u32 %v758, 2147483648
  %v771 = vor.u32 1.1754944e-38, %v770
  %v772 = vsel %vm769, %v771, %v767
  %v773 = vmul.f32 1.0, %v772
  %v774 = vadd.f32 %v712, %v738
  %v775 = vxor.u32 %v774, 2147483648
  %v776 = vmul.f32 %v775, 1.442695
  %v777 = vpow.pop %v776
  %v778 = vadd.f32 %v777, 1.0
  %v779 = vrcp.pop %v778
  %v780 = vmul.f32 %v778, %v779
  %v781 = vsub.f32 1.0, %v780
  %v782 = vmul.f32 %v779, %v781
  %v783 = vadd.f32 %v779, %v782
  %vm784 = vweird.f32 %v778
  %vm785 = vweird.f32 %v779
  %vm786 = vmor %vm784, %vm785
  %v787 = vsel %vm786, %v779, %v783
  %v788 = vand.u32 2147483647, %v778
  %vm789 = vcmp.eq.f32.partialorder %v788, 8.507059e+37
  %v790 = vand.u32 %v778, 2147483648
  %v791 = vor.u32 1.1754944e-38, %v790
  %v792 = vsel %vm789, %v791, %v787
  %v793 = vmul.f32 1.0, %v792
  %v794 = vadd.f32 %v751, %v61
  %v795 = vmul.f32 %v773, %v794
  %v796 = vadd.f32 %v713, %v795
  %v797 = vtanh.pop %v796
  %v798 = vsub.f32 1.0, %v793
  %v799 = vmul.f32 %v798, %v797
  %v800 = vmul.f32 %v793, %v703
  %v801 = vadd.f32 %v799, %v800
  %vm802 = vcmp.gt.s32.totalorder %v58, 2
  %v803 = vsel %vm802, 1, 0
  %804 = vset.pattern.permute.xlu0 0
  %805 = vperm.xlu0 %804, %v803
  %v806 = vpop.permute.xlu0 %805
  %vm807 = vcmp.eq.s32.totalorder %v806, 1
  %v808 = vsel %vm807, %v801, %v703
  %v809 = vsel %vm807, %v801, 0.0
  %v810 = vpack.c.bf16 %v809, %v809
  %s811 = scalar_lea.vmem %s6, 8
  %812 = vst [vmem:[%s811] sm:$0xf] %v810
  %s813 = smul.u32 3, 3
  %s814 = smul.addr %s813, 8
  %s815 = scalar_lea.vmem [#allocation2], %s814
  %v816 = vld [vmem:[%s815] sm:$0xff]
  %v817 = vld [vmem:[%s815 + $0x8] sm:$0xff]
  %v818 = vld [vmem:[%s815 + $0x10] sm:$0xff]
  %v819 = vpack.c.bf16 %v808, %v808
  %820 = vmatpush.bf16.msra.mxu0 %v481
  %821 = vmatpush.bf16.msra.mxu0 %v478
  %822 = vmatpush.bf16.msra.mxu0 %v475
  %823 = vmatpush.bf16.msra.mxu0 %v472
  %824 = vmatpush.bf16.msra.mxu0 %v469
  %825 = vmatpush.bf16.msra.mxu0 %v466
  %826 = vmatpush.bf16.msra.mxu0 %v463
  %827 = vmatpush.bf16.msra.mxu0 %v460
  %828 = vmatmul.bf16.gmra.mxu0 %v819
  %v829 = vpop.f32.mrf.mxu0
  %v830 = vadd.f32 0.0, %v829
  %v831 = vpop.f32.mrf.mxu0
  %832 = vdwg.mxu0
  %833 = vmatpush.bf16.msra.mxu0 %v482
  %834 = vmatpush.bf16.msra.mxu0 %v479
  %835 = vmatpush.bf16.msra.mxu0 %v476
  %836 = vmatpush.bf16.msra.mxu0 %v473
  %837 = vmatpush.bf16.msra.mxu0 %v470
  %838 = vmatpush.bf16.msra.mxu0 %v467
  %839 = vmatpush.bf16.msra.mxu0 %v464
  %840 = vmatpush.bf16.msra.mxu0 %v461
  %841 = vmatmul.bf16.gmra.mxu0 %v819
  %v842 = vpop.f32.mrf.mxu0
  %v843 = vadd.f32 0.0, %v842
  %v844 = vpop.f32.mrf.mxu0
  %845 = vdwg.mxu0
  %846 = vmatpush.bf16.msra.mxu0 %v483
  %847 = vmatpush.bf16.msra.mxu0 %v480
  %848 = vmatpush.bf16.msra.mxu0 %v477
  %849 = vmatpush.bf16.msra.mxu0 %v474
  %850 = vmatpush.bf16.msra.mxu0 %v471
  %851 = vmatpush.bf16.msra.mxu0 %v468
  %852 = vmatpush.bf16.msra.mxu0 %v465
  %853 = vmatpush.bf16.msra.mxu0 %v462
  %854 = vmatmul.bf16.gmra.mxu0 %v819
  %v855 = vpop.f32.mrf.mxu0
  %v856 = vadd.f32 0.0, %v855
  %v857 = vpop.f32.mrf.mxu0
  %858 = vdwg.mxu0
  %v859 = vadd.f32 %v816, %v830
  %v860 = vxor.u32 %v859, 2147483648
  %v861 = vmul.f32 %v860, 1.442695
  %v862 = vpow.pop %v861
  %v863 = vadd.f32 %v862, 1.0
  %v864 = vrcp.pop %v863
  %v865 = vmul.f32 %v863, %v864
  %v866 = vsub.f32 1.0, %v865
  %v867 = vmul.f32 %v864, %v866
  %v868 = vadd.f32 %v864, %v867
  %vm869 = vweird.f32 %v863
  %vm870 = vweird.f32 %v864
  %vm871 = vmor %vm869, %vm870
  %v872 = vsel %vm871, %v864, %v868
  %v873 = vand.u32 2147483647, %v863
  %vm874 = vcmp.eq.f32.partialorder %v873, 8.507059e+37
  %v875 = vand.u32 %v863, 2147483648
  %v876 = vor.u32 1.1754944e-38, %v875
  %v877 = vsel %vm874, %v876, %v872
  %v878 = vmul.f32 1.0, %v877
  %v879 = vadd.f32 %v817, %v843
  %v880 = vxor.u32 %v879, 2147483648
  %v881 = vmul.f32 %v880, 1.442695
  %v882 = vpow.pop %v881
  %v883 = vadd.f32 %v882, 1.0
  %v884 = vrcp.pop %v883
  %v885 = vmul.f32 %v883, %v884
  %v886 = vsub.f32 1.0, %v885
  %v887 = vmul.f32 %v884, %v886
  %v888 = vadd.f32 %v884, %v887
  %vm889 = vweird.f32 %v883
  %vm890 = vweird.f32 %v884
  %vm891 = vmor %vm889, %vm890
  %v892 = vsel %vm891, %v884, %v888
  %v893 = vand.u32 2147483647, %v883
  %vm894 = vcmp.eq.f32.partialorder %v893, 8.507059e+37
  %v895 = vand.u32 %v883, 2147483648
  %v896 = vor.u32 1.1754944e-38, %v895
  %v897 = vsel %vm894, %v896, %v892
  %v898 = vmul.f32 1.0, %v897
  %v899 = vadd.f32 %v856, %v61
  %v900 = vmul.f32 %v878, %v899
  %v901 = vadd.f32 %v818, %v900
  %v902 = vtanh.pop %v901
  %v903 = vsub.f32 1.0, %v898
  %v904 = vmul.f32 %v903, %v902
  %v905 = vmul.f32 %v898, %v808
  %v906 = vadd.f32 %v904, %v905
  %vm907 = vcmp.gt.s32.totalorder %v58, 3
  %v908 = vsel %vm907, 1, 0
  %909 = vset.pattern.permute.xlu0 0
  %910 = vperm.xlu0 %909, %v908
  %v911 = vpop.permute.xlu0 %910
  %vm912 = vcmp.eq.s32.totalorder %v911, 1
  %v913 = vsel %vm912, %v906, %v808
  %v914 = vsel %vm912, %v906, 0.0
  %v915 = vpack.c.bf16 %v914, %v914
  %s916 = scalar_lea.vmem %s6, 12
  %917 = vst [vmem:[%s916] sm:$0xf] %v915
  %s918 = smul.u32 4, 3
  %s919 = smul.addr %s918, 8
  %s920 = scalar_lea.vmem [#allocation2], %s919
  %v921 = vld [vmem:[%s920] sm:$0xff]
  %v922 = vld [vmem:[%s920 + $0x8] sm:$0xff]
  %v923 = vld [vmem:[%s920 + $0x10] sm:$0xff]
  %v924 = vpack.c.bf16 %v913, %v913
  %925 = vmatpush.bf16.msra.mxu0 %v481
  %926 = vmatpush.bf16.msra.mxu0 %v478
  %927 = vmatpush.bf16.msra.mxu0 %v475
  %928 = vmatpush.bf16.msra.mxu0 %v472
  %929 = vmatpush.bf16.msra.mxu0 %v469
  %930 = vmatpush.bf16.msra.mxu0 %v466
  %931 = vmatpush.bf16.msra.mxu0 %v463
  %932 = vmatpush.bf16.msra.mxu0 %v460
  %933 = vmatmul.bf16.gmra.mxu0 %v924
  %v934 = vpop.f32.mrf.mxu0
  %v935 = vadd.f32 0.0, %v934
  %v936 = vpop.f32.mrf.mxu0
  %937 = vdwg.mxu0
  %938 = vmatpush.bf16.msra.mxu0 %v482
  %939 = vmatpush.bf16.msra.mxu0 %v479
  %940 = vmatpush.bf16.msra.mxu0 %v476
  %941 = vmatpush.bf16.msra.mxu0 %v473
  %942 = vmatpush.bf16.msra.mxu0 %v470
  %943 = vmatpush.bf16.msra.mxu0 %v467
  %944 = vmatpush.bf16.msra.mxu0 %v464
  %945 = vmatpush.bf16.msra.mxu0 %v461
  %946 = vmatmul.bf16.gmra.mxu0 %v924
  %v947 = vpop.f32.mrf.mxu0
  %v948 = vadd.f32 0.0, %v947
  %v949 = vpop.f32.mrf.mxu0
  %950 = vdwg.mxu0
  %951 = vmatpush.bf16.msra.mxu0 %v483
  %952 = vmatpush.bf16.msra.mxu0 %v480
  %953 = vmatpush.bf16.msra.mxu0 %v477
  %954 = vmatpush.bf16.msra.mxu0 %v474
  %955 = vmatpush.bf16.msra.mxu0 %v471
  %956 = vmatpush.bf16.msra.mxu0 %v468
  %957 = vmatpush.bf16.msra.mxu0 %v465
  %958 = vmatpush.bf16.msra.mxu0 %v462
  %959 = vmatmul.bf16.gmra.mxu0 %v924
  %v960 = vpop.f32.mrf.mxu0
  %v961 = vadd.f32 0.0, %v960
  %v962 = vpop.f32.mrf.mxu0
  %963 = vdwg.mxu0
  %v964 = vadd.f32 %v921, %v935
  %v965 = vxor.u32 %v964, 2147483648
  %v966 = vmul.f32 %v965, 1.442695
  %v967 = vpow.pop %v966
  %v968 = vadd.f32 %v967, 1.0
  %v969 = vrcp.pop %v968
  %v970 = vmul.f32 %v968, %v969
  %v971 = vsub.f32 1.0, %v970
  %v972 = vmul.f32 %v969, %v971
  %v973 = vadd.f32 %v969, %v972
  %vm974 = vweird.f32 %v968
  %vm975 = vweird.f32 %v969
  %vm976 = vmor %vm974, %vm975
  %v977 = vsel %vm976, %v969, %v973
  %v978 = vand.u32 2147483647, %v968
  %vm979 = vcmp.eq.f32.partialorder %v978, 8.507059e+37
  %v980 = vand.u32 %v968, 2147483648
  %v981 = vor.u32 1.1754944e-38, %v980
  %v982 = vsel %vm979, %v981, %v977
  %v983 = vmul.f32 1.0, %v982
  %v984 = vadd.f32 %v922, %v948
  %v985 = vxor.u32 %v984, 2147483648
  %v986 = vmul.f32 %v985, 1.442695
  %v987 = vpow.pop %v986
  %v988 = vadd.f32 %v987, 1.0
  %v989 = vrcp.pop %v988
  %v990 = vmul.f32 %v988, %v989
  %v991 = vsub.f32 1.0, %v990
  %v992 = vmul.f32 %v989, %v991
  %v993 = vadd.f32 %v989, %v992
  %vm994 = vweird.f32 %v988
  %vm995 = vweird.f32 %v989
  %vm996 = vmor %vm994, %vm995
  %v997 = vsel %vm996, %v989, %v993
  %v998 = vand.u32 2147483647, %v988
  %vm999 = vcmp.eq.f32.partialorder %v998, 8.507059e+37
  %v1000 = vand.u32 %v988, 2147483648
  %v1001 = vor.u32 1.1754944e-38, %v1000
  %v1002 = vsel %vm999, %v1001, %v997
  %v1003 = vmul.f32 1.0, %v1002
  %v1004 = vadd.f32 %v961, %v61
  %v1005 = vmul.f32 %v983, %v1004
  %v1006 = vadd.f32 %v923, %v1005
  %v1007 = vtanh.pop %v1006
  %v1008 = vsub.f32 1.0, %v1003
  %v1009 = vmul.f32 %v1008, %v1007
  %v1010 = vmul.f32 %v1003, %v913
  %v1011 = vadd.f32 %v1009, %v1010
  %vm1012 = vcmp.gt.s32.totalorder %v58, 4
  %v1013 = vsel %vm1012, 1, 0
  %1014 = vset.pattern.permute.xlu0 0
  %1015 = vperm.xlu0 %1014, %v1013
  %v1016 = vpop.permute.xlu0 %1015
  %vm1017 = vcmp.eq.s32.totalorder %v1016, 1
  %v1018 = vsel %vm1017, %v1011, %v913
  %v1019 = vsel %vm1017, %v1011, 0.0
  %v1020 = vpack.c.bf16 %v1019, %v1019
  %s1021 = scalar_lea.vmem %s6, 16
  %1022 = vst [vmem:[%s1021] sm:$0xf] %v1020
  %s1023 = smul.u32 5, 3
  %s1024 = smul.addr %s1023, 8
  %s1025 = scalar_lea.vmem [#allocation2], %s1024
  %v1026 = vld [vmem:[%s1025] sm:$0xff]
  %v1027 = vld [vmem:[%s1025 + $0x8] sm:$0xff]
  %v1028 = vld [vmem:[%s1025 + $0x10] sm:$0xff]
  %v1029 = vpack.c.bf16 %v1018, %v1018
  %1030 = vmatpush.bf16.msra.mxu0 %v481
  %1031 = vmatpush.bf16.msra.mxu0 %v478
  %1032 = vmatpush.bf16.msra.mxu0 %v475
  %1033 = vmatpush.bf16.msra.mxu0 %v472
  %1034 = vmatpush.bf16.msra.mxu0 %v469
  %1035 = vmatpush.bf16.msra.mxu0 %v466
  %1036 = vmatpush.bf16.msra.mxu0 %v463
  %1037 = vmatpush.bf16.msra.mxu0 %v460
  %1038 = vmatmul.bf16.gmra.mxu0 %v1029
  %v1039 = vpop.f32.mrf.mxu0
  %v1040 = vadd.f32 0.0, %v1039
  %v1041 = vpop.f32.mrf.mxu0
  %1042 = vdwg.mxu0
  %1043 = vmatpush.bf16.msra.mxu0 %v482
  %1044 = vmatpush.bf16.msra.mxu0 %v479
  %1045 = vmatpush.bf16.msra.mxu0 %v476
  %1046 = vmatpush.bf16.msra.mxu0 %v473
  %1047 = vmatpush.bf16.msra.mxu0 %v470
  %1048 = vmatpush.bf16.msra.mxu0 %v467
  %1049 = vmatpush.bf16.msra.mxu0 %v464
  %1050 = vmatpush.bf16.msra.mxu0 %v461
  %1051 = vmatmul.bf16.gmra.mxu0 %v1029
  %v1052 = vpop.f32.mrf.mxu0
  %v1053 = vadd.f32 0.0, %v1052
  %v1054 = vpop.f32.mrf.mxu0
  %1055 = vdwg.mxu0
  %1056 = vmatpush.bf16.msra.mxu0 %v483
  %1057 = vmatpush.bf16.msra.mxu0 %v480
  %1058 = vmatpush.bf16.msra.mxu0 %v477
  %1059 = vmatpush.bf16.msra.mxu0 %v474
  %1060 = vmatpush.bf16.msra.mxu0 %v471
  %1061 = vmatpush.bf16.msra.mxu0 %v468
  %1062 = vmatpush.bf16.msra.mxu0 %v465
  %1063 = vmatpush.bf16.msra.mxu0 %v462
  %1064 = vmatmul.bf16.gmra.mxu0 %v1029
  %v1065 = vpop.f32.mrf.mxu0
  %v1066 = vadd.f32 0.0, %v1065
  %v1067 = vpop.f32.mrf.mxu0
  %1068 = vdwg.mxu0
  %v1069 = vadd.f32 %v1026, %v1040
  %v1070 = vxor.u32 %v1069, 2147483648
  %v1071 = vmul.f32 %v1070, 1.442695
  %v1072 = vpow.pop %v1071
  %v1073 = vadd.f32 %v1072, 1.0
  %v1074 = vrcp.pop %v1073
  %v1075 = vmul.f32 %v1073, %v1074
  %v1076 = vsub.f32 1.0, %v1075
  %v1077 = vmul.f32 %v1074, %v1076
  %v1078 = vadd.f32 %v1074, %v1077
  %vm1079 = vweird.f32 %v1073
  %vm1080 = vweird.f32 %v1074
  %vm1081 = vmor %vm1079, %vm1080
  %v1082 = vsel %vm1081, %v1074, %v1078
  %v1083 = vand.u32 2147483647, %v1073
  %vm1084 = vcmp.eq.f32.partialorder %v1083, 8.507059e+37
  %v1085 = vand.u32 %v1073, 2147483648
  %v1086 = vor.u32 1.1754944e-38, %v1085
  %v1087 = vsel %vm1084, %v1086, %v1082
  %v1088 = vmul.f32 1.0, %v1087
  %v1089 = vadd.f32 %v1027, %v1053
  %v1090 = vxor.u32 %v1089, 2147483648
  %v1091 = vmul.f32 %v1090, 1.442695
  %v1092 = vpow.pop %v1091
  %v1093 = vadd.f32 %v1092, 1.0
  %v1094 = vrcp.pop %v1093
  %v1095 = vmul.f32 %v1093, %v1094
  %v1096 = vsub.f32 1.0, %v1095
  %v1097 = vmul.f32 %v1094, %v1096
  %v1098 = vadd.f32 %v1094, %v1097
  %vm1099 = vweird.f32 %v1093
  %vm1100 = vweird.f32 %v1094
  %vm1101 = vmor %vm1099, %vm1100
  %v1102 = vsel %vm1101, %v1094, %v1098
  %v1103 = vand.u32 2147483647, %v1093
  %vm1104 = vcmp.eq.f32.partialorder %v1103, 8.507059e+37
  %v1105 = vand.u32 %v1093, 2147483648
  %v1106 = vor.u32 1.1754944e-38, %v1105
  %v1107 = vsel %vm1104, %v1106, %v1102
  %v1108 = vmul.f32 1.0, %v1107
  %v1109 = vadd.f32 %v1066, %v61
  %v1110 = vmul.f32 %v1088, %v1109
  %v1111 = vadd.f32 %v1028, %v1110
  %v1112 = vtanh.pop %v1111
  %v1113 = vsub.f32 1.0, %v1108
  %v1114 = vmul.f32 %v1113, %v1112
  %v1115 = vmul.f32 %v1108, %v1018
  %v1116 = vadd.f32 %v1114, %v1115
  %vm1117 = vcmp.gt.s32.totalorder %v58, 5
  %v1118 = vsel %vm1117, 1, 0
  %1119 = vset.pattern.permute.xlu0 0
  %1120 = vperm.xlu0 %1119, %v1118
  %v1121 = vpop.permute.xlu0 %1120
  %vm1122 = vcmp.eq.s32.totalorder %v1121, 1
  %v1123 = vsel %vm1122, %v1116, %v1018
  %v1124 = vsel %vm1122, %v1116, 0.0
  %v1125 = vpack.c.bf16 %v1124, %v1124
  %s1126 = scalar_lea.vmem %s6, 20
  %1127 = vst [vmem:[%s1126] sm:$0xf] %v1125
  %s1128 = smul.u32 6, 3
  %s1129 = smul.addr %s1128, 8
  %s1130 = scalar_lea.vmem [#allocation2], %s1129
  %v1131 = vld [vmem:[%s1130] sm:$0xff]
  %v1132 = vld [vmem:[%s1130 + $0x8] sm:$0xff]
  %v1133 = vld [vmem:[%s1130 + $0x10] sm:$0xff]
  %v1134 = vpack.c.bf16 %v1123, %v1123
  %1135 = vmatpush.bf16.msra.mxu0 %v481
  %1136 = vmatpush.bf16.msra.mxu0 %v478
  %1137 = vmatpush.bf16.msra.mxu0 %v475
  %1138 = vmatpush.bf16.msra.mxu0 %v472
  %1139 = vmatpush.bf16.msra.mxu0 %v469
  %1140 = vmatpush.bf16.msra.mxu0 %v466
  %1141 = vmatpush.bf16.msra.mxu0 %v463
  %1142 = vmatpush.bf16.msra.mxu0 %v460
  %1143 = vmatmul.bf16.gmra.mxu0 %v1134
  %v1144 = vpop.f32.mrf.mxu0
  %v1145 = vadd.f32 0.0, %v1144
  %v1146 = vpop.f32.mrf.mxu0
  %1147 = vdwg.mxu0
  %1148 = vmatpush.bf16.msra.mxu0 %v482
  %1149 = vmatpush.bf16.msra.mxu0 %v479
  %1150 = vmatpush.bf16.msra.mxu0 %v476
  %1151 = vmatpush.bf16.msra.mxu0 %v473
  %1152 = vmatpush.bf16.msra.mxu0 %v470
  %1153 = vmatpush.bf16.msra.mxu0 %v467
  %1154 = vmatpush.bf16.msra.mxu0 %v464
  %1155 = vmatpush.bf16.msra.mxu0 %v461
  %1156 = vmatmul.bf16.gmra.mxu0 %v1134
  %v1157 = vpop.f32.mrf.mxu0
  %v1158 = vadd.f32 0.0, %v1157
  %v1159 = vpop.f32.mrf.mxu0
  %1160 = vdwg.mxu0
  %1161 = vmatpush.bf16.msra.mxu0 %v483
  %1162 = vmatpush.bf16.msra.mxu0 %v480
  %1163 = vmatpush.bf16.msra.mxu0 %v477
  %1164 = vmatpush.bf16.msra.mxu0 %v474
  %1165 = vmatpush.bf16.msra.mxu0 %v471
  %1166 = vmatpush.bf16.msra.mxu0 %v468
  %1167 = vmatpush.bf16.msra.mxu0 %v465
  %1168 = vmatpush.bf16.msra.mxu0 %v462
  %1169 = vmatmul.bf16.gmra.mxu0 %v1134
  %v1170 = vpop.f32.mrf.mxu0
  %v1171 = vadd.f32 0.0, %v1170
  %v1172 = vpop.f32.mrf.mxu0
  %1173 = vdwg.mxu0
  %v1174 = vadd.f32 %v1131, %v1145
  %v1175 = vxor.u32 %v1174, 2147483648
  %v1176 = vmul.f32 %v1175, 1.442695
  %v1177 = vpow.pop %v1176
  %v1178 = vadd.f32 %v1177, 1.0
  %v1179 = vrcp.pop %v1178
  %v1180 = vmul.f32 %v1178, %v1179
  %v1181 = vsub.f32 1.0, %v1180
  %v1182 = vmul.f32 %v1179, %v1181
  %v1183 = vadd.f32 %v1179, %v1182
  %vm1184 = vweird.f32 %v1178
  %vm1185 = vweird.f32 %v1179
  %vm1186 = vmor %vm1184, %vm1185
  %v1187 = vsel %vm1186, %v1179, %v1183
  %v1188 = vand.u32 2147483647, %v1178
  %vm1189 = vcmp.eq.f32.partialorder %v1188, 8.507059e+37
  %v1190 = vand.u32 %v1178, 2147483648
  %v1191 = vor.u32 1.1754944e-38, %v1190
  %v1192 = vsel %vm1189, %v1191, %v1187
  %v1193 = vmul.f32 1.0, %v1192
  %v1194 = vadd.f32 %v1132, %v1158
  %v1195 = vxor.u32 %v1194, 2147483648
  %v1196 = vmul.f32 %v1195, 1.442695
  %v1197 = vpow.pop %v1196
  %v1198 = vadd.f32 %v1197, 1.0
  %v1199 = vrcp.pop %v1198
  %v1200 = vmul.f32 %v1198, %v1199
  %v1201 = vsub.f32 1.0, %v1200
  %v1202 = vmul.f32 %v1199, %v1201
  %v1203 = vadd.f32 %v1199, %v1202
  %vm1204 = vweird.f32 %v1198
  %vm1205 = vweird.f32 %v1199
  %vm1206 = vmor %vm1204, %vm1205
  %v1207 = vsel %vm1206, %v1199, %v1203
  %v1208 = vand.u32 2147483647, %v1198
  %vm1209 = vcmp.eq.f32.partialorder %v1208, 8.507059e+37
  %v1210 = vand.u32 %v1198, 2147483648
  %v1211 = vor.u32 1.1754944e-38, %v1210
  %v1212 = vsel %vm1209, %v1211, %v1207
  %v1213 = vmul.f32 1.0, %v1212
  %v1214 = vadd.f32 %v1171, %v61
  %v1215 = vmul.f32 %v1193, %v1214
  %v1216 = vadd.f32 %v1133, %v1215
  %v1217 = vtanh.pop %v1216
  %v1218 = vsub.f32 1.0, %v1213
  %v1219 = vmul.f32 %v1218, %v1217
  %v1220 = vmul.f32 %v1213, %v1123
  %v1221 = vadd.f32 %v1219, %v1220
  %vm1222 = vcmp.gt.s32.totalorder %v58, 6
  %v1223 = vsel %vm1222, 1, 0
  %1224 = vset.pattern.permute.xlu0 0
  %1225 = vperm.xlu0 %1224, %v1223
  %v1226 = vpop.permute.xlu0 %1225
  %vm1227 = vcmp.eq.s32.totalorder %v1226, 1
  %v1228 = vsel %vm1227, %v1221, %v1123
  %v1229 = vsel %vm1227, %v1221, 0.0
  %v1230 = vpack.c.bf16 %v1229, %v1229
  %s1231 = scalar_lea.vmem %s6, 24
  %1232 = vst [vmem:[%s1231] sm:$0xf] %v1230
  %s1233 = smul.u32 7, 3
  %s1234 = smul.addr %s1233, 8
  %s1235 = scalar_lea.vmem [#allocation2], %s1234
  %v1236 = vld [vmem:[%s1235] sm:$0xff]
  %v1237 = vld [vmem:[%s1235 + $0x8] sm:$0xff]
  %v1238 = vld [vmem:[%s1235 + $0x10] sm:$0xff]
  %v1239 = vpack.c.bf16 %v1228, %v1228
  %1240 = vmatpush.bf16.msra.mxu0 %v481
  %1241 = vmatpush.bf16.msra.mxu0 %v478
  %1242 = vmatpush.bf16.msra.mxu0 %v475
  %1243 = vmatpush.bf16.msra.mxu0 %v472
  %1244 = vmatpush.bf16.msra.mxu0 %v469
  %1245 = vmatpush.bf16.msra.mxu0 %v466
  %1246 = vmatpush.bf16.msra.mxu0 %v463
  %1247 = vmatpush.bf16.msra.mxu0 %v460
  %1248 = vmatmul.bf16.gmra.mxu0 %v1239
  %v1249 = vpop.f32.mrf.mxu0
  %v1250 = vadd.f32 0.0, %v1249
  %v1251 = vpop.f32.mrf.mxu0
  %1252 = vdwg.mxu0
  %1253 = vmatpush.bf16.msra.mxu0 %v482
  %1254 = vmatpush.bf16.msra.mxu0 %v479
  %1255 = vmatpush.bf16.msra.mxu0 %v476
  %1256 = vmatpush.bf16.msra.mxu0 %v473
  %1257 = vmatpush.bf16.msra.mxu0 %v470
  %1258 = vmatpush.bf16.msra.mxu0 %v467
  %1259 = vmatpush.bf16.msra.mxu0 %v464
  %1260 = vmatpush.bf16.msra.mxu0 %v461
  %1261 = vmatmul.bf16.gmra.mxu0 %v1239
  %v1262 = vpop.f32.mrf.mxu0
  %v1263 = vadd.f32 0.0, %v1262
  %v1264 = vpop.f32.mrf.mxu0
  %1265 = vdwg.mxu0
  %1266 = vmatpush.bf16.msra.mxu0 %v483
  %1267 = vmatpush.bf16.msra.mxu0 %v480
  %1268 = vmatpush.bf16.msra.mxu0 %v477
  %1269 = vmatpush.bf16.msra.mxu0 %v474
  %1270 = vmatpush.bf16.msra.mxu0 %v471
  %1271 = vmatpush.bf16.msra.mxu0 %v468
  %1272 = vmatpush.bf16.msra.mxu0 %v465
  %1273 = vmatpush.bf16.msra.mxu0 %v462
  %1274 = vmatmul.bf16.gmra.mxu0 %v1239
  %v1275 = vpop.f32.mrf.mxu0
  %v1276 = vadd.f32 0.0, %v1275
  %v1277 = vpop.f32.mrf.mxu0
  %1278 = vdwg.mxu0
  %v1279 = vadd.f32 %v1236, %v1250
  %v1280 = vxor.u32 %v1279, 2147483648
  %v1281 = vmul.f32 %v1280, 1.442695
  %v1282 = vpow.pop %v1281
  %v1283 = vadd.f32 %v1282, 1.0
  %v1284 = vrcp.pop %v1283
  %v1285 = vmul.f32 %v1283, %v1284
  %v1286 = vsub.f32 1.0, %v1285
  %v1287 = vmul.f32 %v1284, %v1286
  %v1288 = vadd.f32 %v1284, %v1287
  %vm1289 = vweird.f32 %v1283
  %vm1290 = vweird.f32 %v1284
  %vm1291 = vmor %vm1289, %vm1290
  %v1292 = vsel %vm1291, %v1284, %v1288
  %v1293 = vand.u32 2147483647, %v1283
  %vm1294 = vcmp.eq.f32.partialorder %v1293, 8.507059e+37
  %v1295 = vand.u32 %v1283, 2147483648
  %v1296 = vor.u32 1.1754944e-38, %v1295
  %v1297 = vsel %vm1294, %v1296, %v1292
  %v1298 = vmul.f32 1.0, %v1297
  %v1299 = vadd.f32 %v1237, %v1263
  %v1300 = vxor.u32 %v1299, 2147483648
  %v1301 = vmul.f32 %v1300, 1.442695
  %v1302 = vpow.pop %v1301
  %v1303 = vadd.f32 %v1302, 1.0
  %v1304 = vrcp.pop %v1303
  %v1305 = vmul.f32 %v1303, %v1304
  %v1306 = vsub.f32 1.0, %v1305
  %v1307 = vmul.f32 %v1304, %v1306
  %v1308 = vadd.f32 %v1304, %v1307
  %vm1309 = vweird.f32 %v1303
  %vm1310 = vweird.f32 %v1304
  %vm1311 = vmor %vm1309, %vm1310
  %v1312 = vsel %vm1311, %v1304, %v1308
  %v1313 = vand.u32 2147483647, %v1303
  %vm1314 = vcmp.eq.f32.partialorder %v1313, 8.507059e+37
  %v1315 = vand.u32 %v1303, 2147483648
  %v1316 = vor.u32 1.1754944e-38, %v1315
  %v1317 = vsel %vm1314, %v1316, %v1312
  %v1318 = vmul.f32 1.0, %v1317
  %v1319 = vadd.f32 %v1276, %v61
  %v1320 = vmul.f32 %v1298, %v1319
  %v1321 = vadd.f32 %v1238, %v1320
  %v1322 = vtanh.pop %v1321
  %v1323 = vsub.f32 1.0, %v1318
  %v1324 = vmul.f32 %v1323, %v1322
  %v1325 = vmul.f32 %v1318, %v1228
  %v1326 = vadd.f32 %v1324, %v1325
  %vm1327 = vcmp.gt.s32.totalorder %v58, 7
  %v1328 = vsel %vm1327, 1, 0
  %1329 = vset.pattern.permute.xlu0 0
  %1330 = vperm.xlu0 %1329, %v1328
  %v1331 = vpop.permute.xlu0 %1330
  %vm1332 = vcmp.eq.s32.totalorder %v1331, 1
  %v1333 = vsel %vm1332, %v1326, %v1228
  %v1334 = vsel %vm1332, %v1326, 0.0
  %v1335 = vpack.c.bf16 %v1334, %v1334
  %s1336 = scalar_lea.vmem %s6, 28
  %1337 = vst [vmem:[%s1336] sm:$0xf] %v1335
  %1338 = vst [vmem:[%s7] sm:$0xff] %v1333
  // Predicated region
  $region26: #{seq2seq_forward.3} parent=0 // pred_check
    _
  $region27: #{seq2seq_forward.3} parent=0 // pred_check_branch
    %1340 = sbr.rel (0) target = $region29
  $region28: #{seq2seq_forward.3} parent=0 // pred_region
    _
  $region29: #{seq2seq_forward.3} parent=0 // pred_fallthru
    _
  // Predicated region
  $region30: #{seq2seq_forward.3} parent=0 // pred_check
    _
  $region31: #{seq2seq_forward.3} parent=0 // pred_check_branch
    %1342 = sbr.rel (0) target = $region33
  $region32: #{seq2seq_forward.3} parent=0 // pred_region
    _
  $region33: #{seq2seq_forward.3} parent=0 // pred_fallthru
    _
  // Predicated region
  $region34: #{seq2seq_forward.3} parent=0 // pred_check
    _
  $region35: #{seq2seq_forward.3} parent=0 // pred_check_branch
    %1344 = sbr.rel (0) target = $region37
  $region36: #{seq2seq_forward.3} parent=0 // pred_region
    _
  $region37: #{seq2seq_forward.3} parent=0 // pred_fallthru
    _
  // Predicated region
  $region38: #{seq2seq_forward.3} parent=0 // pred_check
    _
  $region39: #{seq2seq_forward.3} parent=0 // pred_check_branch
    %1346 = sbr.rel (0) target = $region41
  $region40: #{seq2seq_forward.3} parent=0 // pred_region
    _
  $region41: #{seq2seq_forward.3} parent=0 // pred_fallthru
    _

// kernel: seq2seq_forward.4
$region0: #{seq2seq_forward.4}
  #allocation0 [shape = 'u32[]', space=smem, size = 0x4, offset = 0x4, fixed_abs, tag = 'smem constant byte address 0x4 - core index']
  #allocation1 [shape = 'u32[72,128]{1,0:T(1,128)}', space=vmem, size = 0x9000, scoped, tag = 'internal scratch']
  #allocation2 [shape = 'f32[48,384]{1,0:T(8,128)}', space=vmem, size = 0x12000, scoped, tag = 'scratch operand']
  %s0 = inlined_call_operand.vmem [shape: bf16[48,128], index: 0, kind: input, shape index: {}]
  %s1 = inlined_call_operand.vmem [shape: f32[8,128], index: 1, kind: input, shape index: {}]
  %s2 = inlined_call_operand.vmem [shape: bf16[8,8,128], index: 2, kind: input, shape index: {}]
  %s3 = inlined_call_operand.vmem [shape: s32[1,8], index: 3, kind: input, shape index: {}]
  %s4 = inlined_call_operand.vmem [shape: bf16[128,384], index: 4, kind: input, shape index: {}]
  %s5 = inlined_call_operand.vmem [shape: bf16[128,384], index: 5, kind: input, shape index: {}]
  %s6 = inlined_call_operand.vmem [shape: f32[1,384], index: 6, kind: input, shape index: {}]
  %s7 = inlined_call_operand.vmem [shape: f32[1,128], index: 7, kind: input, shape index: {}]
  %s8 = inlined_call_operand.vmem [shape: bf16[128,128], index: 8, kind: input, shape index: {}]
  %s9 = inlined_call_operand.vmem [shape: bf16[128,128], index: 9, kind: input, shape index: {}]
  %s10 = inlined_call_operand.vmem [shape: f32[1,128], index: 10, kind: input, shape index: {}]
  %s11 = inlined_call_operand.vmem [shape: bf16[48,128], index: 11, kind: output, shape index: {0}]
  %s12 = inlined_call_operand.hbm [shape: f32[8,128], index: 12, kind: output, shape index: {1}]
  %13 = xla_tuple %s11, %s12
  %s14 = sld [smem:[#allocation0]]
  $region62: #{seq2seq_forward.4} parent=0
    _
  %s16 = ssub.s32 1, %s14
  %s17 = scalar_select 0, %s16, %s14
  $region1: #{seq2seq_forward.4} parent=0
    #allocation3 [shape = 'u8[4096]{0}', space=vmem, size = 0x1000, scoped, tag = 'output window, operand 1, single buffered']
    #allocation4 [shape = 's32[1]{0}', space=sflag, size = 0x4, scoped, tag = 'scoped memory for seq2seq_forward.4']
    %18 = vsyncpa [#allocation4], 0
    // Predicated region
    $region2: #{seq2seq_forward.4} parent=1 // pred_check
      _
    $region3: #{seq2seq_forward.4} parent=1 // pred_check_branch
      %20 = sbr.rel (0) target = $region5
    $region4: #{seq2seq_forward.4} parent=1 // pred_region
      _
    $region5: #{seq2seq_forward.4} parent=1 // pred_fallthru
      _
    // Predicated region
    $region6: #{seq2seq_forward.4} parent=1 // pred_check
      _
    $region7: #{seq2seq_forward.4} parent=1 // pred_check_branch
      %22 = sbr.rel (0) target = $region9
    $region8: #{seq2seq_forward.4} parent=1 // pred_region
      _
    $region9: #{seq2seq_forward.4} parent=1 // pred_fallthru
      _
    // Predicated region
    $region10: #{seq2seq_forward.4} parent=1 // pred_check
      _
    $region11: #{seq2seq_forward.4} parent=1 // pred_check_branch
      %24 = sbr.rel (0) target = $region13
    $region12: #{seq2seq_forward.4} parent=1 // pred_region
      _
    $region13: #{seq2seq_forward.4} parent=1 // pred_fallthru
      _
    // Predicated region
    $region14: #{seq2seq_forward.4} parent=1 // pred_check
      _
    $region15: #{seq2seq_forward.4} parent=1 // pred_check_branch
      %26 = sbr.rel (0) target = $region17
    $region16: #{seq2seq_forward.4} parent=1 // pred_region
      _
    $region17: #{seq2seq_forward.4} parent=1 // pred_fallthru
      _
    // Predicated region
    $region18: #{seq2seq_forward.4} parent=1 // pred_check
      _
    $region19: #{seq2seq_forward.4} parent=1 // pred_check_branch
      %28 = sbr.rel (0) target = $region21
    $region20: #{seq2seq_forward.4} parent=1 // pred_region
      _
    $region21: #{seq2seq_forward.4} parent=1 // pred_fallthru
      _
    // Predicated region
    $region22: #{seq2seq_forward.4} parent=1 // pred_check
      _
    $region23: #{seq2seq_forward.4} parent=1 // pred_check_branch
      %30 = sbr.rel (0) target = $region25
    $region24: #{seq2seq_forward.4} parent=1 // pred_region
      _
    $region25: #{seq2seq_forward.4} parent=1 // pred_fallthru
      _
    // Predicated region
    $region26: #{seq2seq_forward.4} parent=1 // pred_check
      _
    $region27: #{seq2seq_forward.4} parent=1 // pred_check_branch
      %32 = sbr.rel (0) target = $region29
    $region28: #{seq2seq_forward.4} parent=1 // pred_region
      _
    $region29: #{seq2seq_forward.4} parent=1 // pred_fallthru
      _
    // Predicated region
    $region30: #{seq2seq_forward.4} parent=1 // pred_check
      _
    $region31: #{seq2seq_forward.4} parent=1 // pred_check_branch
      %34 = sbr.rel (0) target = $region33
    $region32: #{seq2seq_forward.4} parent=1 // pred_region
      _
    $region33: #{seq2seq_forward.4} parent=1 // pred_fallthru
      _
    // Predicated region
    $region34: #{seq2seq_forward.4} parent=1 // pred_check
      _
    $region35: #{seq2seq_forward.4} parent=1 // pred_check_branch
      %36 = sbr.rel (0) target = $region37
    $region36: #{seq2seq_forward.4} parent=1 // pred_region
      _
    $region37: #{seq2seq_forward.4} parent=1 // pred_fallthru
      _
    // Predicated region
    $region38: #{seq2seq_forward.4} parent=1 // pred_check
      _
    $region39: #{seq2seq_forward.4} parent=1 // pred_check_branch
      %38 = sbr.rel (0) target = $region41
    $region40: #{seq2seq_forward.4} parent=1 // pred_region
      _
    $region41: #{seq2seq_forward.4} parent=1 // pred_fallthru
      _
    // Predicated region
    $region42: #{seq2seq_forward.4} parent=1 // pred_check
      _
    $region43: #{seq2seq_forward.4} parent=1 // pred_check_branch
      %40 = sbr.rel (0) target = $region45
    $region44: #{seq2seq_forward.4} parent=1 // pred_region
      _
    $region45: #{seq2seq_forward.4} parent=1 // pred_fallthru
      _
    %v41 = vld [vmem:[%s5] sm:$0xff]
    %v42 = vld [vmem:[%s5 + $0x8] sm:$0xf]
    %v43 = vld [vmem:[%s5 + $0xc] sm:$0xff]
    %v44 = vld [vmem:[%s5 + $0x14] sm:$0xf]
    %v45 = vld [vmem:[%s5 + $0x18] sm:$0xff]
    %v46 = vld [vmem:[%s5 + $0x20] sm:$0xf]
    %v47 = vld [vmem:[%s5 + $0x24] sm:$0xff]
    %v48 = vld [vmem:[%s5 + $0x2c] sm:$0xf]
    %v49 = vld [vmem:[%s5 + $0x30] sm:$0xff]
    %v50 = vld [vmem:[%s5 + $0x38] sm:$0xf]
    %v51 = vld [vmem:[%s5 + $0x3c] sm:$0xff]
    %v52 = vld [vmem:[%s5 + $0x44] sm:$0xf]
    %v53 = vld [vmem:[%s5 + $0x48] sm:$0xff]
    %v54 = vld [vmem:[%s5 + $0x50] sm:$0xf]
    %v55 = vld [vmem:[%s5 + $0x54] sm:$0xff]
    %v56 = vld [vmem:[%s5 + $0x5c] sm:$0xf]
    %v57 = vld [vmem:[%s5 + $0x60] sm:$0xff]
    %v58 = vld [vmem:[%s5 + $0x68] sm:$0xf]
    %v59 = vld [vmem:[%s5 + $0x6c] sm:$0xff]
    %v60 = vld [vmem:[%s5 + $0x74] sm:$0xf]
    %v61 = vld [vmem:[%s5 + $0x78] sm:$0xff]
    %v62 = vld [vmem:[%s5 + $0x80] sm:$0xf]
    %v63 = vld [vmem:[%s5 + $0x84] sm:$0xff]
    %v64 = vld [vmem:[%s5 + $0x8c] sm:$0xf]
    %v65 = vld [vmem:[%s5 + $0x90] sm:$0xff]
    %v66 = vld [vmem:[%s5 + $0x98] sm:$0xf]
    %v67 = vld [vmem:[%s5 + $0x9c] sm:$0xff]
    %v68 = vld [vmem:[%s5 + $0xa4] sm:$0xf]
    %v69 = vld [vmem:[%s5 + $0xa8] sm:$0xff]
    %v70 = vld [vmem:[%s5 + $0xb0] sm:$0xf]
    %v71 = vld [vmem:[%s5 + $0xb4] sm:$0xff]
    %v72 = vld [vmem:[%s5 + $0xbc] sm:$0xf]
    %v73 = vld [vmem:[%s8] sm:$0xf]
    %v74 = vld [vmem:[%s8 + $0x4] sm:$0xf]
    %v75 = vld [vmem:[%s8 + $0x8] sm:$0xf]
    %v76 = vld [vmem:[%s8 + $0xc] sm:$0xf]
    %v77 = vld [vmem:[%s8 + $0x10] sm:$0xf]
    %v78 = vld [vmem:[%s8 + $0x14] sm:$0xf]
    %v79 = vld [vmem:[%s8 + $0x18] sm:$0xf]
    %v80 = vld [vmem:[%s8 + $0x1c] sm:$0xf]
    %v81 = vld [vmem:[%s8 + $0x20] sm:$0xf]
    %v82 = vld [vmem:[%s8 + $0x24] sm:$0xf]
    %v83 = vld [vmem:[%s8 + $0x28] sm:$0xf]
    %v84 = vld [vmem:[%s8 + $0x2c] sm:$0xf]
    %v85 = vld [vmem:[%s8 + $0x30] sm:$0xf]
    %v86 = vld [vmem:[%s8 + $0x34] sm:$0xf]
    %v87 = vld [vmem:[%s8 + $0x38] sm:$0xf]
    %v88 = vld [vmem:[%s8 + $0x3c] sm:$0xf]
    %v89 = vld [vmem:[%s9] sm:$0xf]
    %v90 = vld [vmem:[%s9 + $0x4] sm:$0xf]
    %v91 = vld [vmem:[%s9 + $0x8] sm:$0xf]
    %v92 = vld [vmem:[%s9 + $0xc] sm:$0xf]
    %v93 = vld [vmem:[%s9 + $0x10] sm:$0xf]
    %v94 = vld [vmem:[%s9 + $0x14] sm:$0xf]
    %v95 = vld [vmem:[%s9 + $0x18] sm:$0xf]
    %v96 = vld [vmem:[%s9 + $0x1c] sm:$0xf]
    %v97 = vld [vmem:[%s9 + $0x20] sm:$0xf]
    %v98 = vld [vmem:[%s9 + $0x24] sm:$0xf]
    %v99 = vld [vmem:[%s9 + $0x28] sm:$0xf]
    %v100 = vld [vmem:[%s9 + $0x2c] sm:$0xf]
    %v101 = vld [vmem:[%s9 + $0x30] sm:$0xf]
    %v102 = vld [vmem:[%s9 + $0x34] sm:$0xf]
    %v103 = vld [vmem:[%s9 + $0x38] sm:$0xf]
    %v104 = vld [vmem:[%s9 + $0x3c] sm:$0xf]
    %v105 = vld [vmem:[%s7] sm:$0x1]
    %v107 = vperm.slane %v105, 0
    %v109 = vld [vmem:[%s10] sm:$0x1]
    %v111 = vperm.slane %v109, 0
    %v113 = vld [vmem:[%s2] sm:$0xf]
    %v114 = vld [vmem:[%s2 + $0x4] sm:$0xf]
    %v115 = vld [vmem:[%s2 + $0x8] sm:$0xf]
    %v116 = vld [vmem:[%s2 + $0xc] sm:$0xf]
    %v117 = vld [vmem:[%s2 + $0x10] sm:$0xf]
    %v118 = vld [vmem:[%s2 + $0x14] sm:$0xf]
    %v119 = vld [vmem:[%s2 + $0x18] sm:$0xf]
    %v120 = vld [vmem:[%s2 + $0x1c] sm:$0xf]
    %v121 = vunpack.c.l.bf16 %v113
    %v122 = vunpack.c.l.bf16 %v114
    %v123 = vunpack.c.l.bf16 %v115
    %v124 = vunpack.c.l.bf16 %v116
    %v125 = vunpack.c.l.bf16 %v117
    %v126 = vunpack.c.l.bf16 %v118
    %v127 = vunpack.c.l.bf16 %v119
    %v128 = vunpack.c.l.bf16 %v120
    %v129 = vlaneseq
    %v130 = vshrl.u32 %v129, 7
    %v131 = vld [vmem:[%s3] sm:$0x1]
    %v132 = vperm.slane %v131, 0
    %vm133 = vcmp.lt.s32.totalorder %v130, %v132
    %v134 = vld [vmem:[%s0] sm:$0xf]
    %v135 = vld [vmem:[%s0 + $0x4] sm:$0xf]
    %v136 = vld [vmem:[%s0 + $0x8] sm:$0xf]
    %v137 = vld [vmem:[%s0 + $0xc] sm:$0xf]
    %v138 = vld [vmem:[%s0 + $0x10] sm:$0xf]
    %v139 = vld [vmem:[%s0 + $0x14] sm:$0xf]
    %v140 = vld [vmem:[%s4] sm:$0xff]
    %v141 = vld [vmem:[%s4 + $0x8] sm:$0xf]
    %v142 = vld [vmem:[%s4 + $0xc] sm:$0xff]
    %v143 = vld [vmem:[%s4 + $0x14] sm:$0xf]
    %v144 = vld [vmem:[%s4 + $0x18] sm:$0xff]
    %v145 = vld [vmem:[%s4 + $0x20] sm:$0xf]
    %v146 = vld [vmem:[%s4 + $0x24] sm:$0xff]
    %v147 = vld [vmem:[%s4 + $0x2c] sm:$0xf]
    %v148 = vld [vmem:[%s4 + $0x30] sm:$0xff]
    %v149 = vld [vmem:[%s4 + $0x38] sm:$0xf]
    %v150 = vld [vmem:[%s4 + $0x3c] sm:$0xff]
    %v151 = vld [vmem:[%s4 + $0x44] sm:$0xf]
    %v152 = vld [vmem:[%s4 + $0x48] sm:$0xff]
    %v153 = vld [vmem:[%s4 + $0x50] sm:$0xf]
    %v154 = vld [vmem:[%s4 + $0x54] sm:$0xff]
    %v155 = vld [vmem:[%s4 + $0x5c] sm:$0xf]
    %v156 = vld [vmem:[%s4 + $0x60] sm:$0xff]
    %v157 = vld [vmem:[%s4 + $0x68] sm:$0xf]
    %v158 = vld [vmem:[%s4 + $0x6c] sm:$0xff]
    %v159 = vld [vmem:[%s4 + $0x74] sm:$0xf]
    %v160 = vld [vmem:[%s4 + $0x78] sm:$0xff]
    %v161 = vld [vmem:[%s4 + $0x80] sm:$0xf]
    %v162 = vld [vmem:[%s4 + $0x84] sm:$0xff]
    %v163 = vld [vmem:[%s4 + $0x8c] sm:$0xf]
    %v164 = vld [vmem:[%s4 + $0x90] sm:$0xff]
    %v165 = vld [vmem:[%s4 + $0x98] sm:$0xf]
    %v166 = vld [vmem:[%s4 + $0x9c] sm:$0xff]
    %v167 = vld [vmem:[%s4 + $0xa4] sm:$0xf]
    %v168 = vld [vmem:[%s4 + $0xa8] sm:$0xff]
    %v169 = vld [vmem:[%s4 + $0xb0] sm:$0xf]
    %v170 = vld [vmem:[%s4 + $0xb4] sm:$0xff]
    %v171 = vld [vmem:[%s4 + $0xbc] sm:$0xf]
    %v172 = vld [vmem:[%s6] sm:$0x7]
    %v174 = vperm.slane %v172, 0
    %v175 = vperm.slane %v172, 1
    %v176 = vperm.slane %v172, 2
    %v186 = vunpack.c.l.b16 %v134
    %v187 = vunpack.c.l.b16 %v135
    %v188 = vunpack.c.l.b16 %v136
    %v189 = vunpack.c.l.b16 %v137
    %v190 = vunpack.c.l.b16 %v138
    %v191 = vunpack.c.l.b16 %v139
    %v192 = vpack.c.b16 %v187, %v186
    %v193 = vpack.c.b16 %v189, %v188
    %v194 = vpack.c.b16 %v191, %v190
    %v230 = vunpack.c.l.b16 %v140
    %v231 = vunpack.c.h.b16 %v140
    %v232 = vunpack.c.l.b16 %v141
    %v233 = vunpack.c.l.b16 %v142
    %v234 = vunpack.c.h.b16 %v142
    %v235 = vunpack.c.l.b16 %v143
    %v236 = vunpack.c.l.b16 %v144
    %v237 = vunpack.c.h.b16 %v144
    %v238 = vunpack.c.l.b16 %v145
    %v239 = vunpack.c.l.b16 %v146
    %v240 = vunpack.c.h.b16 %v146
    %v241 = vunpack.c.l.b16 %v147
    %v242 = vunpack.c.l.b16 %v148
    %v243 = vunpack.c.h.b16 %v148
    %v244 = vunpack.c.l.b16 %v149
    %v245 = vunpack.c.l.b16 %v150
    %v246 = vunpack.c.h.b16 %v150
    %v247 = vunpack.c.l.b16 %v151
    %v248 = vunpack.c.l.b16 %v152
    %v249 = vunpack.c.h.b16 %v152
    %v250 = vunpack.c.l.b16 %v153
    %v251 = vunpack.c.l.b16 %v154
    %v252 = vunpack.c.h.b16 %v154
    %v253 = vunpack.c.l.b16 %v155
    %v254 = vunpack.c.l.b16 %v156
    %v255 = vunpack.c.h.b16 %v156
    %v256 = vunpack.c.l.b16 %v157
    %v257 = vunpack.c.l.b16 %v158
    %v258 = vunpack.c.h.b16 %v158
    %v259 = vunpack.c.l.b16 %v159
    %v260 = vunpack.c.l.b16 %v160
    %v261 = vunpack.c.h.b16 %v160
    %v262 = vunpack.c.l.b16 %v161
    %v263 = vunpack.c.l.b16 %v162
    %v264 = vunpack.c.h.b16 %v162
    %v265 = vunpack.c.l.b16 %v163
    %v266 = vunpack.c.l.b16 %v164
    %v267 = vunpack.c.h.b16 %v164
    %v268 = vunpack.c.l.b16 %v165
    %v269 = vunpack.c.l.b16 %v166
    %v270 = vunpack.c.h.b16 %v166
    %v271 = vunpack.c.l.b16 %v167
    %v272 = vunpack.c.l.b16 %v168
    %v273 = vunpack.c.h.b16 %v168
    %v274 = vunpack.c.l.b16 %v169
    %v275 = vunpack.c.l.b16 %v170
    %v276 = vunpack.c.h.b16 %v170
    %v277 = vunpack.c.l.b16 %v171
    %v278 = vpack.c.b16 %v233, %v230
    %v279 = vpack.c.b16 %v234, %v231
    %v280 = vpack.c.b16 %v235, %v232
    %v281 = vpack.c.b16 %v239, %v236
    %v282 = vpack.c.b16 %v240, %v237
    %v283 = vpack.c.b16 %v241, %v238
    %v284 = vpack.c.b16 %v245, %v242
    %v285 = vpack.c.b16 %v246, %v243
    %v286 = vpack.c.b16 %v247, %v244
    %v287 = vpack.c.b16 %v251, %v248
    %v288 = vpack.c.b16 %v252, %v249
    %v289 = vpack.c.b16 %v253, %v250
    %v290 = vpack.c.b16 %v257, %v254
    %v291 = vpack.c.b16 %v258, %v255
    %v292 = vpack.c.b16 %v259, %v256
    %v293 = vpack.c.b16 %v263, %v260
    %v294 = vpack.c.b16 %v264, %v261
    %v295 = vpack.c.b16 %v265, %v262
    %v296 = vpack.c.b16 %v269, %v266
    %v297 = vpack.c.b16 %v270, %v267
    %v298 = vpack.c.b16 %v271, %v268
    %v299 = vpack.c.b16 %v275, %v272
    %v300 = vpack.c.b16 %v276, %v273
    %v301 = vpack.c.b16 %v277, %v274
    %326 = vmatpush.bf16.msra.mxu0 %v299
    %327 = vmatpush.bf16.msra.mxu0 %v296
    %328 = vmatpush.bf16.msra.mxu0 %v293
    %329 = vmatpush.bf16.msra.mxu0 %v290
    %330 = vmatpush.bf16.msra.mxu0 %v287
    %331 = vmatpush.bf16.msra.mxu0 %v284
    %332 = vmatpush.bf16.msra.mxu0 %v281
    %333 = vmatpush.bf16.msra.mxu0 %v278
    %334 = vmatmul.bf16.gmra.mxu0 %v192
    %v335 = vpop.f32.mrf.mxu0
    %v336 = vadd.f32 %v174, %v335
    %v337 = vpop.f32.mrf.mxu0
    %v338 = vadd.f32 %v174, %v337
    %339 = vmatmul.bf16.gmra.mxu0 %v193
    %v340 = vpop.f32.mrf.mxu0
    %v341 = vadd.f32 %v174, %v340
    %v342 = vpop.f32.mrf.mxu0
    %v343 = vadd.f32 %v174, %v342
    %344 = vmatmul.bf16.gmra.mxu0 %v194
    %v345 = vpop.f32.mrf.mxu0
    %v346 = vadd.f32 %v174, %v345
    %v347 = vpop.f32.mrf.mxu0
    %v348 = vadd.f32 %v174, %v347
    %349 = vdwg.mxu0
    %350 = vmatpush.bf16.msra.mxu0 %v300
    %351 = vmatpush.bf16.msra.mxu0 %v297
    %352 = vmatpush.bf16.msra.mxu0 %v294
    %353 = vmatpush.bf16.msra.mxu0 %v291
    %354 = vmatpush.bf16.msra.mxu0 %v288
    %355 = vmatpush.bf16.msra.mxu0 %v285
    %356 = vmatpush.bf16.msra.mxu0 %v282
    %357 = vmatpush.bf16.msra.mxu0 %v279
    %358 = vmatmul.bf16.gmra.mxu0 %v192
    %v359 = vpop.f32.mrf.mxu0
    %v360 = vadd.f32 %v175, %v359
    %v361 = vpop.f32.mrf.mxu0
    %v362 = vadd.f32 %v175, %v361
    %363 = vmatmul.bf16.gmra.mxu0 %v193
    %v364 = vpop.f32.mrf.mxu0
    %v365 = vadd.f32 %v175, %v364
    %v366 = vpop.f32.mrf.mxu0
    %v367 = vadd.f32 %v175, %v366
    %368 = vmatmul.bf16.gmra.mxu0 %v194
    %v369 = vpop.f32.mrf.mxu0
    %v370 = vadd.f32 %v175, %v369
    %v371 = vpop.f32.mrf.mxu0
    %v372 = vadd.f32 %v175, %v371
    %373 = vdwg.mxu0
    %374 = vmatpush.bf16.msra.mxu0 %v301
    %375 = vmatpush.bf16.msra.mxu0 %v298
    %376 = vmatpush.bf16.msra.mxu0 %v295
    %377 = vmatpush.bf16.msra.mxu0 %v292
    %378 = vmatpush.bf16.msra.mxu0 %v289
    %379 = vmatpush.bf16.msra.mxu0 %v286
    %380 = vmatpush.bf16.msra.mxu0 %v283
    %381 = vmatpush.bf16.msra.mxu0 %v280
    %382 = vmatmul.bf16.gmra.mxu0 %v192
    %v383 = vpop.f32.mrf.mxu0
    %v384 = vadd.f32 %v176, %v383
    %v385 = vpop.f32.mrf.mxu0
    %v386 = vadd.f32 %v176, %v385
    %387 = vmatmul.bf16.gmra.mxu0 %v193
    %v388 = vpop.f32.mrf.mxu0
    %v389 = vadd.f32 %v176, %v388
    %v390 = vpop.f32.mrf.mxu0
    %v391 = vadd.f32 %v176, %v390
    %392 = vmatmul.bf16.gmra.mxu0 %v194
    %v393 = vpop.f32.mrf.mxu0
    %v394 = vadd.f32 %v176, %v393
    %v395 = vpop.f32.mrf.mxu0
    %v396 = vadd.f32 %v176, %v395
    %397 = vdwg.mxu0
    %398 = vst [vmem:[#allocation2] sm:$0xff] %v336
    %399 = vst [vmem:[#allocation2 + $0x8] sm:$0xff] %v360
    %400 = vst [vmem:[#allocation2 + $0x10] sm:$0xff] %v384
    %401 = vst [vmem:[#allocation2 + $0x18] sm:$0xff] %v338
    %402 = vst [vmem:[#allocation2 + $0x20] sm:$0xff] %v362
    %403 = vst [vmem:[#allocation2 + $0x28] sm:$0xff] %v386
    %404 = vst [vmem:[#allocation2 + $0x30] sm:$0xff] %v341
    %405 = vst [vmem:[#allocation2 + $0x38] sm:$0xff] %v365
    %406 = vst [vmem:[#allocation2 + $0x40] sm:$0xff] %v389
    %407 = vst [vmem:[#allocation2 + $0x48] sm:$0xff] %v343
    %408 = vst [vmem:[#allocation2 + $0x50] sm:$0xff] %v367
    %409 = vst [vmem:[#allocation2 + $0x58] sm:$0xff] %v391
    %410 = vst [vmem:[#allocation2 + $0x60] sm:$0xff] %v346
    %411 = vst [vmem:[#allocation2 + $0x68] sm:$0xff] %v370
    %412 = vst [vmem:[#allocation2 + $0x70] sm:$0xff] %v394
    %413 = vst [vmem:[#allocation2 + $0x78] sm:$0xff] %v348
    %414 = vst [vmem:[#allocation2 + $0x80] sm:$0xff] %v372
    %415 = vst [vmem:[#allocation2 + $0x88] sm:$0xff] %v396
    %v416 = vld [vmem:[%s1] sm:$0xff]
    %s417 = smul.u32 0, 3
    %s418 = smul.addr %s417, 8
    %s419 = scalar_lea.vmem [#allocation2], %s418
    %v420 = vld [vmem:[%s419] sm:$0xff]
    %v421 = vld [vmem:[%s419 + $0x8] sm:$0xff]
    %v422 = vld [vmem:[%s419 + $0x10] sm:$0xff]
    %v423 = vpack.c.bf16 %v416, %v416
    %v456 = vunpack.c.l.b16 %v41
    %v457 = vunpack.c.h.b16 %v41
    %v458 = vunpack.c.l.b16 %v42
    %v459 = vunpack.c.l.b16 %v43
    %v460 = vunpack.c.h.b16 %v43
    %v461 = vunpack.c.l.b16 %v44
    %v462 = vunpack.c.l.b16 %v45
    %v463 = vunpack.c.h.b16 %v45
    %v464 = vunpack.c.l.b16 %v46
    %v465 = vunpack.c.l.b16 %v47
    %v466 = vunpack.c.h.b16 %v47
    %v467 = vunpack.c.l.b16 %v48
    %v468 = vunpack.c.l.b16 %v49
    %v469 = vunpack.c.h.b16 %v49
    %v470 = vunpack.c.l.b16 %v50
    %v471 = vunpack.c.l.b16 %v51
    %v472 = vunpack.c.h.b16 %v51
    %v473 = vunpack.c.l.b16 %v52
    %v474 = vunpack.c.l.b16 %v53
    %v475 = vunpack.c.h.b16 %v53
    %v476 = vunpack.c.l.b16 %v54
    %v477 = vunpack.c.l.b16 %v55
    %v478 = vunpack.c.h.b16 %v55
    %v479 = vunpack.c.l.b16 %v56
    %v480 = vunpack.c.l.b16 %v57
    %v481 = vunpack.c.h.b16 %v57
    %v482 = vunpack.c.l.b16 %v58
    %v483 = vunpack.c.l.b16 %v59
    %v484 = vunpack.c.h.b16 %v59
    %v485 = vunpack.c.l.b16 %v60
    %v486 = vunpack.c.l.b16 %v61
    %v487 = vunpack.c.h.b16 %v61
    %v488 = vunpack.c.l.b16 %v62
    %v489 = vunpack.c.l.b16 %v63
    %v490 = vunpack.c.h.b16 %v63
    %v491 = vunpack.c.l.b16 %v64
    %v492 = vunpack.c.l.b16 %v65
    %v493 = vunpack.c.h.b16 %v65
    %v494 = vunpack.c.l.b16 %v66
    %v495 = vunpack.c.l.b16 %v67
    %v496 = vunpack.c.h.b16 %v67
    %v497 = vunpack.c.l.b16 %v68
    %v498 = vunpack.c.l.b16 %v69
    %v499 = vunpack.c.h.b16 %v69
    %v500 = vunpack.c.l.b16 %v70
    %v501 = vunpack.c.l.b16 %v71
    %v502 = vunpack.c.h.b16 %v71
    %v503 = vunpack.c.l.b16 %v72
    %v504 = vpack.c.b16 %v459, %v456
    %v505 = vpack.c.b16 %v460, %v457
    %v506 = vpack.c.b16 %v461, %v458
    %v507 = vpack.c.b16 %v465, %v462
    %v508 = vpack.c.b16 %v466, %v463
    %v509 = vpack.c.b16 %v467, %v464
    %v510 = vpack.c.b16 %v471, %v468
    %v511 = vpack.c.b16 %v472, %v469
    %v512 = vpack.c.b16 %v473, %v470
    %v513 = vpack.c.b16 %v477, %v474
    %v514 = vpack.c.b16 %v478, %v475
    %v515 = vpack.c.b16 %v479, %v476
    %v516 = vpack.c.b16 %v483, %v480
    %v517 = vpack.c.b16 %v484, %v481
    %v518 = vpack.c.b16 %v485, %v482
    %v519 = vpack.c.b16 %v489, %v486
    %v520 = vpack.c.b16 %v490, %v487
    %v521 = vpack.c.b16 %v491, %v488
    %v522 = vpack.c.b16 %v495, %v492
    %v523 = vpack.c.b16 %v496, %v493
    %v524 = vpack.c.b16 %v497, %v494
    %v525 = vpack.c.b16 %v501, %v498
    %v526 = vpack.c.b16 %v502, %v499
    %v527 = vpack.c.b16 %v503, %v500
    %552 = vmatpush.bf16.msra.mxu0 %v525
    %553 = vmatpush.bf16.msra.mxu0 %v522
    %554 = vmatpush.bf16.msra.mxu0 %v519
    %555 = vmatpush.bf16.msra.mxu0 %v516
    %556 = vmatpush.bf16.msra.mxu0 %v513
    %557 = vmatpush.bf16.msra.mxu0 %v510
    %558 = vmatpush.bf16.msra.mxu0 %v507
    %559 = vmatpush.bf16.msra.mxu0 %v504
    %560 = vmatmul.bf16.gmra.mxu0 %v423
    %v561 = vpop.f32.mrf.mxu0
    %v562 = vadd.f32 0.0, %v561
    %v563 = vpop.f32.mrf.mxu0
    %564 = vdwg.mxu0
    %565 = vmatpush.bf16.msra.mxu0 %v526
    %566 = vmatpush.bf16.msra.mxu0 %v523
    %567 = vmatpush.bf16.msra.mxu0 %v520
    %568 = vmatpush.bf16.msra.mxu0 %v517
    %569 = vmatpush.bf16.msra.mxu0 %v514
    %570 = vmatpush.bf16.msra.mxu0 %v511
    %571 = vmatpush.bf16.msra.mxu0 %v508
    %572 = vmatpush.bf16.msra.mxu0 %v505
    %573 = vmatmul.bf16.gmra.mxu0 %v423
    %v574 = vpop.f32.mrf.mxu0
    %v575 = vadd.f32 0.0, %v574
    %v576 = vpop.f32.mrf.mxu0
    %577 = vdwg.mxu0
    %578 = vmatpush.bf16.msra.mxu0 %v527
    %579 = vmatpush.bf16.msra.mxu0 %v524
    %580 = vmatpush.bf16.msra.mxu0 %v521
    %581 = vmatpush.bf16.msra.mxu0 %v518
    %582 = vmatpush.bf16.msra.mxu0 %v515
    %583 = vmatpush.bf16.msra.mxu0 %v512
    %584 = vmatpush.bf16.msra.mxu0 %v509
    %585 = vmatpush.bf16.msra.mxu0 %v506
    %586 = vmatmul.bf16.gmra.mxu0 %v423
    %v587 = vpop.f32.mrf.mxu0
    %v588 = vadd.f32 0.0, %v587
    %v589 = vpop.f32.mrf.mxu0
    %590 = vdwg.mxu0
    %v591 = vadd.f32 %v420, %v562
    %v592 = vxor.u32 %v591, 2147483648
    %v593 = vmul.f32 %v592, 1.442695
    %v594 = vpow.pop %v593
    %v595 = vadd.f32 %v594, 1.0
    %v596 = vrcp.pop %v595
    %v597 = vmul.f32 %v595, %v596
    %v598 = vsub.f32 1.0, %v597
    %v599 = vmul.f32 %v596, %v598
    %v600 = vadd.f32 %v596, %v599
    %vm601 = vweird.f32 %v595
    %vm602 = vweird.f32 %v596
    %vm603 = vmor %vm601, %vm602
    %v604 = vsel %vm603, %v596, %v600
    %v605 = vand.u32 2147483647, %v595
    %vm606 = vcmp.eq.f32.partialorder %v605, 8.507059e+37
    %v607 = vand.u32 %v595, 2147483648
    %v608 = vor.u32 1.1754944e-38, %v607
    %v609 = vsel %vm606, %v608, %v604
    %v610 = vmul.f32 1.0, %v609
    %v611 = vadd.f32 %v421, %v575
    %v612 = vxor.u32 %v611, 2147483648
    %v613 = vmul.f32 %v612, 1.442695
    %v614 = vpow.pop %v613
    %v615 = vadd.f32 %v614, 1.0
    %v616 = vrcp.pop %v615
    %v617 = vmul.f32 %v615, %v616
    %v618 = vsub.f32 1.0, %v617
    %v619 = vmul.f32 %v616, %v618
    %v620 = vadd.f32 %v616, %v619
    %vm621 = vweird.f32 %v615
    %vm622 = vweird.f32 %v616
    %vm623 = vmor %vm621, %vm622
    %v624 = vsel %vm623, %v616, %v620
    %v625 = vand.u32 2147483647, %v615
    %vm626 = vcmp.eq.f32.partialorder %v625, 8.507059e+37
    %v627 = vand.u32 %v615, 2147483648
    %v628 = vor.u32 1.1754944e-38, %v627
    %v629 = vsel %vm626, %v628, %v624
    %v630 = vmul.f32 1.0, %v629
    %v631 = vadd.f32 %v588, %v107
    %v632 = vmul.f32 %v610, %v631
    %v633 = vadd.f32 %v422, %v632
    %v634 = vtanh.pop %v633
    %v635 = vsub.f32 1.0, %v630
    %v636 = vmul.f32 %v635, %v634
    %v637 = vmul.f32 %v630, %v416
    %v638 = vadd.f32 %v636, %v637
    %v639 = vmul.f32 %v638, %v121
    %v640 = vmul.f32 %v638, %v122
    %v641 = vmul.f32 %v638, %v123
    %v642 = vmul.f32 %v638, %v124
    %v643 = vmul.f32 %v638, %v125
    %v644 = vmul.f32 %v638, %v126
    %v645 = vmul.f32 %v638, %v127
    %v646 = vmul.f32 %v638, %v128
    %647 = vadd.xlane.f32.xlu0 %v639
    %v648 = vpop.xlane.xlu0 %647
    %649 = vadd.xlane.f32.xlu0 %v640
    %v650 = vpop.xlane.xlu0 %649
    %651 = vadd.xlane.f32.xlu0 %v641
    %v652 = vpop.xlane.xlu0 %651
    %653 = vadd.xlane.f32.xlu0 %v642
    %v654 = vpop.xlane.xlu0 %653
    %655 = vadd.xlane.f32.xlu0 %v643
    %v656 = vpop.xlane.xlu0 %655
    %657 = vadd.xlane.f32.xlu0 %v644
    %v658 = vpop.xlane.xlu0 %657
    %659 = vadd.xlane.f32.xlu0 %v645
    %v660 = vpop.xlane.xlu0 %659
    %661 = vadd.xlane.f32.xlu0 %v646
    %v662 = vpop.xlane.xlu0 %661
    %v671 = vlaneseq
    %v672 = vand.u32 %v671, 127
    %v673 = vperm.slane %v648, %v672
    %v674 = vperm.slane %v650, %v672
    %v675 = vperm.slane %v652, %v672
    %v676 = vperm.slane %v654, %v672
    %v677 = vperm.slane %v656, %v672
    %v678 = vperm.slane %v658, %v672
    %v679 = vperm.slane %v660, %v672
    %v680 = vperm.slane %v662, %v672
    %vm681 = vcmask 1041409
    %v682 = vsel %vm681, %v674, %v673
    %vm683 = vcmask 1042434
    %v684 = vsel %vm683, %v675, %v682
    %vm685 = vcmask 1043459
    %v686 = vsel %vm685, %v676, %v684
    %vm687 = vcmask 1044484
    %v688 = vsel %vm687, %v677, %v686
    %vm689 = vcmask 1045509
    %v690 = vsel %vm689, %v678, %v688
    %vm691 = vcmask 1046534
    %v692 = vsel %vm691, %v679, %v690
    %vm693 = vcmask 1047559
    %v694 = vsel %vm693, %v680, %v692
    %v696 = vsel %vm133, %v694, -1e+09
    %vm697 = vcmask 64512
    %v698 = vsel %vm697, %v696, -inf
    %v699 = vrot.slane %v698, 4
    %v700 = vmax.f32 %v698, %v699
    %v701 = vrot.slane %v700, 2
    %v702 = vmax.f32 %v700, %v701
    %v703 = vrot.slane %v702, 1
    %v704 = vmax.f32 %v702, %v703
    %v705 = vsub.f32 %v696, %v704
    %v706 = vmul.f32 %v705, 1.442695
    %v707 = vpow.pop %v706
    %v708 = vsel %vm697, %v707, 0.0
    %v709 = vrot.slane %v708, 4
    %v710 = vadd.f32 %v708, %v709
    %v711 = vrot.slane %v710, 2
    %v712 = vadd.f32 %v710, %v711
    %v713 = vrot.slane %v712, 1
    %v714 = vadd.f32 %v712, %v713
    %v715 = vrcp.pop %v714
    %v716 = vmul.f32 %v707, %v715
    %v717 = vperm.slane %v716, 0
    %v718 = vlaneseq
    %v719 = vshrl.u32 %v718, 7
    %721 = vset.pattern.permute.xlu0 %v719
    %722 = vperm.xlu0 %721, %v717
    %v723 = vpop.permute.xlu0 %722
    %v724 = vperm.slane %v716, 1
    %v725 = vlaneseq
    %v726 = vshrl.u32 %v725, 7
    %728 = vset.pattern.permute.xlu0 %v726
    %729 = vperm.xlu0 %728, %v724
    %v730 = vpop.permute.xlu0 %729
    %v731 = vperm.slane %v716, 2
    %v732 = vlaneseq
    %v733 = vshrl.u32 %v732, 7
    %735 = vset.pattern.permute.xlu0 %v733
    %736 = vperm.xlu0 %735, %v731
    %v737 = vpop.permute.xlu0 %736
    %v738 = vperm.slane %v716, 3
    %v739 = vlaneseq
    %v740 = vshrl.u32 %v739, 7
    %742 = vset.pattern.permute.xlu0 %v740
    %743 = vperm.xlu0 %742, %v738
    %v744 = vpop.permute.xlu0 %743
    %v745 = vperm.slane %v716, 4
    %v746 = vlaneseq
    %v747 = vshrl.u32 %v746, 7
    %749 = vset.pattern.permute.xlu0 %v747
    %750 = vperm.xlu0 %749, %v745
    %v751 = vpop.permute.xlu0 %750
    %v752 = vperm.slane %v716, 5
    %v753 = vlaneseq
    %v754 = vshrl.u32 %v753, 7
    %756 = vset.pattern.permute.xlu0 %v754
    %757 = vperm.xlu0 %756, %v752
    %v758 = vpop.permute.xlu0 %757
    %v759 = vperm.slane %v716, 6
    %v760 = vlaneseq
    %v761 = vshrl.u32 %v760, 7
    %763 = vset.pattern.permute.xlu0 %v761
    %764 = vperm.xlu0 %763, %v759
    %v765 = vpop.permute.xlu0 %764
    %v766 = vperm.slane %v716, 7
    %v767 = vlaneseq
    %v768 = vshrl.u32 %v767, 7
    %770 = vset.pattern.permute.xlu0 %v768
    %771 = vperm.xlu0 %770, %v766
    %v772 = vpop.permute.xlu0 %771
    %v773 = vmul.f32 %v723, %v121
    %v774 = vmul.f32 %v730, %v122
    %v775 = vmul.f32 %v737, %v123
    %v776 = vmul.f32 %v744, %v124
    %v777 = vmul.f32 %v751, %v125
    %v778 = vmul.f32 %v758, %v126
    %v779 = vmul.f32 %v765, %v127
    %v780 = vmul.f32 %v772, %v128
    %v781 = vadd.f32 %v773, %v774
    %v782 = vadd.f32 %v781, %v775
    %v783 = vadd.f32 %v782, %v776
    %v784 = vadd.f32 %v783, %v777
    %v785 = vadd.f32 %v784, %v778
    %v786 = vadd.f32 %v785, %v779
    %v787 = vadd.f32 %v786, %v780
    %v788 = vpack.c.bf16 %v638, %v638
    %v789 = vpack.c.bf16 %v787, %v787
    %v806 = vunpack.c.l.b16 %v89
    %v807 = vunpack.c.l.b16 %v90
    %v808 = vunpack.c.l.b16 %v91
    %v809 = vunpack.c.l.b16 %v92
    %v810 = vunpack.c.l.b16 %v93
    %v811 = vunpack.c.l.b16 %v94
    %v812 = vunpack.c.l.b16 %v95
    %v813 = vunpack.c.l.b16 %v96
    %v814 = vunpack.c.l.b16 %v97
    %v815 = vunpack.c.l.b16 %v98
    %v816 = vunpack.c.l.b16 %v99
    %v817 = vunpack.c.l.b16 %v100
    %v818 = vunpack.c.l.b16 %v101
    %v819 = vunpack.c.l.b16 %v102
    %v820 = vunpack.c.l.b16 %v103
    %v821 = vunpack.c.l.b16 %v104
    %v822 = vpack.c.b16 %v807, %v806
    %v823 = vpack.c.b16 %v809, %v808
    %v824 = vpack.c.b16 %v811, %v810
    %v825 = vpack.c.b16 %v813, %v812
    %v826 = vpack.c.b16 %v815, %v814
    %v827 = vpack.c.b16 %v817, %v816
    %v828 = vpack.c.b16 %v819, %v818
    %v829 = vpack.c.b16 %v821, %v820
    %838 = vmatpush.bf16.msra.mxu0 %v829
    %839 = vmatpush.bf16.msra.mxu0 %v828
    %840 = vmatpush.bf16.msra.mxu0 %v827
    %841 = vmatpush.bf16.msra.mxu0 %v826
    %842 = vmatpush.bf16.msra.mxu0 %v825
    %843 = vmatpush.bf16.msra.mxu0 %v824
    %844 = vmatpush.bf16.msra.mxu0 %v823
    %845 = vmatpush.bf16.msra.mxu0 %v822
    %846 = vmatmul.bf16.gmra.mxu0 %v788
    %v847 = vpop.f32.mrf.mxu0
    %v848 = vadd.f32 0.0, %v847
    %v849 = vpop.f32.mrf.mxu0
    %850 = vdwg.mxu0
    %v867 = vunpack.c.l.b16 %v73
    %v868 = vunpack.c.l.b16 %v74
    %v869 = vunpack.c.l.b16 %v75
    %v870 = vunpack.c.l.b16 %v76
    %v871 = vunpack.c.l.b16 %v77
    %v872 = vunpack.c.l.b16 %v78
    %v873 = vunpack.c.l.b16 %v79
    %v874 = vunpack.c.l.b16 %v80
    %v875 = vunpack.c.l.b16 %v81
    %v876 = vunpack.c.l.b16 %v82
    %v877 = vunpack.c.l.b16 %v83
    %v878 = vunpack.c.l.b16 %v84
    %v879 = vunpack.c.l.b16 %v85
    %v880 = vunpack.c.l.b16 %v86
    %v881 = vunpack.c.l.b16 %v87
    %v882 = vunpack.c.l.b16 %v88
    %v883 = vpack.c.b16 %v868, %v867
    %v884 = vpack.c.b16 %v870, %v869
    %v885 = vpack.c.b16 %v872, %v871
    %v886 = vpack.c.b16 %v874, %v873
    %v887 = vpack.c.b16 %v876, %v875
    %v888 = vpack.c.b16 %v878, %v877
    %v889 = vpack.c.b16 %v880, %v879
    %v890 = vpack.c.b16 %v882, %v881
    %899 = vmatpush.bf16.msra.mxu0 %v890
    %900 = vmatpush.bf16.msra.mxu0 %v889
    %901 = vmatpush.bf16.msra.mxu0 %v888
    %902 = vmatpush.bf16.msra.mxu0 %v887
    %903 = vmatpush.bf16.msra.mxu0 %v886
    %904 = vmatpush.bf16.msra.mxu0 %v885
    %905 = vmatpush.bf16.msra.mxu0 %v884
    %906 = vmatpush.bf16.msra.mxu0 %v883
    %907 = vmatmul.bf16.gmra.mxu0 %v789
    %v908 = vpop.f32.mrf.mxu0
    %v909 = vadd.f32 %v848, %v908
    %v910 = vpop.f32.mrf.mxu0
    %911 = vdwg.mxu0
    %v912 = vadd.f32 %v909, %v111
    %v913 = vtanh.pop %v912
    %v914 = vpack.c.bf16 %v913, %v913
    %915 = vst [vmem:[%s11] sm:$0xf] %v914
    %s916 = smul.u32 1, 3
    %s917 = smul.addr %s916, 8
    %s918 = scalar_lea.vmem [#allocation2], %s917
    %v919 = vld [vmem:[%s918] sm:$0xff]
    %v920 = vld [vmem:[%s918 + $0x8] sm:$0xff]
    %v921 = vld [vmem:[%s918 + $0x10] sm:$0xff]
    %922 = vmatpush.bf16.msra.mxu0 %v525
    %923 = vmatpush.bf16.msra.mxu0 %v522
    %924 = vmatpush.bf16.msra.mxu0 %v519
    %925 = vmatpush.bf16.msra.mxu0 %v516
    %926 = vmatpush.bf16.msra.mxu0 %v513
    %927 = vmatpush.bf16.msra.mxu0 %v510
    %928 = vmatpush.bf16.msra.mxu0 %v507
    %929 = vmatpush.bf16.msra.mxu0 %v504
    %930 = vmatmul.bf16.gmra.mxu0 %v788
    %v931 = vpop.f32.mrf.mxu0
    %v932 = vadd.f32 0.0, %v931
    %v933 = vpop.f32.mrf.mxu0
    %934 = vdwg.mxu0
    %935 = vmatpush.bf16.msra.mxu0 %v526
    %936 = vmatpush.bf16.msra.mxu0 %v523
    %937 = vmatpush.bf16.msra.mxu0 %v520
    %938 = vmatpush.bf16.msra.mxu0 %v517
    %939 = vmatpush.bf16.msra.mxu0 %v514
    %940 = vmatpush.bf16.msra.mxu0 %v511
    %941 = vmatpush.bf16.msra.mxu0 %v508
    %942 = vmatpush.bf16.msra.mxu0 %v505
    %943 = vmatmul.bf16.gmra.mxu0 %v788
    %v944 = vpop.f32.mrf.mxu0
    %v945 = vadd.f32 0.0, %v944
    %v946 = vpop.f32.mrf.mxu0
    %947 = vdwg.mxu0
    %948 = vmatpush.bf16.msra.mxu0 %v527
    %949 = vmatpush.bf16.msra.mxu0 %v524
    %950 = vmatpush.bf16.msra.mxu0 %v521
    %951 = vmatpush.bf16.msra.mxu0 %v518
    %952 = vmatpush.bf16.msra.mxu0 %v515
    %953 = vmatpush.bf16.msra.mxu0 %v512
    %954 = vmatpush.bf16.msra.mxu0 %v509
    %955 = vmatpush.bf16.msra.mxu0 %v506
    %956 = vmatmul.bf16.gmra.mxu0 %v788
    %v957 = vpop.f32.mrf.mxu0
    %v958 = vadd.f32 0.0, %v957
    %v959 = vpop.f32.mrf.mxu0
    %960 = vdwg.mxu0
    %v961 = vadd.f32 %v919, %v932
    %v962 = vxor.u32 %v961, 2147483648
    %v963 = vmul.f32 %v962, 1.442695
    %v964 = vpow.pop %v963
    %v965 = vadd.f32 %v964, 1.0
    %v966 = vrcp.pop %v965
    %v967 = vmul.f32 %v965, %v966
    %v968 = vsub.f32 1.0, %v967
    %v969 = vmul.f32 %v966, %v968
    %v970 = vadd.f32 %v966, %v969
    %vm971 = vweird.f32 %v965
    %vm972 = vweird.f32 %v966
    %vm973 = vmor %vm971, %vm972
    %v974 = vsel %vm973, %v966, %v970
    %v975 = vand.u32 2147483647, %v965
    %vm976 = vcmp.eq.f32.partialorder %v975, 8.507059e+37
    %v977 = vand.u32 %v965, 2147483648
    %v978 = vor.u32 1.1754944e-38, %v977
    %v979 = vsel %vm976, %v978, %v974
    %v980 = vmul.f32 1.0, %v979
    %v981 = vadd.f32 %v920, %v945
    %v982 = vxor.u32 %v981, 2147483648
    %v983 = vmul.f32 %v982, 1.442695
    %v984 = vpow.pop %v983
    %v985 = vadd.f32 %v984, 1.0
    %v986 = vrcp.pop %v985
    %v987 = vmul.f32 %v985, %v986
    %v988 = vsub.f32 1.0, %v987
    %v989 = vmul.f32 %v986, %v988
    %v990 = vadd.f32 %v986, %v989
    %vm991 = vweird.f32 %v985
    %vm992 = vweird.f32 %v986
    %vm993 = vmor %vm991, %vm992
    %v994 = vsel %vm993, %v986, %v990
    %v995 = vand.u32 2147483647, %v985
    %vm996 = vcmp.eq.f32.partialorder %v995, 8.507059e+37
    %v997 = vand.u32 %v985, 2147483648
    %v998 = vor.u32 1.1754944e-38, %v997
    %v999 = vsel %vm996, %v998, %v994
    %v1000 = vmul.f32 1.0, %v999
    %v1001 = vadd.f32 %v958, %v107
    %v1002 = vmul.f32 %v980, %v1001
    %v1003 = vadd.f32 %v921, %v1002
    %v1004 = vtanh.pop %v1003
    %v1005 = vsub.f32 1.0, %v1000
    %v1006 = vmul.f32 %v1005, %v1004
    %v1007 = vmul.f32 %v1000, %v638
    %v1008 = vadd.f32 %v1006, %v1007
    %v1009 = vmul.f32 %v1008, %v121
    %v1010 = vmul.f32 %v1008, %v122
    %v1011 = vmul.f32 %v1008, %v123
    %v1012 = vmul.f32 %v1008, %v124
    %v1013 = vmul.f32 %v1008, %v125
    %v1014 = vmul.f32 %v1008, %v126
    %v1015 = vmul.f32 %v1008, %v127
    %v1016 = vmul.f32 %v1008, %v128
    %1017 = vadd.xlane.f32.xlu0 %v1009
    %v1018 = vpop.xlane.xlu0 %1017
    %1019 = vadd.xlane.f32.xlu0 %v1010
    %v1020 = vpop.xlane.xlu0 %1019
    %1021 = vadd.xlane.f32.xlu0 %v1011
    %v1022 = vpop.xlane.xlu0 %1021
    %1023 = vadd.xlane.f32.xlu0 %v1012
    %v1024 = vpop.xlane.xlu0 %1023
    %1025 = vadd.xlane.f32.xlu0 %v1013
    %v1026 = vpop.xlane.xlu0 %1025
    %1027 = vadd.xlane.f32.xlu0 %v1014
    %v1028 = vpop.xlane.xlu0 %1027
    %1029 = vadd.xlane.f32.xlu0 %v1015
    %v1030 = vpop.xlane.xlu0 %1029
    %1031 = vadd.xlane.f32.xlu0 %v1016
    %v1032 = vpop.xlane.xlu0 %1031
    %v1041 = vperm.slane %v1018, %v672
    %v1042 = vperm.slane %v1020, %v672
    %v1043 = vperm.slane %v1022, %v672
    %v1044 = vperm.slane %v1024, %v672
    %v1045 = vperm.slane %v1026, %v672
    %v1046 = vperm.slane %v1028, %v672
    %v1047 = vperm.slane %v1030, %v672
    %v1048 = vperm.slane %v1032, %v672
    %v1049 = vsel %vm681, %v1042, %v1041
    %v1050 = vsel %vm683, %v1043, %v1049
    %v1051 = vsel %vm685, %v1044, %v1050
    %v1052 = vsel %vm687, %v1045, %v1051
    %v1053 = vsel %vm689, %v1046, %v1052
    %v1054 = vsel %vm691, %v1047, %v1053
    %v1055 = vsel %vm693, %v1048, %v1054
    %v1057 = vsel %vm133, %v1055, -1e+09
    %v1058 = vsel %vm697, %v1057, -inf
    %v1059 = vrot.slane %v1058, 4
    %v1060 = vmax.f32 %v1058, %v1059
    %v1061 = vrot.slane %v1060, 2
    %v1062 = vmax.f32 %v1060, %v1061
    %v1063 = vrot.slane %v1062, 1
    %v1064 = vmax.f32 %v1062, %v1063
    %v1065 = vsub.f32 %v1057, %v1064
    %v1066 = vmul.f32 %v1065, 1.442695
    %v1067 = vpow.pop %v1066
    %v1068 = vsel %vm697, %v1067, 0.0
    %v1069 = vrot.slane %v1068, 4
    %v1070 = vadd.f32 %v1068, %v1069
    %v1071 = vrot.slane %v1070, 2
    %v1072 = vadd.f32 %v1070, %v1071
    %v1073 = vrot.slane %v1072, 1
    %v1074 = vadd.f32 %v1072, %v1073
    %v1075 = vrcp.pop %v1074
    %v1076 = vmul.f32 %v1067, %v1075
    %v1077 = vperm.slane %v1076, 0
    %v1078 = vlaneseq
    %v1079 = vshrl.u32 %v1078, 7
    %1081 = vset.pattern.permute.xlu0 %v1079
    %1082 = vperm.xlu0 %1081, %v1077
    %v1083 = vpop.permute.xlu0 %1082
    %v1084 = vperm.slane %v1076, 1
    %v1085 = vlaneseq
    %v1086 = vshrl.u32 %v1085, 7
    %1088 = vset.pattern.permute.xlu0 %v1086
    %1089 = vperm.xlu0 %1088, %v1084
    %v1090 = vpop.permute.xlu0 %1089
    %v1091 = vperm.slane %v1076, 2
    %v1092 = vlaneseq
    %v1093 = vshrl.u32 %v1092, 7
    %1095 = vset.pattern.permute.xlu0 %v1093
    %1096 = vperm.xlu0 %1095, %v1091
    %v1097 = vpop.permute.xlu0 %1096
    %v1098 = vperm.slane %v1076, 3
    %v1099 = vlaneseq
    %v1100 = vshrl.u32 %v1099, 7
    %1102 = vset.pattern.permute.xlu0 %v1100
    %1103 = vperm.xlu0 %1102, %v1098
    %v1104 = vpop.permute.xlu0 %1103
    %v1105 = vperm.slane %v1076, 4
    %v1106 = vlaneseq
    %v1107 = vshrl.u32 %v1106, 7
    %1109 = vset.pattern.permute.xlu0 %v1107
    %1110 = vperm.xlu0 %1109, %v1105
    %v1111 = vpop.permute.xlu0 %1110
    %v1112 = vperm.slane %v1076, 5
    %v1113 = vlaneseq
    %v1114 = vshrl.u32 %v1113, 7
    %1116 = vset.pattern.permute.xlu0 %v1114
    %1117 = vperm.xlu0 %1116, %v1112
    %v1118 = vpop.permute.xlu0 %1117
    %v1119 = vperm.slane %v1076, 6
    %v1120 = vlaneseq
    %v1121 = vshrl.u32 %v1120, 7
    %1123 = vset.pattern.permute.xlu0 %v1121
    %1124 = vperm.xlu0 %1123, %v1119
    %v1125 = vpop.permute.xlu0 %1124
    %v1126 = vperm.slane %v1076, 7
    %v1127 = vlaneseq
    %v1128 = vshrl.u32 %v1127, 7
    %1130 = vset.pattern.permute.xlu0 %v1128
    %1131 = vperm.xlu0 %1130, %v1126
    %v1132 = vpop.permute.xlu0 %1131
    %v1133 = vmul.f32 %v1083, %v121
    %v1134 = vmul.f32 %v1090, %v122
    %v1135 = vmul.f32 %v1097, %v123
    %v1136 = vmul.f32 %v1104, %v124
    %v1137 = vmul.f32 %v1111, %v125
    %v1138 = vmul.f32 %v1118, %v126
    %v1139 = vmul.f32 %v1125, %v127
    %v1140 = vmul.f32 %v1132, %v128
    %v1141 = vadd.f32 %v1133, %v1134
    %v1142 = vadd.f32 %v1141, %v1135
    %v1143 = vadd.f32 %v1142, %v1136
    %v1144 = vadd.f32 %v1143, %v1137
    %v1145 = vadd.f32 %v1144, %v1138
    %v1146 = vadd.f32 %v1145, %v1139
    %v1147 = vadd.f32 %v1146, %v1140
    %v1148 = vpack.c.bf16 %v1008, %v1008
    %v1149 = vpack.c.bf16 %v1147, %v1147
    %1150 = vmatpush.bf16.msra.mxu0 %v829
    %1151 = vmatpush.bf16.msra.mxu0 %v828
    %1152 = vmatpush.bf16.msra.mxu0 %v827
    %1153 = vmatpush.bf16.msra.mxu0 %v826
    %1154 = vmatpush.bf16.msra.mxu0 %v825
    %1155 = vmatpush.bf16.msra.mxu0 %v824
    %1156 = vmatpush.bf16.msra.mxu0 %v823
    %1157 = vmatpush.bf16.msra.mxu0 %v822
    %1158 = vmatmul.bf16.gmra.mxu0 %v1148
    %v1159 = vpop.f32.mrf.mxu0
    %v1160 = vadd.f32 0.0, %v1159
    %v1161 = vpop.f32.mrf.mxu0
    %1162 = vdwg.mxu0
    %1163 = vmatpush.bf16.msra.mxu0 %v890
    %1164 = vmatpush.bf16.msra.mxu0 %v889
    %1165 = vmatpush.bf16.msra.mxu0 %v888
    %1166 = vmatpush.bf16.msra.mxu0 %v887
    %1167 = vmatpush.bf16.msra.mxu0 %v886
    %1168 = vmatpush.bf16.msra.mxu0 %v885
    %1169 = vmatpush.bf16.msra.mxu0 %v884
    %1170 = vmatpush.bf16.msra.mxu0 %v883
    %1171 = vmatmul.bf16.gmra.mxu0 %v1149
    %v1172 = vpop.f32.mrf.mxu0
    %v1173 = vadd.f32 %v1160, %v1172
    %v1174 = vpop.f32.mrf.mxu0
    %1175 = vdwg.mxu0
    %v1176 = vadd.f32 %v1173, %v111
    %v1177 = vtanh.pop %v1176
    %v1178 = vpack.c.bf16 %v1177, %v1177
    %s1179 = scalar_lea.vmem %s11, 4
    %1180 = vst [vmem:[%s1179] sm:$0xf] %v1178
    %s1181 = smul.u32 2, 3
    %s1182 = smul.addr %s1181, 8
    %s1183 = scalar_lea.vmem [#allocation2], %s1182
    %v1184 = vld [vmem:[%s1183] sm:$0xff]
    %v1185 = vld [vmem:[%s1183 + $0x8] sm:$0xff]
    %v1186 = vld [vmem:[%s1183 + $0x10] sm:$0xff]
    %1187 = vmatpush.bf16.msra.mxu0 %v525
    %1188 = vmatpush.bf16.msra.mxu0 %v522
    %1189 = vmatpush.bf16.msra.mxu0 %v519
    %1190 = vmatpush.bf16.msra.mxu0 %v516
    %1191 = vmatpush.bf16.msra.mxu0 %v513
    %1192 = vmatpush.bf16.msra.mxu0 %v510
    %1193 = vmatpush.bf16.msra.mxu0 %v507
    %1194 = vmatpush.bf16.msra.mxu0 %v504
    %1195 = vmatmul.bf16.gmra.mxu0 %v1148
    %v1196 = vpop.f32.mrf.mxu0
    %v1197 = vadd.f32 0.0, %v1196
    %v1198 = vpop.f32.mrf.mxu0
    %1199 = vdwg.mxu0
    %1200 = vmatpush.bf16.msra.mxu0 %v526
    %1201 = vmatpush.bf16.msra.mxu0 %v523
    %1202 = vmatpush.bf16.msra.mxu0 %v520
    %1203 = vmatpush.bf16.msra.mxu0 %v517
    %1204 = vmatpush.bf16.msra.mxu0 %v514
    %1205 = vmatpush.bf16.msra.mxu0 %v511
    %1206 = vmatpush.bf16.msra.mxu0 %v508
    %1207 = vmatpush.bf16.msra.mxu0 %v505
    %1208 = vmatmul.bf16.gmra.mxu0 %v1148
    %v1209 = vpop.f32.mrf.mxu0
    %v1210 = vadd.f32 0.0, %v1209
    %v1211 = vpop.f32.mrf.mxu0
    %1212 = vdwg.mxu0
    %1213 = vmatpush.bf16.msra.mxu0 %v527
    %1214 = vmatpush.bf16.msra.mxu0 %v524
    %1215 = vmatpush.bf16.msra.mxu0 %v521
    %1216 = vmatpush.bf16.msra.mxu0 %v518
    %1217 = vmatpush.bf16.msra.mxu0 %v515
    %1218 = vmatpush.bf16.msra.mxu0 %v512
    %1219 = vmatpush.bf16.msra.mxu0 %v509
    %1220 = vmatpush.bf16.msra.mxu0 %v506
    %1221 = vmatmul.bf16.gmra.mxu0 %v1148
    %v1222 = vpop.f32.mrf.mxu0
    %v1223 = vadd.f32 0.0, %v1222
    %v1224 = vpop.f32.mrf.mxu0
    %1225 = vdwg.mxu0
    %v1226 = vadd.f32 %v1184, %v1197
    %v1227 = vxor.u32 %v1226, 2147483648
    %v1228 = vmul.f32 %v1227, 1.442695
    %v1229 = vpow.pop %v1228
    %v1230 = vadd.f32 %v1229, 1.0
    %v1231 = vrcp.pop %v1230
    %v1232 = vmul.f32 %v1230, %v1231
    %v1233 = vsub.f32 1.0, %v1232
    %v1234 = vmul.f32 %v1231, %v1233
    %v1235 = vadd.f32 %v1231, %v1234
    %vm1236 = vweird.f32 %v1230
    %vm1237 = vweird.f32 %v1231
    %vm1238 = vmor %vm1236, %vm1237
    %v1239 = vsel %vm1238, %v1231, %v1235
    %v1240 = vand.u32 2147483647, %v1230
    %vm1241 = vcmp.eq.f32.partialorder %v1240, 8.507059e+37
    %v1242 = vand.u32 %v1230, 2147483648
    %v1243 = vor.u32 1.1754944e-38, %v1242
    %v1244 = vsel %vm1241, %v1243, %v1239
    %v1245 = vmul.f32 1.0, %v1244
    %v1246 = vadd.f32 %v1185, %v1210
    %v1247 = vxor.u32 %v1246, 2147483648
    %v1248 = vmul.f32 %v1247, 1.442695
    %v1249 = vpow.pop %v1248
    %v1250 = vadd.f32 %v1249, 1.0
    %v1251 = vrcp.pop %v1250
    %v1252 = vmul.f32 %v1250, %v1251
    %v1253 = vsub.f32 1.0, %v1252
    %v1254 = vmul.f32 %v1251, %v1253
    %v1255 = vadd.f32 %v1251, %v1254
    %vm1256 = vweird.f32 %v1250
    %vm1257 = vweird.f32 %v1251
    %vm1258 = vmor %vm1256, %vm1257
    %v1259 = vsel %vm1258, %v1251, %v1255
    %v1260 = vand.u32 2147483647, %v1250
    %vm1261 = vcmp.eq.f32.partialorder %v1260, 8.507059e+37
    %v1262 = vand.u32 %v1250, 2147483648
    %v1263 = vor.u32 1.1754944e-38, %v1262
    %v1264 = vsel %vm1261, %v1263, %v1259
    %v1265 = vmul.f32 1.0, %v1264
    %v1266 = vadd.f32 %v1223, %v107
    %v1267 = vmul.f32 %v1245, %v1266
    %v1268 = vadd.f32 %v1186, %v1267
    %v1269 = vtanh.pop %v1268
    %v1270 = vsub.f32 1.0, %v1265
    %v1271 = vmul.f32 %v1270, %v1269
    %v1272 = vmul.f32 %v1265, %v1008
    %v1273 = vadd.f32 %v1271, %v1272
    %v1274 = vmul.f32 %v1273, %v121
    %v1275 = vmul.f32 %v1273, %v122
    %v1276 = vmul.f32 %v1273, %v123
    %v1277 = vmul.f32 %v1273, %v124
    %v1278 = vmul.f32 %v1273, %v125
    %v1279 = vmul.f32 %v1273, %v126
    %v1280 = vmul.f32 %v1273, %v127
    %v1281 = vmul.f32 %v1273, %v128
    %1282 = vadd.xlane.f32.xlu0 %v1274
    %v1283 = vpop.xlane.xlu0 %1282
    %1284 = vadd.xlane.f32.xlu0 %v1275
    %v1285 = vpop.xlane.xlu0 %1284
    %1286 = vadd.xlane.f32.xlu0 %v1276
    %v1287 = vpop.xlane.xlu0 %1286
    %1288 = vadd.xlane.f32.xlu0 %v1277
    %v1289 = vpop.xlane.xlu0 %1288
    %1290 = vadd.xlane.f32.xlu0 %v1278
    %v1291 = vpop.xlane.xlu0 %1290
    %1292 = vadd.xlane.f32.xlu0 %v1279
    %v1293 = vpop.xlane.xlu0 %1292
    %1294 = vadd.xlane.f32.xlu0 %v1280
    %v1295 = vpop.xlane.xlu0 %1294
    %1296 = vadd.xlane.f32.xlu0 %v1281
    %v1297 = vpop.xlane.xlu0 %1296
    %v1306 = vperm.slane %v1283, %v672
    %v1307 = vperm.slane %v1285, %v672
    %v1308 = vperm.slane %v1287, %v672
    %v1309 = vperm.slane %v1289, %v672
    %v1310 = vperm.slane %v1291, %v672
    %v1311 = vperm.slane %v1293, %v672
    %v1312 = vperm.slane %v1295, %v672
    %v1313 = vperm.slane %v1297, %v672
    %v1314 = vsel %vm681, %v1307, %v1306
    %v1315 = vsel %vm683, %v1308, %v1314
    %v1316 = vsel %vm685, %v1309, %v1315
    %v1317 = vsel %vm687, %v1310, %v1316
    %v1318 = vsel %vm689, %v1311, %v1317
    %v1319 = vsel %vm691, %v1312, %v1318
    %v1320 = vsel %vm693, %v1313, %v1319
    %v1322 = vsel %vm133, %v1320, -1e+09
    %v1323 = vsel %vm697, %v1322, -inf
    %v1324 = vrot.slane %v1323, 4
    %v1325 = vmax.f32 %v1323, %v1324
    %v1326 = vrot.slane %v1325, 2
    %v1327 = vmax.f32 %v1325, %v1326
    %v1328 = vrot.slane %v1327, 1
    %v1329 = vmax.f32 %v1327, %v1328
    %v1330 = vsub.f32 %v1322, %v1329
    %v1331 = vmul.f32 %v1330, 1.442695
    %v1332 = vpow.pop %v1331
    %v1333 = vsel %vm697, %v1332, 0.0
    %v1334 = vrot.slane %v1333, 4
    %v1335 = vadd.f32 %v1333, %v1334
    %v1336 = vrot.slane %v1335, 2
    %v1337 = vadd.f32 %v1335, %v1336
    %v1338 = vrot.slane %v1337, 1
    %v1339 = vadd.f32 %v1337, %v1338
    %v1340 = vrcp.pop %v1339
    %v1341 = vmul.f32 %v1332, %v1340
    %v1342 = vperm.slane %v1341, 0
    %v1343 = vlaneseq
    %v1344 = vshrl.u32 %v1343, 7
    %1346 = vset.pattern.permute.xlu0 %v1344
    %1347 = vperm.xlu0 %1346, %v1342
    %v1348 = vpop.permute.xlu0 %1347
    %v1349 = vperm.slane %v1341, 1
    %v1350 = vlaneseq
    %v1351 = vshrl.u32 %v1350, 7
    %1353 = vset.pattern.permute.xlu0 %v1351
    %1354 = vperm.xlu0 %1353, %v1349
    %v1355 = vpop.permute.xlu0 %1354
    %v1356 = vperm.slane %v1341, 2
    %v1357 = vlaneseq
    %v1358 = vshrl.u32 %v1357, 7
    %1360 = vset.pattern.permute.xlu0 %v1358
    %1361 = vperm.xlu0 %1360, %v1356
    %v1362 = vpop.permute.xlu0 %1361
    %v1363 = vperm.slane %v1341, 3
    %v1364 = vlaneseq
    %v1365 = vshrl.u32 %v1364, 7
    %1367 = vset.pattern.permute.xlu0 %v1365
    %1368 = vperm.xlu0 %1367, %v1363
    %v1369 = vpop.permute.xlu0 %1368
    %v1370 = vperm.slane %v1341, 4
    %v1371 = vlaneseq
    %v1372 = vshrl.u32 %v1371, 7
    %1374 = vset.pattern.permute.xlu0 %v1372
    %1375 = vperm.xlu0 %1374, %v1370
    %v1376 = vpop.permute.xlu0 %1375
    %v1377 = vperm.slane %v1341, 5
    %v1378 = vlaneseq
    %v1379 = vshrl.u32 %v1378, 7
    %1381 = vset.pattern.permute.xlu0 %v1379
    %1382 = vperm.xlu0 %1381, %v1377
    %v1383 = vpop.permute.xlu0 %1382
    %v1384 = vperm.slane %v1341, 6
    %v1385 = vlaneseq
    %v1386 = vshrl.u32 %v1385, 7
    %1388 = vset.pattern.permute.xlu0 %v1386
    %1389 = vperm.xlu0 %1388, %v1384
    %v1390 = vpop.permute.xlu0 %1389
    %v1391 = vperm.slane %v1341, 7
    %v1392 = vlaneseq
    %v1393 = vshrl.u32 %v1392, 7
    %1395 = vset.pattern.permute.xlu0 %v1393
    %1396 = vperm.xlu0 %1395, %v1391
    %v1397 = vpop.permute.xlu0 %1396
    %v1398 = vmul.f32 %v1348, %v121
    %v1399 = vmul.f32 %v1355, %v122
    %v1400 = vmul.f32 %v1362, %v123
    %v1401 = vmul.f32 %v1369, %v124
    %v1402 = vmul.f32 %v1376, %v125
    %v1403 = vmul.f32 %v1383, %v126
    %v1404 = vmul.f32 %v1390, %v127
    %v1405 = vmul.f32 %v1397, %v128
    %v1406 = vadd.f32 %v1398, %v1399
    %v1407 = vadd.f32 %v1406, %v1400
    %v1408 = vadd.f32 %v1407, %v1401
    %v1409 = vadd.f32 %v1408, %v1402
    %v1410 = vadd.f32 %v1409, %v1403
    %v1411 = vadd.f32 %v1410, %v1404
    %v1412 = vadd.f32 %v1411, %v1405
    %v1413 = vpack.c.bf16 %v1273, %v1273
    %v1414 = vpack.c.bf16 %v1412, %v1412
    %1415 = vmatpush.bf16.msra.mxu0 %v829
    %1416 = vmatpush.bf16.msra.mxu0 %v828
    %1417 = vmatpush.bf16.msra.mxu0 %v827
    %1418 = vmatpush.bf16.msra.mxu0 %v826
    %1419 = vmatpush.bf16.msra.mxu0 %v825
    %1420 = vmatpush.bf16.msra.mxu0 %v824
    %1421 = vmatpush.bf16.msra.mxu0 %v823
    %1422 = vmatpush.bf16.msra.mxu0 %v822
    %1423 = vmatmul.bf16.gmra.mxu0 %v1413
    %v1424 = vpop.f32.mrf.mxu0
    %v1425 = vadd.f32 0.0, %v1424
    %v1426 = vpop.f32.mrf.mxu0
    %1427 = vdwg.mxu0
    %1428 = vmatpush.bf16.msra.mxu0 %v890
    %1429 = vmatpush.bf16.msra.mxu0 %v889
    %1430 = vmatpush.bf16.msra.mxu0 %v888
    %1431 = vmatpush.bf16.msra.mxu0 %v887
    %1432 = vmatpush.bf16.msra.mxu0 %v886
    %1433 = vmatpush.bf16.msra.mxu0 %v885
    %1434 = vmatpush.bf16.msra.mxu0 %v884
    %1435 = vmatpush.bf16.msra.mxu0 %v883
    %1436 = vmatmul.bf16.gmra.mxu0 %v1414
    %v1437 = vpop.f32.mrf.mxu0
    %v1438 = vadd.f32 %v1425, %v1437
    %v1439 = vpop.f32.mrf.mxu0
    %1440 = vdwg.mxu0
    %v1441 = vadd.f32 %v1438, %v111
    %v1442 = vtanh.pop %v1441
    %v1443 = vpack.c.bf16 %v1442, %v1442
    %s1444 = scalar_lea.vmem %s11, 8
    %1445 = vst [vmem:[%s1444] sm:$0xf] %v1443
    %s1446 = smul.u32 3, 3
    %s1447 = smul.addr %s1446, 8
    %s1448 = scalar_lea.vmem [#allocation2], %s1447
    %v1449 = vld [vmem:[%s1448] sm:$0xff]
    %v1450 = vld [vmem:[%s1448 + $0x8] sm:$0xff]
    %v1451 = vld [vmem:[%s1448 + $0x10] sm:$0xff]
    %1452 = vmatpush.bf16.msra.mxu0 %v525
    %1453 = vmatpush.bf16.msra.mxu0 %v522
    %1454 = vmatpush.bf16.msra.mxu0 %v519
    %1455 = vmatpush.bf16.msra.mxu0 %v516
    %1456 = vmatpush.bf16.msra.mxu0 %v513
    %1457 = vmatpush.bf16.msra.mxu0 %v510
    %1458 = vmatpush.bf16.msra.mxu0 %v507
    %1459 = vmatpush.bf16.msra.mxu0 %v504
    %1460 = vmatmul.bf16.gmra.mxu0 %v1413
    %v1461 = vpop.f32.mrf.mxu0
    %v1462 = vadd.f32 0.0, %v1461
    %v1463 = vpop.f32.mrf.mxu0
    %1464 = vdwg.mxu0
    %1465 = vmatpush.bf16.msra.mxu0 %v526
    %1466 = vmatpush.bf16.msra.mxu0 %v523
    %1467 = vmatpush.bf16.msra.mxu0 %v520
    %1468 = vmatpush.bf16.msra.mxu0 %v517
    %1469 = vmatpush.bf16.msra.mxu0 %v514
    %1470 = vmatpush.bf16.msra.mxu0 %v511
    %1471 = vmatpush.bf16.msra.mxu0 %v508
    %1472 = vmatpush.bf16.msra.mxu0 %v505
    %1473 = vmatmul.bf16.gmra.mxu0 %v1413
    %v1474 = vpop.f32.mrf.mxu0
    %v1475 = vadd.f32 0.0, %v1474
    %v1476 = vpop.f32.mrf.mxu0
    %1477 = vdwg.mxu0
    %1478 = vmatpush.bf16.msra.mxu0 %v527
    %1479 = vmatpush.bf16.msra.mxu0 %v524
    %1480 = vmatpush.bf16.msra.mxu0 %v521
    %1481 = vmatpush.bf16.msra.mxu0 %v518
    %1482 = vmatpush.bf16.msra.mxu0 %v515
    %1483 = vmatpush.bf16.msra.mxu0 %v512
    %1484 = vmatpush.bf16.msra.mxu0 %v509
    %1485 = vmatpush.bf16.msra.mxu0 %v506
    %1486 = vmatmul.bf16.gmra.mxu0 %v1413
    %v1487 = vpop.f32.mrf.mxu0
    %v1488 = vadd.f32 0.0, %v1487
    %v1489 = vpop.f32.mrf.mxu0
    %1490 = vdwg.mxu0
    %v1491 = vadd.f32 %v1449, %v1462
    %v1492 = vxor.u32 %v1491, 2147483648
    %v1493 = vmul.f32 %v1492, 1.442695
    %v1494 = vpow.pop %v1493
    %v1495 = vadd.f32 %v1494, 1.0
    %v1496 = vrcp.pop %v1495
    %v1497 = vmul.f32 %v1495, %v1496
    %v1498 = vsub.f32 1.0, %v1497
    %v1499 = vmul.f32 %v1496, %v1498
    %v1500 = vadd.f32 %v1496, %v1499
    %vm1501 = vweird.f32 %v1495
    %vm1502 = vweird.f32 %v1496
    %vm1503 = vmor %vm1501, %vm1502
    %v1504 = vsel %vm1503, %v1496, %v1500
    %v1505 = vand.u32 2147483647, %v1495
    %vm1506 = vcmp.eq.f32.partialorder %v1505, 8.507059e+37
    %v1507 = vand.u32 %v1495, 2147483648
    %v1508 = vor.u32 1.1754944e-38, %v1507
    %v1509 = vsel %vm1506, %v1508, %v1504
    %v1510 = vmul.f32 1.0, %v1509
    %v1511 = vadd.f32 %v1450, %v1475
    %v1512 = vxor.u32 %v1511, 2147483648
    %v1513 = vmul.f32 %v1512, 1.442695
    %v1514 = vpow.pop %v1513
    %v1515 = vadd.f32 %v1514, 1.0
    %v1516 = vrcp.pop %v1515
    %v1517 = vmul.f32 %v1515, %v1516
    %v1518 = vsub.f32 1.0, %v1517
    %v1519 = vmul.f32 %v1516, %v1518
    %v1520 = vadd.f32 %v1516, %v1519
    %vm1521 = vweird.f32 %v1515
    %vm1522 = vweird.f32 %v1516
    %vm1523 = vmor %vm1521, %vm1522
    %v1524 = vsel %vm1523, %v1516, %v1520
    %v1525 = vand.u32 2147483647, %v1515
    %vm1526 = vcmp.eq.f32.partialorder %v1525, 8.507059e+37
    %v1527 = vand.u32 %v1515, 2147483648
    %v1528 = vor.u32 1.1754944e-38, %v1527
    %v1529 = vsel %vm1526, %v1528, %v1524
    %v1530 = vmul.f32 1.0, %v1529
    %v1531 = vadd.f32 %v1488, %v107
    %v1532 = vmul.f32 %v1510, %v1531
    %v1533 = vadd.f32 %v1451, %v1532
    %v1534 = vtanh.pop %v1533
    %v1535 = vsub.f32 1.0, %v1530
    %v1536 = vmul.f32 %v1535, %v1534
    %v1537 = vmul.f32 %v1530, %v1273
    %v1538 = vadd.f32 %v1536, %v1537
    %v1539 = vmul.f32 %v1538, %v121
    %v1540 = vmul.f32 %v1538, %v122
    %v1541 = vmul.f32 %v1538, %v123
    %v1542 = vmul.f32 %v1538, %v124
    %v1543 = vmul.f32 %v1538, %v125
    %v1544 = vmul.f32 %v1538, %v126
    %v1545 = vmul.f32 %v1538, %v127
    %v1546 = vmul.f32 %v1538, %v128
    %1547 = vadd.xlane.f32.xlu0 %v1539
    %v1548 = vpop.xlane.xlu0 %1547
    %1549 = vadd.xlane.f32.xlu0 %v1540
    %v1550 = vpop.xlane.xlu0 %1549
    %1551 = vadd.xlane.f32.xlu0 %v1541
    %v1552 = vpop.xlane.xlu0 %1551
    %1553 = vadd.xlane.f32.xlu0 %v1542
    %v1554 = vpop.xlane.xlu0 %1553
    %1555 = vadd.xlane.f32.xlu0 %v1543
    %v1556 = vpop.xlane.xlu0 %1555
    %1557 = vadd.xlane.f32.xlu0 %v1544
    %v1558 = vpop.xlane.xlu0 %1557
    %1559 = vadd.xlane.f32.xlu0 %v1545
    %v1560 = vpop.xlane.xlu0 %1559
    %1561 = vadd.xlane.f32.xlu0 %v1546
    %v1562 = vpop.xlane.xlu0 %1561
    %v1571 = vperm.slane %v1548, %v672
    %v1572 = vperm.slane %v1550, %v672
    %v1573 = vperm.slane %v1552, %v672
    %v1574 = vperm.slane %v1554, %v672
    %v1575 = vperm.slane %v1556, %v672
    %v1576 = vperm.slane %v1558, %v672
    %v1577 = vperm.slane %v1560, %v672
    %v1578 = vperm.slane %v1562, %v672
    %v1579 = vsel %vm681, %v1572, %v1571
    %v1580 = vsel %vm683, %v1573, %v1579
    %v1581 = vsel %vm685, %v1574, %v1580
    %v1582 = vsel %vm687, %v1575, %v1581
    %v1583 = vsel %vm689, %v1576, %v1582
    %v1584 = vsel %vm691, %v1577, %v1583
    %v1585 = vsel %vm693, %v1578, %v1584
    %v1587 = vsel %vm133, %v1585, -1e+09
    %v1588 = vsel %vm697, %v1587, -inf
    %v1589 = vrot.slane %v1588, 4
    %v1590 = vmax.f32 %v1588, %v1589
    %v1591 = vrot.slane %v1590, 2
    %v1592 = vmax.f32 %v1590, %v1591
    %v1593 = vrot.slane %v1592, 1
    %v1594 = vmax.f32 %v1592, %v1593
    %v1595 = vsub.f32 %v1587, %v1594
    %v1596 = vmul.f32 %v1595, 1.442695
    %v1597 = vpow.pop %v1596
    %v1598 = vsel %vm697, %v1597, 0.0
    %v1599 = vrot.slane %v1598, 4
    %v1600 = vadd.f32 %v1598, %v1599
    %v1601 = vrot.slane %v1600, 2
    %v1602 = vadd.f32 %v1600, %v1601
    %v1603 = vrot.slane %v1602, 1
    %v1604 = vadd.f32 %v1602, %v1603
    %v1605 = vrcp.pop %v1604
    %v1606 = vmul.f32 %v1597, %v1605
    %v1607 = vperm.slane %v1606, 0
    %v1608 = vlaneseq
    %v1609 = vshrl.u32 %v1608, 7
    %1611 = vset.pattern.permute.xlu0 %v1609
    %1612 = vperm.xlu0 %1611, %v1607
    %v1613 = vpop.permute.xlu0 %1612
    %v1614 = vperm.slane %v1606, 1
    %v1615 = vlaneseq
    %v1616 = vshrl.u32 %v1615, 7
    %1618 = vset.pattern.permute.xlu0 %v1616
    %1619 = vperm.xlu0 %1618, %v1614
    %v1620 = vpop.permute.xlu0 %1619
    %v1621 = vperm.slane %v1606, 2
    %v1622 = vlaneseq
    %v1623 = vshrl.u32 %v1622, 7
    %1625 = vset.pattern.permute.xlu0 %v1623
    %1626 = vperm.xlu0 %1625, %v1621
    %v1627 = vpop.permute.xlu0 %1626
    %v1628 = vperm.slane %v1606, 3
    %v1629 = vlaneseq
    %v1630 = vshrl.u32 %v1629, 7
    %1632 = vset.pattern.permute.xlu0 %v1630
    %1633 = vperm.xlu0 %1632, %v1628
    %v1634 = vpop.permute.xlu0 %1633
    %v1635 = vperm.slane %v1606, 4
    %v1636 = vlaneseq
    %v1637 = vshrl.u32 %v1636, 7
    %1639 = vset.pattern.permute.xlu0 %v1637
    %1640 = vperm.xlu0 %1639, %v1635
    %v1641 = vpop.permute.xlu0 %1640
    %v1642 = vperm.slane %v1606, 5
    %v1643 = vlaneseq
    %v1644 = vshrl.u32 %v1643, 7
    %1646 = vset.pattern.permute.xlu0 %v1644
    %1647 = vperm.xlu0 %1646, %v1642
    %v1648 = vpop.permute.xlu0 %1647
    %v1649 = vperm.slane %v1606, 6
    %v1650 = vlaneseq
    %v1651 = vshrl.u32 %v1650, 7
    %1653 = vset.pattern.permute.xlu0 %v1651
    %1654 = vperm.xlu0 %1653, %v1649
    %v1655 = vpop.permute.xlu0 %1654
    %v1656 = vperm.slane %v1606, 7
    %v1657 = vlaneseq
    %v1658 = vshrl.u32 %v1657, 7
    %1660 = vset.pattern.permute.xlu0 %v1658
    %1661 = vperm.xlu0 %1660, %v1656
    %v1662 = vpop.permute.xlu0 %1661
    %v1663 = vmul.f32 %v1613, %v121
    %v1664 = vmul.f32 %v1620, %v122
    %v1665 = vmul.f32 %v1627, %v123
    %v1666 = vmul.f32 %v1634, %v124
    %v1667 = vmul.f32 %v1641, %v125
    %v1668 = vmul.f32 %v1648, %v126
    %v1669 = vmul.f32 %v1655, %v127
    %v1670 = vmul.f32 %v1662, %v128
    %v1671 = vadd.f32 %v1663, %v1664
    %v1672 = vadd.f32 %v1671, %v1665
    %v1673 = vadd.f32 %v1672, %v1666
    %v1674 = vadd.f32 %v1673, %v1667
    %v1675 = vadd.f32 %v1674, %v1668
    %v1676 = vadd.f32 %v1675, %v1669
    %v1677 = vadd.f32 %v1676, %v1670
    %v1678 = vpack.c.bf16 %v1538, %v1538
    %v1679 = vpack.c.bf16 %v1677, %v1677
    %1680 = vmatpush.bf16.msra.mxu0 %v829
    %1681 = vmatpush.bf16.msra.mxu0 %v828
    %1682 = vmatpush.bf16.msra.mxu0 %v827
    %1683 = vmatpush.bf16.msra.mxu0 %v826
    %1684 = vmatpush.bf16.msra.mxu0 %v825
    %1685 = vmatpush.bf16.msra.mxu0 %v824
    %1686 = vmatpush.bf16.msra.mxu0 %v823
    %1687 = vmatpush.bf16.msra.mxu0 %v822
    %1688 = vmatmul.bf16.gmra.mxu0 %v1678
    %v1689 = vpop.f32.mrf.mxu0
    %v1690 = vadd.f32 0.0, %v1689
    %v1691 = vpop.f32.mrf.mxu0
    %1692 = vdwg.mxu0
    %1693 = vmatpush.bf16.msra.mxu0 %v890
    %1694 = vmatpush.bf16.msra.mxu0 %v889
    %1695 = vmatpush.bf16.msra.mxu0 %v888
    %1696 = vmatpush.bf16.msra.mxu0 %v887
    %1697 = vmatpush.bf16.msra.mxu0 %v886
    %1698 = vmatpush.bf16.msra.mxu0 %v885
    %1699 = vmatpush.bf16.msra.mxu0 %v884
    %1700 = vmatpush.bf16.msra.mxu0 %v883
    %1701 = vmatmul.bf16.gmra.mxu0 %v1679
    %v1702 = vpop.f32.mrf.mxu0
    %v1703 = vadd.f32 %v1690, %v1702
    %v1704 = vpop.f32.mrf.mxu0
    %1705 = vdwg.mxu0
    %v1706 = vadd.f32 %v1703, %v111
    %v1707 = vtanh.pop %v1706
    %v1708 = vpack.c.bf16 %v1707, %v1707
    %s1709 = scalar_lea.vmem %s11, 12
    %1710 = vst [vmem:[%s1709] sm:$0xf] %v1708
    %s1711 = smul.u32 4, 3
    %s1712 = smul.addr %s1711, 8
    %s1713 = scalar_lea.vmem [#allocation2], %s1712
    %v1714 = vld [vmem:[%s1713] sm:$0xff]
    %v1715 = vld [vmem:[%s1713 + $0x8] sm:$0xff]
    %v1716 = vld [vmem:[%s1713 + $0x10] sm:$0xff]
    %1717 = vmatpush.bf16.msra.mxu0 %v525
    %1718 = vmatpush.bf16.msra.mxu0 %v522
    %1719 = vmatpush.bf16.msra.mxu0 %v519
    %1720 = vmatpush.bf16.msra.mxu0 %v516
    %1721 = vmatpush.bf16.msra.mxu0 %v513
    %1722 = vmatpush.bf16.msra.mxu0 %v510
    %1723 = vmatpush.bf16.msra.mxu0 %v507
    %1724 = vmatpush.bf16.msra.mxu0 %v504
    %1725 = vmatmul.bf16.gmra.mxu0 %v1678
    %v1726 = vpop.f32.mrf.mxu0
    %v1727 = vadd.f32 0.0, %v1726
    %v1728 = vpop.f32.mrf.mxu0
    %1729 = vdwg.mxu0
    %1730 = vmatpush.bf16.msra.mxu0 %v526
    %1731 = vmatpush.bf16.msra.mxu0 %v523
    %1732 = vmatpush.bf16.msra.mxu0 %v520
    %1733 = vmatpush.bf16.msra.mxu0 %v517
    %1734 = vmatpush.bf16.msra.mxu0 %v514
    %1735 = vmatpush.bf16.msra.mxu0 %v511
    %1736 = vmatpush.bf16.msra.mxu0 %v508
    %1737 = vmatpush.bf16.msra.mxu0 %v505
    %1738 = vmatmul.bf16.gmra.mxu0 %v1678
    %v1739 = vpop.f32.mrf.mxu0
    %v1740 = vadd.f32 0.0, %v1739
    %v1741 = vpop.f32.mrf.mxu0
    %1742 = vdwg.mxu0
    %1743 = vmatpush.bf16.msra.mxu0 %v527
    %1744 = vmatpush.bf16.msra.mxu0 %v524
    %1745 = vmatpush.bf16.msra.mxu0 %v521
    %1746 = vmatpush.bf16.msra.mxu0 %v518
    %1747 = vmatpush.bf16.msra.mxu0 %v515
    %1748 = vmatpush.bf16.msra.mxu0 %v512
    %1749 = vmatpush.bf16.msra.mxu0 %v509
    %1750 = vmatpush.bf16.msra.mxu0 %v506
    %1751 = vmatmul.bf16.gmra.mxu0 %v1678
    %v1752 = vpop.f32.mrf.mxu0
    %v1753 = vadd.f32 0.0, %v1752
    %v1754 = vpop.f32.mrf.mxu0
    %1755 = vdwg.mxu0
    %v1756 = vadd.f32 %v1714, %v1727
    %v1757 = vxor.u32 %v1756, 2147483648
    %v1758 = vmul.f32 %v1757, 1.442695
    %v1759 = vpow.pop %v1758
    %v1760 = vadd.f32 %v1759, 1.0
    %v1761 = vrcp.pop %v1760
    %v1762 = vmul.f32 %v1760, %v1761
    %v1763 = vsub.f32 1.0, %v1762
    %v1764 = vmul.f32 %v1761, %v1763
    %v1765 = vadd.f32 %v1761, %v1764
    %vm1766 = vweird.f32 %v1760
    %vm1767 = vweird.f32 %v1761
    %vm1768 = vmor %vm1766, %vm1767
    %v1769 = vsel %vm1768, %v1761, %v1765
    %v1770 = vand.u32 2147483647, %v1760
    %vm1771 = vcmp.eq.f32.partialorder %v1770, 8.507059e+37
    %v1772 = vand.u32 %v1760, 2147483648
    %v1773 = vor.u32 1.1754944e-38, %v1772
    %v1774 = vsel %vm1771, %v1773, %v1769
    %v1775 = vmul.f32 1.0, %v1774
    %v1776 = vadd.f32 %v1715, %v1740
    %v1777 = vxor.u32 %v1776, 2147483648
    %v1778 = vmul.f32 %v1777, 1.442695
    %v1779 = vpow.pop %v1778
    %v1780 = vadd.f32 %v1779, 1.0
    %v1781 = vrcp.pop %v1780
    %v1782 = vmul.f32 %v1780, %v1781
    %v1783 = vsub.f32 1.0, %v1782
    %v1784 = vmul.f32 %v1781, %v1783
    %v1785 = vadd.f32 %v1781, %v1784
    %vm1786 = vweird.f32 %v1780
    %vm1787 = vweird.f32 %v1781
    %vm1788 = vmor %vm1786, %vm1787
    %v1789 = vsel %vm1788, %v1781, %v1785
    %v1790 = vand.u32 2147483647, %v1780
    %vm1791 = vcmp.eq.f32.partialorder %v1790, 8.507059e+37
    %v1792 = vand.u32 %v1780, 2147483648
    %v1793 = vor.u32 1.1754944e-38, %v1792
    %v1794 = vsel %vm1791, %v1793, %v1789
    %v1795 = vmul.f32 1.0, %v1794
    %v1796 = vadd.f32 %v1753, %v107
    %v1797 = vmul.f32 %v1775, %v1796
    %v1798 = vadd.f32 %v1716, %v1797
    %v1799 = vtanh.pop %v1798
    %v1800 = vsub.f32 1.0, %v1795
    %v1801 = vmul.f32 %v1800, %v1799
    %v1802 = vmul.f32 %v1795, %v1538
    %v1803 = vadd.f32 %v1801, %v1802
    %v1804 = vmul.f32 %v1803, %v121
    %v1805 = vmul.f32 %v1803, %v122
    %v1806 = vmul.f32 %v1803, %v123
    %v1807 = vmul.f32 %v1803, %v124
    %v1808 = vmul.f32 %v1803, %v125
    %v1809 = vmul.f32 %v1803, %v126
    %v1810 = vmul.f32 %v1803, %v127
    %v1811 = vmul.f32 %v1803, %v128
    %1812 = vadd.xlane.f32.xlu0 %v1804
    %v1813 = vpop.xlane.xlu0 %1812
    %1814 = vadd.xlane.f32.xlu0 %v1805
    %v1815 = vpop.xlane.xlu0 %1814
    %1816 = vadd.xlane.f32.xlu0 %v1806
    %v1817 = vpop.xlane.xlu0 %1816
    %1818 = vadd.xlane.f32.xlu0 %v1807
    %v1819 = vpop.xlane.xlu0 %1818
    %1820 = vadd.xlane.f32.xlu0 %v1808
    %v1821 = vpop.xlane.xlu0 %1820
    %1822 = vadd.xlane.f32.xlu0 %v1809
    %v1823 = vpop.xlane.xlu0 %1822
    %1824 = vadd.xlane.f32.xlu0 %v1810
    %v1825 = vpop.xlane.xlu0 %1824
    %1826 = vadd.xlane.f32.xlu0 %v1811
    %v1827 = vpop.xlane.xlu0 %1826
    %v1836 = vperm.slane %v1813, %v672
    %v1837 = vperm.slane %v1815, %v672
    %v1838 = vperm.slane %v1817, %v672
    %v1839 = vperm.slane %v1819, %v672
    %v1840 = vperm.slane %v1821, %v672
    %v1841 = vperm.slane %v1823, %v672
    %v1842 = vperm.slane %v1825, %v672
    %v1843 = vperm.slane %v1827, %v672
    %v1844 = vsel %vm681, %v1837, %v1836
    %v1845 = vsel %vm683, %v1838, %v1844
    %v1846 = vsel %vm685, %v1839, %v1845
    %v1847 = vsel %vm687, %v1840, %v1846
    %v1848 = vsel %vm689, %v1841, %v1847
    %v1849 = vsel %vm691, %v1842, %v1848
    %v1850 = vsel %vm693, %v1843, %v1849
    %v1852 = vsel %vm133, %v1850, -1e+09
    %v1853 = vsel %vm697, %v1852, -inf
    %v1854 = vrot.slane %v1853, 4
    %v1855 = vmax.f32 %v1853, %v1854
    %v1856 = vrot.slane %v1855, 2
    %v1857 = vmax.f32 %v1855, %v1856
    %v1858 = vrot.slane %v1857, 1
    %v1859 = vmax.f32 %v1857, %v1858
    %v1860 = vsub.f32 %v1852, %v1859
    %v1861 = vmul.f32 %v1860, 1.442695
    %v1862 = vpow.pop %v1861
    %v1863 = vsel %vm697, %v1862, 0.0
    %v1864 = vrot.slane %v1863, 4
    %v1865 = vadd.f32 %v1863, %v1864
    %v1866 = vrot.slane %v1865, 2
    %v1867 = vadd.f32 %v1865, %v1866
    %v1868 = vrot.slane %v1867, 1
    %v1869 = vadd.f32 %v1867, %v1868
    %v1870 = vrcp.pop %v1869
    %v1871 = vmul.f32 %v1862, %v1870
    %v1872 = vperm.slane %v1871, 0
    %v1873 = vlaneseq
    %v1874 = vshrl.u32 %v1873, 7
    %1876 = vset.pattern.permute.xlu0 %v1874
    %1877 = vperm.xlu0 %1876, %v1872
    %v1878 = vpop.permute.xlu0 %1877
    %v1879 = vperm.slane %v1871, 1
    %v1880 = vlaneseq
    %v1881 = vshrl.u32 %v1880, 7
    %1883 = vset.pattern.permute.xlu0 %v1881
    %1884 = vperm.xlu0 %1883, %v1879
    %v1885 = vpop.permute.xlu0 %1884
    %v1886 = vperm.slane %v1871, 2
    %v1887 = vlaneseq
    %v1888 = vshrl.u32 %v1887, 7
    %1890 = vset.pattern.permute.xlu0 %v1888
    %1891 = vperm.xlu0 %1890, %v1886
    %v1892 = vpop.permute.xlu0 %1891
    %v1893 = vperm.slane %v1871, 3
    %v1894 = vlaneseq
    %v1895 = vshrl.u32 %v1894, 7
    %1897 = vset.pattern.permute.xlu0 %v1895
    %1898 = vperm.xlu0 %1897, %v1893
    %v1899 = vpop.permute.xlu0 %1898
    %v1900 = vperm.slane %v1871, 4
    %v1901 = vlaneseq
    %v1902 = vshrl.u32 %v1901, 7
    %1904 = vset.pattern.permute.xlu0 %v1902
    %1905 = vperm.xlu0 %1904, %v1900
    %v1906 = vpop.permute.xlu0 %1905
    %v1907 = vperm.slane %v1871, 5
    %v1908 = vlaneseq
    %v1909 = vshrl.u32 %v1908, 7
    %1911 = vset.pattern.permute.xlu0 %v1909
    %1912 = vperm.xlu0 %1911, %v1907
    %v1913 = vpop.permute.xlu0 %1912
    %v1914 = vperm.slane %v1871, 6
    %v1915 = vlaneseq
    %v1916 = vshrl.u32 %v1915, 7
    %1918 = vset.pattern.permute.xlu0 %v1916
    %1919 = vperm.xlu0 %1918, %v1914
    %v1920 = vpop.permute.xlu0 %1919
    %v1921 = vperm.slane %v1871, 7
    %v1922 = vlaneseq
    %v1923 = vshrl.u32 %v1922, 7
    %1925 = vset.pattern.permute.xlu0 %v1923
    %1926 = vperm.xlu0 %1925, %v1921
    %v1927 = vpop.permute.xlu0 %1926
    %v1928 = vmul.f32 %v1878, %v121
    %v1929 = vmul.f32 %v1885, %v122
    %v1930 = vmul.f32 %v1892, %v123
    %v1931 = vmul.f32 %v1899, %v124
    %v1932 = vmul.f32 %v1906, %v125
    %v1933 = vmul.f32 %v1913, %v126
    %v1934 = vmul.f32 %v1920, %v127
    %v1935 = vmul.f32 %v1927, %v128
    %v1936 = vadd.f32 %v1928, %v1929
    %v1937 = vadd.f32 %v1936, %v1930
    %v1938 = vadd.f32 %v1937, %v1931
    %v1939 = vadd.f32 %v1938, %v1932
    %v1940 = vadd.f32 %v1939, %v1933
    %v1941 = vadd.f32 %v1940, %v1934
    %v1942 = vadd.f32 %v1941, %v1935
    %v1943 = vpack.c.bf16 %v1803, %v1803
    %v1944 = vpack.c.bf16 %v1942, %v1942
    %1945 = vmatpush.bf16.msra.mxu0 %v829
    %1946 = vmatpush.bf16.msra.mxu0 %v828
    %1947 = vmatpush.bf16.msra.mxu0 %v827
    %1948 = vmatpush.bf16.msra.mxu0 %v826
    %1949 = vmatpush.bf16.msra.mxu0 %v825
    %1950 = vmatpush.bf16.msra.mxu0 %v824
    %1951 = vmatpush.bf16.msra.mxu0 %v823
    %1952 = vmatpush.bf16.msra.mxu0 %v822
    %1953 = vmatmul.bf16.gmra.mxu0 %v1943
    %v1954 = vpop.f32.mrf.mxu0
    %v1955 = vadd.f32 0.0, %v1954
    %v1956 = vpop.f32.mrf.mxu0
    %1957 = vdwg.mxu0
    %1958 = vmatpush.bf16.msra.mxu0 %v890
    %1959 = vmatpush.bf16.msra.mxu0 %v889
    %1960 = vmatpush.bf16.msra.mxu0 %v888
    %1961 = vmatpush.bf16.msra.mxu0 %v887
    %1962 = vmatpush.bf16.msra.mxu0 %v886
    %1963 = vmatpush.bf16.msra.mxu0 %v885
    %1964 = vmatpush.bf16.msra.mxu0 %v884
    %1965 = vmatpush.bf16.msra.mxu0 %v883
    %1966 = vmatmul.bf16.gmra.mxu0 %v1944
    %v1967 = vpop.f32.mrf.mxu0
    %v1968 = vadd.f32 %v1955, %v1967
    %v1969 = vpop.f32.mrf.mxu0
    %1970 = vdwg.mxu0
    %v1971 = vadd.f32 %v1968, %v111
    %v1972 = vtanh.pop %v1971
    %v1973 = vpack.c.bf16 %v1972, %v1972
    %s1974 = scalar_lea.vmem %s11, 16
    %1975 = vst [vmem:[%s1974] sm:$0xf] %v1973
    %s1976 = smul.u32 5, 3
    %s1977 = smul.addr %s1976, 8
    %s1978 = scalar_lea.vmem [#allocation2], %s1977
    %v1979 = vld [vmem:[%s1978] sm:$0xff]
    %v1980 = vld [vmem:[%s1978 + $0x8] sm:$0xff]
    %v1981 = vld [vmem:[%s1978 + $0x10] sm:$0xff]
    %1982 = vmatpush.bf16.msra.mxu0 %v525
    %1983 = vmatpush.bf16.msra.mxu0 %v522
    %1984 = vmatpush.bf16.msra.mxu0 %v519
    %1985 = vmatpush.bf16.msra.mxu0 %v516
    %1986 = vmatpush.bf16.msra.mxu0 %v513
    %1987 = vmatpush.bf16.msra.mxu0 %v510
    %1988 = vmatpush.bf16.msra.mxu0 %v507
    %1989 = vmatpush.bf16.msra.mxu0 %v504
    %1990 = vmatmul.bf16.gmra.mxu0 %v1943
    %v1991 = vpop.f32.mrf.mxu0
    %v1992 = vadd.f32 0.0, %v1991
    %v1993 = vpop.f32.mrf.mxu0
    %1994 = vdwg.mxu0
    %1995 = vmatpush.bf16.msra.mxu0 %v526
    %1996 = vmatpush.bf16.msra.mxu0 %v523
    %1997 = vmatpush.bf16.msra.mxu0 %v520
    %1998 = vmatpush.bf16.msra.mxu0 %v517
    %1999 = vmatpush.bf16.msra.mxu0 %v514
    %2000 = vmatpush.bf16.msra.mxu0 %v511
    %2001 = vmatpush.bf16.msra.mxu0 %v508
    %2002 = vmatpush.bf16.msra.mxu0 %v505
    %2003 = vmatmul.bf16.gmra.mxu0 %v1943
    %v2004 = vpop.f32.mrf.mxu0
    %v2005 = vadd.f32 0.0, %v2004
    %v2006 = vpop.f32.mrf.mxu0
    %2007 = vdwg.mxu0
    %2008 = vmatpush.bf16.msra.mxu0 %v527
    %2009 = vmatpush.bf16.msra.mxu0 %v524
    %2010 = vmatpush.bf16.msra.mxu0 %v521
    %2011 = vmatpush.bf16.msra.mxu0 %v518
    %2012 = vmatpush.bf16.msra.mxu0 %v515
    %2013 = vmatpush.bf16.msra.mxu0 %v512
    %2014 = vmatpush.bf16.msra.mxu0 %v509
    %2015 = vmatpush.bf16.msra.mxu0 %v506
    %2016 = vmatmul.bf16.gmra.mxu0 %v1943
    %v2017 = vpop.f32.mrf.mxu0
    %v2018 = vadd.f32 0.0, %v2017
    %v2019 = vpop.f32.mrf.mxu0
    %2020 = vdwg.mxu0
    %v2021 = vadd.f32 %v1979, %v1992
    %v2022 = vxor.u32 %v2021, 2147483648
    %v2023 = vmul.f32 %v2022, 1.442695
    %v2024 = vpow.pop %v2023
    %v2025 = vadd.f32 %v2024, 1.0
    %v2026 = vrcp.pop %v2025
    %v2027 = vmul.f32 %v2025, %v2026
    %v2028 = vsub.f32 1.0, %v2027
    %v2029 = vmul.f32 %v2026, %v2028
    %v2030 = vadd.f32 %v2026, %v2029
    %vm2031 = vweird.f32 %v2025
    %vm2032 = vweird.f32 %v2026
    %vm2033 = vmor %vm2031, %vm2032
    %v2034 = vsel %vm2033, %v2026, %v2030
    %v2035 = vand.u32 2147483647, %v2025
    %vm2036 = vcmp.eq.f32.partialorder %v2035, 8.507059e+37
    %v2037 = vand.u32 %v2025, 2147483648
    %v2038 = vor.u32 1.1754944e-38, %v2037
    %v2039 = vsel %vm2036, %v2038, %v2034
    %v2040 = vmul.f32 1.0, %v2039
    %v2041 = vadd.f32 %v1980, %v2005
    %v2042 = vxor.u32 %v2041, 2147483648
    %v2043 = vmul.f32 %v2042, 1.442695
    %v2044 = vpow.pop %v2043
    %v2045 = vadd.f32 %v2044, 1.0
    %v2046 = vrcp.pop %v2045
    %v2047 = vmul.f32 %v2045, %v2046
    %v2048 = vsub.f32 1.0, %v2047
    %v2049 = vmul.f32 %v2046, %v2048
    %v2050 = vadd.f32 %v2046, %v2049
    %vm2051 = vweird.f32 %v2045
    %vm2052 = vweird.f32 %v2046
    %vm2053 = vmor %vm2051, %vm2052
    %v2054 = vsel %vm2053, %v2046, %v2050
    %v2055 = vand.u32 2147483647, %v2045
    %vm2056 = vcmp.eq.f32.partialorder %v2055, 8.507059e+37
    %v2057 = vand.u32 %v2045, 2147483648
    %v2058 = vor.u32 1.1754944e-38, %v2057
    %v2059 = vsel %vm2056, %v2058, %v2054
    %v2060 = vmul.f32 1.0, %v2059
    %v2061 = vadd.f32 %v2018, %v107
    %v2062 = vmul.f32 %v2040, %v2061
    %v2063 = vadd.f32 %v1981, %v2062
    %v2064 = vtanh.pop %v2063
    %v2065 = vsub.f32 1.0, %v2060
    %v2066 = vmul.f32 %v2065, %v2064
    %v2067 = vmul.f32 %v2060, %v1803
    %v2068 = vadd.f32 %v2066, %v2067
    %v2069 = vmul.f32 %v2068, %v121
    %v2070 = vmul.f32 %v2068, %v122
    %v2071 = vmul.f32 %v2068, %v123
    %v2072 = vmul.f32 %v2068, %v124
    %v2073 = vmul.f32 %v2068, %v125
    %v2074 = vmul.f32 %v2068, %v126
    %v2075 = vmul.f32 %v2068, %v127
    %v2076 = vmul.f32 %v2068, %v128
    %2077 = vadd.xlane.f32.xlu0 %v2069
    %v2078 = vpop.xlane.xlu0 %2077
    %2079 = vadd.xlane.f32.xlu0 %v2070
    %v2080 = vpop.xlane.xlu0 %2079
    %2081 = vadd.xlane.f32.xlu0 %v2071
    %v2082 = vpop.xlane.xlu0 %2081
    %2083 = vadd.xlane.f32.xlu0 %v2072
    %v2084 = vpop.xlane.xlu0 %2083
    %2085 = vadd.xlane.f32.xlu0 %v2073
    %v2086 = vpop.xlane.xlu0 %2085
    %2087 = vadd.xlane.f32.xlu0 %v2074
    %v2088 = vpop.xlane.xlu0 %2087
    %2089 = vadd.xlane.f32.xlu0 %v2075
    %v2090 = vpop.xlane.xlu0 %2089
    %2091 = vadd.xlane.f32.xlu0 %v2076
    %v2092 = vpop.xlane.xlu0 %2091
    %v2101 = vperm.slane %v2078, %v672
    %v2102 = vperm.slane %v2080, %v672
    %v2103 = vperm.slane %v2082, %v672
    %v2104 = vperm.slane %v2084, %v672
    %v2105 = vperm.slane %v2086, %v672
    %v2106 = vperm.slane %v2088, %v672
    %v2107 = vperm.slane %v2090, %v672
    %v2108 = vperm.slane %v2092, %v672
    %v2109 = vsel %vm681, %v2102, %v2101
    %v2110 = vsel %vm683, %v2103, %v2109
    %v2111 = vsel %vm685, %v2104, %v2110
    %v2112 = vsel %vm687, %v2105, %v2111
    %v2113 = vsel %vm689, %v2106, %v2112
    %v2114 = vsel %vm691, %v2107, %v2113
    %v2115 = vsel %vm693, %v2108, %v2114
    %v2117 = vsel %vm133, %v2115, -1e+09
    %v2118 = vsel %vm697, %v2117, -inf
    %v2119 = vrot.slane %v2118, 4
    %v2120 = vmax.f32 %v2118, %v2119
    %v2121 = vrot.slane %v2120, 2
    %v2122 = vmax.f32 %v2120, %v2121
    %v2123 = vrot.slane %v2122, 1
    %v2124 = vmax.f32 %v2122, %v2123
    %v2125 = vsub.f32 %v2117, %v2124
    %v2126 = vmul.f32 %v2125, 1.442695
    %v2127 = vpow.pop %v2126
    %v2128 = vsel %vm697, %v2127, 0.0
    %v2129 = vrot.slane %v2128, 4
    %v2130 = vadd.f32 %v2128, %v2129
    %v2131 = vrot.slane %v2130, 2
    %v2132 = vadd.f32 %v2130, %v2131
    %v2133 = vrot.slane %v2132, 1
    %v2134 = vadd.f32 %v2132, %v2133
    %v2135 = vrcp.pop %v2134
    %v2136 = vmul.f32 %v2127, %v2135
    %v2137 = vperm.slane %v2136, 0
    %v2138 = vlaneseq
    %v2139 = vshrl.u32 %v2138, 7
    %2141 = vset.pattern.permute.xlu0 %v2139
    %2142 = vperm.xlu0 %2141, %v2137
    %v2143 = vpop.permute.xlu0 %2142
    %v2144 = vperm.slane %v2136, 1
    %v2145 = vlaneseq
    %v2146 = vshrl.u32 %v2145, 7
    %2148 = vset.pattern.permute.xlu0 %v2146
    %2149 = vperm.xlu0 %2148, %v2144
    %v2150 = vpop.permute.xlu0 %2149
    %v2151 = vperm.slane %v2136, 2
    %v2152 = vlaneseq
    %v2153 = vshrl.u32 %v2152, 7
    %2155 = vset.pattern.permute.xlu0 %v2153
    %2156 = vperm.xlu0 %2155, %v2151
    %v2157 = vpop.permute.xlu0 %2156
    %v2158 = vperm.slane %v2136, 3
    %v2159 = vlaneseq
    %v2160 = vshrl.u32 %v2159, 7
    %2162 = vset.pattern.permute.xlu0 %v2160
    %2163 = vperm.xlu0 %2162, %v2158
    %v2164 = vpop.permute.xlu0 %2163
    %v2165 = vperm.slane %v2136, 4
    %v2166 = vlaneseq
    %v2167 = vshrl.u32 %v2166, 7
    %2169 = vset.pattern.permute.xlu0 %v2167
    %2170 = vperm.xlu0 %2169, %v2165
    %v2171 = vpop.permute.xlu0 %2170
    %v2172 = vperm.slane %v2136, 5
    %v2173 = vlaneseq
    %v2174 = vshrl.u32 %v2173, 7
    %2176 = vset.pattern.permute.xlu0 %v2174
    %2177 = vperm.xlu0 %2176, %v2172
    %v2178 = vpop.permute.xlu0 %2177
    %v2179 = vperm.slane %v2136, 6
    %v2180 = vlaneseq
    %v2181 = vshrl.u32 %v2180, 7
    %2183 = vset.pattern.permute.xlu0 %v2181
    %2184 = vperm.xlu0 %2183, %v2179
    %v2185 = vpop.permute.xlu0 %2184
    %v2186 = vperm.slane %v2136, 7
    %v2187 = vlaneseq
    %v2188 = vshrl.u32 %v2187, 7
    %2190 = vset.pattern.permute.xlu0 %v2188
    %2191 = vperm.xlu0 %2190, %v2186
    %v2192 = vpop.permute.xlu0 %2191
    %v2193 = vmul.f32 %v2143, %v121
    %v2194 = vmul.f32 %v2150, %v122
    %v2195 = vmul.f32 %v2157, %v123
    %v2196 = vmul.f32 %v2164, %v124
    %v2197 = vmul.f32 %v2171, %v125
    %v2198 = vmul.f32 %v2178, %v126
    %v2199 = vmul.f32 %v2185, %v127
    %v2200 = vmul.f32 %v2192, %v128
    %v2201 = vadd.f32 %v2193, %v2194
    %v2202 = vadd.f32 %v2201, %v2195
    %v2203 = vadd.f32 %v2202, %v2196
    %v2204 = vadd.f32 %v2203, %v2197
    %v2205 = vadd.f32 %v2204, %v2198
    %v2206 = vadd.f32 %v2205, %v2199
    %v2207 = vadd.f32 %v2206, %v2200
    %v2208 = vpack.c.bf16 %v2068, %v2068
    %v2209 = vpack.c.bf16 %v2207, %v2207
    %2210 = vmatpush.bf16.msra.mxu0 %v829
    %2211 = vmatpush.bf16.msra.mxu0 %v828
    %2212 = vmatpush.bf16.msra.mxu0 %v827
    %2213 = vmatpush.bf16.msra.mxu0 %v826
    %2214 = vmatpush.bf16.msra.mxu0 %v825
    %2215 = vmatpush.bf16.msra.mxu0 %v824
    %2216 = vmatpush.bf16.msra.mxu0 %v823
    %2217 = vmatpush.bf16.msra.mxu0 %v822
    %2218 = vmatmul.bf16.gmra.mxu0 %v2208
    %v2219 = vpop.f32.mrf.mxu0
    %v2220 = vadd.f32 0.0, %v2219
    %v2221 = vpop.f32.mrf.mxu0
    %2222 = vdwg.mxu0
    %2223 = vmatpush.bf16.msra.mxu0 %v890
    %2224 = vmatpush.bf16.msra.mxu0 %v889
    %2225 = vmatpush.bf16.msra.mxu0 %v888
    %2226 = vmatpush.bf16.msra.mxu0 %v887
    %2227 = vmatpush.bf16.msra.mxu0 %v886
    %2228 = vmatpush.bf16.msra.mxu0 %v885
    %2229 = vmatpush.bf16.msra.mxu0 %v884
    %2230 = vmatpush.bf16.msra.mxu0 %v883
    %2231 = vmatmul.bf16.gmra.mxu0 %v2209
    %v2232 = vpop.f32.mrf.mxu0
    %v2233 = vadd.f32 %v2220, %v2232
    %v2234 = vpop.f32.mrf.mxu0
    %2235 = vdwg.mxu0
    %v2236 = vadd.f32 %v2233, %v111
    %v2237 = vtanh.pop %v2236
    %v2238 = vpack.c.bf16 %v2237, %v2237
    %s2239 = scalar_lea.vmem %s11, 20
    %2240 = vst [vmem:[%s2239] sm:$0xf] %v2238
    %2241 = vst [vmem:[#allocation3] sm:$0xff] %v2068
    // Predicated region
    $region46: #{seq2seq_forward.4} parent=1 // pred_check
      _
    $region47: #{seq2seq_forward.4} parent=1 // pred_check_branch
      %2243 = sbr.rel (0) target = $region49
    $region48: #{seq2seq_forward.4} parent=1 // pred_region
      _
    $region49: #{seq2seq_forward.4} parent=1 // pred_fallthru
      _
    // Predicated region
    $region50: #{seq2seq_forward.4} parent=1 // pred_check
      _
    $region51: #{seq2seq_forward.4} parent=1 // pred_check_branch
      %2245 = sbr.rel (0) target = $region53
    $region52: #{seq2seq_forward.4} parent=1 // pred_region
      %2247 = vsyncadd [#allocation4], 0
      %s2249 = sshll.u32 [#allocation3], 4
      %s2250 = int_to_ptr.vmem [resolvable:$true] %s2249
      %s2251 = sshll.u32 %s12, 4
      %s2252 = int_to_ptr.hbm [resolvable:$true] %s2251
      %2254 = dma.vmem_to_hbm [thread:$0]  %s2250, 128, %s2252, [#allocation4]
    $region53: #{seq2seq_forward.4} parent=1 // pred_fallthru
      _
    // Predicated region
    $region54: #{seq2seq_forward.4} parent=1 // pred_check
      _
    $region55: #{seq2seq_forward.4} parent=1 // pred_check_branch
      %2256 = sbr.rel (0) target = $region57
    $region56: #{seq2seq_forward.4} parent=1 // pred_region
      _
    $region57: #{seq2seq_forward.4} parent=1 // pred_fallthru
      _
    // Predicated region
    $region58: #{seq2seq_forward.4} parent=1 // pred_check
      _
    $region59: #{seq2seq_forward.4} parent=1 // pred_check_branch
      %2258 = sbr.rel (0) target = $region61
    $region60: #{seq2seq_forward.4} parent=1 // pred_region
      %2260 = dma.done [#allocation4], 128
    $region61: #{seq2seq_forward.4} parent=1 // pred_fallthru
      _
    %2261 = vsyncpa [#allocation4], 1

</llo_original>
